<compile_context>
chip_gen: v7x
topology: tpu7x:2x2x1
jax: 0.10.0
libtpu: 0.0.40
codegen_flags: <defaults>
</compile_context>

<pallas_src>
import jax
import jax.numpy as jnp
from jax.experimental import pallas as pl
from jax.experimental.pallas import tpu as pltpu


_N_LAYERS = 9  # 4 encoder + 1 fused (mu|log_var) head + 4 decoder


# ----------------------------------------------------------------------------
# Fused forward kernel (single grid step, weights streamed HBM -> VMEM)
# ----------------------------------------------------------------------------

def _vae_fused_kernel(*refs):
    n = _N_LAYERS
    x_ref = refs[0]
    w_hbm = refs[1:1 + n]                # raw HBM refs (memory_space=pl.ANY)
    b_refs = refs[1 + n:1 + 2 * n]       # f32 biases, VMEM-resident
    eps_ref = refs[1 + 2 * n]
    enc_ref, dec_ref, mu_ref, lv_ref = refs[2 + 2 * n:6 + 2 * n]
    w_vmem = refs[6 + 2 * n:6 + 3 * n]   # per-layer VMEM weight buffers
    sems = refs[6 + 3 * n]               # one DMA semaphore per layer

    # Issue every weight DMA up front, in usage order.  The DMA queue drains
    # them while the MXU works on earlier layers, so per-layer weight traffic
    # is hidden behind compute (only layer 0's copy sits on the critical path).
    copies = [pltpu.make_async_copy(w_hbm[i], w_vmem[i], sems.at[i])
              for i in range(n)]
    for c in copies:
        c.start()

    layer = [0]  # trace-time layer counter

    def linear(h, relu):
        i = layer[0]
        layer[0] += 1
        copies[i].wait()  # only blocks on this layer's weight
        # bf16 x bf16 -> f32 accumulation on the MXU; bias / ReLU on the VPU.
        y = jnp.dot(h.astype(w_vmem[i].dtype), w_vmem[i][...],
                    preferred_element_type=jnp.float32) + b_refs[i][...]
        return jnp.maximum(y, 0.0) if relu else y

    # Encoder: 4 x (Linear -> ReLU)
    h = x_ref[...]
    h = linear(h, True)
    h = linear(h, True)
    h = linear(h, True)
    h = linear(h, True)
    enc_ref[...] = h.astype(enc_ref.dtype)

    # Fused mu|log_var head: one MXU tile, then lane-aligned slices.
    head = linear(h, False)
    latent = mu_ref.shape[1]
    mu = head[:, :latent]
    lv = head[:, latent:]
    mu_ref[...] = mu.astype(mu_ref.dtype)
    lv_ref[...] = lv.astype(lv_ref.dtype)

    # Reparameterize: z = mu + eps * exp(0.5*log_var)  (EUP exp, VPU mul/add).
    z = mu + eps_ref[...] * jnp.exp(0.5 * lv)

    # Decoder: 3 x (Linear -> ReLU) + final Linear (no ReLU)
    h = linear(z, True)
    h = linear(h, True)
    h = linear(h, True)
    dec_ref[...] = linear(h, False).astype(dec_ref.dtype)


# ----------------------------------------------------------------------------
# Wrapper
# ----------------------------------------------------------------------------

def _vmem_full_spec(shape):
    """Full-extent VMEM block (single grid step -> block index always zero)."""
    nd = len(shape)
    return pl.BlockSpec(shape, lambda i, _nd=nd: (0,) * _nd)


def vae_forward(params, x, eps):
    """Fused VAE forward.  Returns (encoded, decoded, mu, log_var)."""
    # Fuse the mu / log_var heads into one weight/bias (concat on out-features).
    w_mu, b_mu = params["mu"]
    w_lv, b_lv = params["log_var"]
    w_head = jnp.concatenate([w_mu, w_lv], axis=1)
    b_head = jnp.concatenate([b_mu, b_lv], axis=1)

    layers = list(params["encoder"]) + [(w_head, b_head)] + list(params["decoder"])
    assert len(layers) == _N_LAYERS
    weights = [w for (w, _) in layers]
    biases = [b for (_, b) in layers]

    inputs = [x] + weights + biases + [eps]

    batch, input_size = x.shape
    latent = w_mu.shape[1]
    out_shape = (
        jax.ShapeDtypeStruct((batch, latent), jnp.float32),      # encoded
        jax.ShapeDtypeStruct((batch, input_size), jnp.float32),  # decoded
        jax.ShapeDtypeStruct((batch, latent), jnp.float32),      # mu
        jax.ShapeDtypeStruct((batch, latent), jnp.float32),      # log_var
    )

    in_specs = ([_vmem_full_spec(x.shape)]
                + [pl.BlockSpec(memory_space=pl.ANY) for _ in weights]
                + [_vmem_full_spec(b.shape) for b in biases]
                + [_vmem_full_spec(eps.shape)])

    scratch_shapes = ([pltpu.VMEM(w.shape, w.dtype) for w in weights]
                      + [pltpu.SemaphoreType.DMA((_N_LAYERS,))])

    return pl.pallas_call(
        _vae_fused_kernel,
        out_shape=out_shape,
        grid_spec=pltpu.PrefetchScalarGridSpec(
            num_scalar_prefetch=0,
            grid=(1,),
            in_specs=in_specs,
            out_specs=tuple(_vmem_full_spec(s.shape) for s in out_shape),
            scratch_shapes=scratch_shapes,
        ),
    )(*inputs)


# ----------------------------------------------------------------------------
# Parameter construction (deterministic, synthetic)
# ----------------------------------------------------------------------------

def _init_linear(key, in_f, out_f):
    """PyTorch-style uniform(-1/sqrt(in), 1/sqrt(in)).

    Weight pre-transposed [in, out] in bf16 (halves HBM traffic); bias kept
    f32 with shape (1, out) for row-broadcast.
    """
    kw, kb = jax.random.split(key)
    bound = 1.0 / jnp.sqrt(jnp.float32(in_f))
    w_t = jax.random.uniform(kw, (in_f, out_f), jnp.float32, -bound, bound)
    b = jax.random.uniform(kb, (1, out_f), jnp.float32, -bound, bound)
    return w_t.astype(jnp.bfloat16), b


def init_vae_params(key, input_size, h1, h2, h3, latent_dim):
    dims_enc = [(input_size, h1), (h1, h2), (h2, h3), (h3, latent_dim)]
    dims_dec = [(latent_dim, h3), (h3, h2), (h2, h1), (h1, input_size)]
    params = {"encoder": [], "decoder": []}
    keys = jax.random.split(key, len(dims_enc) + len(dims_dec) + 2)
    ki = 0
    for (i, o) in dims_enc:
        params["encoder"].append(_init_linear(keys[ki], i, o)); ki += 1
    for (i, o) in dims_dec:
        params["decoder"].append(_init_linear(keys[ki], i, o)); ki += 1
    params["mu"] = _init_linear(keys[ki], latent_dim, latent_dim); ki += 1
    params["log_var"] = _init_linear(keys[ki], latent_dim, latent_dim)
    return params


# ----------------------------------------------------------------------------
# Main
# ----------------------------------------------------------------------------

if __name__ == "__main__":
    # Small, structure-preserving sizes (original: 21600/10800/4096/256).
    BATCH = 8
    INPUT_SIZE = 512
    H1, H2, H3 = 1024, 512, 256
    LATENT = 128

    key = jax.random.PRNGKey(0)
    k_params, k_x, k_eps = jax.random.split(key, 3)

    params = init_vae_params(k_params, INPUT_SIZE, H1, H2, H3, LATENT)
    x = jax.random.normal(k_x, (BATCH, INPUT_SIZE), jnp.float32)
    # eps must be freshly sampled by the caller per forward (randn_like(std)).
    eps = jax.random.normal(k_eps, (BATCH, LATENT), jnp.float32)

    encoded, decoded, mu, log_var = vae_forward(params, x, eps)
    jax.block_until_ready((encoded, decoded, mu, log_var))

    # Pure-JAX reference with identical bf16-weight / f32-accumulation math.
    def ref_linear(h, wb, relu):
        w_t, b = wb
        y = jnp.dot(h.astype(jnp.bfloat16), w_t,
                    preferred_element_type=jnp.float32) + b
        return jnp.maximum(y, 0.0) if relu else y

    h = x
    for wb in params["encoder"]:
        h = ref_linear(h, wb, True)
    enc_ref = h
    mu_ref = ref_linear(enc_ref, params["mu"], False)
    lv_ref = ref_linear(enc_ref, params["log_var"], False)
    z_ref = mu_ref + eps * jnp.exp(0.5 * lv_ref)
    h = z_ref
    for wb in params["decoder"][:-1]:
        h = ref_linear(h, wb, True)
    dec_ref = ref_linear(h, params["decoder"][-1], False)

    assert jnp.allclose(encoded, enc_ref, atol=2e-3, rtol=2e-3)
    assert jnp.allclose(mu, mu_ref, atol=2e-3, rtol=2e-3)
    assert jnp.allclose(log_var, lv_ref, atol=2e-3, rtol=2e-3)
    assert jnp.allclose(decoded, dec_ref, atol=5e-3, rtol=5e-3)

    print("KERNEL_OK")
</pallas_src>

<mosaic_0001>
module attributes {stable_mosaic.version = 11 : i64} {
  func.func @_vae_fused_kernel(%arg0: i32, %arg1: memref<8x512xf32, #tpu.memory_space<vmem>>, %arg2: memref<512x1024xbf16, #tpu.memory_space<any>>, %arg3: memref<1024x512xbf16, #tpu.memory_space<any>>, %arg4: memref<512x256xbf16, #tpu.memory_space<any>>, %arg5: memref<256x128xbf16, #tpu.memory_space<any>>, %arg6: memref<128x256xbf16, #tpu.memory_space<any>>, %arg7: memref<128x256xbf16, #tpu.memory_space<any>>, %arg8: memref<256x512xbf16, #tpu.memory_space<any>>, %arg9: memref<512x1024xbf16, #tpu.memory_space<any>>, %arg10: memref<1024x512xbf16, #tpu.memory_space<any>>, %arg11: memref<1x1024xf32, #tpu.memory_space<vmem>>, %arg12: memref<1x512xf32, #tpu.memory_space<vmem>>, %arg13: memref<1x256xf32, #tpu.memory_space<vmem>>, %arg14: memref<1x128xf32, #tpu.memory_space<vmem>>, %arg15: memref<1x256xf32, #tpu.memory_space<vmem>>, %arg16: memref<1x256xf32, #tpu.memory_space<vmem>>, %arg17: memref<1x512xf32, #tpu.memory_space<vmem>>, %arg18: memref<1x1024xf32, #tpu.memory_space<vmem>>, %arg19: memref<1x512xf32, #tpu.memory_space<vmem>>, %arg20: memref<8x128xf32, #tpu.memory_space<vmem>>, %arg21: memref<8x128xf32, #tpu.memory_space<vmem>>, %arg22: memref<8x512xf32, #tpu.memory_space<vmem>>, %arg23: memref<8x128xf32, #tpu.memory_space<vmem>>, %arg24: memref<8x128xf32, #tpu.memory_space<vmem>>, %arg25: memref<512x1024xbf16, #tpu.memory_space<vmem>>, %arg26: memref<1024x512xbf16, #tpu.memory_space<vmem>>, %arg27: memref<512x256xbf16, #tpu.memory_space<vmem>>, %arg28: memref<256x128xbf16, #tpu.memory_space<vmem>>, %arg29: memref<128x256xbf16, #tpu.memory_space<vmem>>, %arg30: memref<128x256xbf16, #tpu.memory_space<vmem>>, %arg31: memref<256x512xbf16, #tpu.memory_space<vmem>>, %arg32: memref<512x1024xbf16, #tpu.memory_space<vmem>>, %arg33: memref<1024x512xbf16, #tpu.memory_space<vmem>>, %arg34: memref<9x!tpu.dma_semaphore, #tpu.memory_space<semaphore_mem>>) attributes {dimension_semantics = [#tpu.dimension_semantics<arbitrary>], iteration_bounds = array<i64: 1>, scalar_prefetch = 0 : i64, scratch_operands = 10 : i64, tpu.core_type = #tpu.core_type<tc>, window_params = [{pipeline_mode = #tpu.pipeline_mode<synchronous>, transform_indices = @transform_0, window_bounds = array<i64: 8, 512>}, {}, {}, {}, {}, {}, {}, {}, {}, {}, {pipeline_mode = #tpu.pipeline_mode<synchronous>, transform_indices = @transform_10, window_bounds = array<i64: 1, 1024>}, {pipeline_mode = #tpu.pipeline_mode<synchronous>, transform_indices = @transform_11, window_bounds = array<i64: 1, 512>}, {pipeline_mode = #tpu.pipeline_mode<synchronous>, transform_indices = @transform_12, window_bounds = array<i64: 1, 256>}, {pipeline_mode = #tpu.pipeline_mode<synchronous>, transform_indices = @transform_13, window_bounds = array<i64: 1, 128>}, {pipeline_mode = #tpu.pipeline_mode<synchronous>, transform_indices = @transform_14, window_bounds = array<i64: 1, 256>}, {pipeline_mode = #tpu.pipeline_mode<synchronous>, transform_indices = @transform_15, window_bounds = array<i64: 1, 256>}, {pipeline_mode = #tpu.pipeline_mode<synchronous>, transform_indices = @transform_16, window_bounds = array<i64: 1, 512>}, {pipeline_mode = #tpu.pipeline_mode<synchronous>, transform_indices = @transform_17, window_bounds = array<i64: 1, 1024>}, {pipeline_mode = #tpu.pipeline_mode<synchronous>, transform_indices = @transform_18, window_bounds = array<i64: 1, 512>}, {pipeline_mode = #tpu.pipeline_mode<synchronous>, transform_indices = @transform_19, window_bounds = array<i64: 8, 128>}, {pipeline_mode = #tpu.pipeline_mode<synchronous>, transform_indices = @transform_20, window_bounds = array<i64: 8, 128>}, {pipeline_mode = #tpu.pipeline_mode<synchronous>, transform_indices = @transform_21, window_bounds = array<i64: 8, 512>}, {pipeline_mode = #tpu.pipeline_mode<synchronous>, transform_indices = @transform_22, window_bounds = array<i64: 8, 128>}, {pipeline_mode = #tpu.pipeline_mode<synchronous>, transform_indices = @transform_23, window_bounds = array<i64: 8, 128>}]} {
    %c0_i32 = arith.constant 0 : i32
    %0 = tpu.memref_slice %arg34[%c0_i32] : memref<9x!tpu.dma_semaphore, #tpu.memory_space<semaphore_mem>> -> memref<1x!tpu.dma_semaphore, #tpu.memory_space<semaphore_mem>>
    %1 = tpu.memref_squeeze %0 : memref<1x!tpu.dma_semaphore, #tpu.memory_space<semaphore_mem>> -> memref<!tpu.dma_semaphore, #tpu.memory_space<semaphore_mem>>
    tpu.enqueue_dma source(%arg2 : memref<512x1024xbf16, #tpu.memory_space<any>>) target(%arg25 : memref<512x1024xbf16, #tpu.memory_space<vmem>>) target_semaphore(%1 : memref<!tpu.dma_semaphore, #tpu.memory_space<semaphore_mem>>)
    %c1_i32 = arith.constant 1 : i32
    %2 = tpu.memref_slice %arg34[%c1_i32] : memref<9x!tpu.dma_semaphore, #tpu.memory_space<semaphore_mem>> -> memref<1x!tpu.dma_semaphore, #tpu.memory_space<semaphore_mem>>
    %3 = tpu.memref_squeeze %2 : memref<1x!tpu.dma_semaphore, #tpu.memory_space<semaphore_mem>> -> memref<!tpu.dma_semaphore, #tpu.memory_space<semaphore_mem>>
    tpu.enqueue_dma source(%arg3 : memref<1024x512xbf16, #tpu.memory_space<any>>) target(%arg26 : memref<1024x512xbf16, #tpu.memory_space<vmem>>) target_semaphore(%3 : memref<!tpu.dma_semaphore, #tpu.memory_space<semaphore_mem>>)
    %c2_i32 = arith.constant 2 : i32
    %4 = tpu.memref_slice %arg34[%c2_i32] : memref<9x!tpu.dma_semaphore, #tpu.memory_space<semaphore_mem>> -> memref<1x!tpu.dma_semaphore, #tpu.memory_space<semaphore_mem>>
    %5 = tpu.memref_squeeze %4 : memref<1x!tpu.dma_semaphore, #tpu.memory_space<semaphore_mem>> -> memref<!tpu.dma_semaphore, #tpu.memory_space<semaphore_mem>>
    tpu.enqueue_dma source(%arg4 : memref<512x256xbf16, #tpu.memory_space<any>>) target(%arg27 : memref<512x256xbf16, #tpu.memory_space<vmem>>) target_semaphore(%5 : memref<!tpu.dma_semaphore, #tpu.memory_space<semaphore_mem>>)
    %c3_i32 = arith.constant 3 : i32
    %6 = tpu.memref_slice %arg34[%c3_i32] : memref<9x!tpu.dma_semaphore, #tpu.memory_space<semaphore_mem>> -> memref<1x!tpu.dma_semaphore, #tpu.memory_space<semaphore_mem>>
    %7 = tpu.memref_squeeze %6 : memref<1x!tpu.dma_semaphore, #tpu.memory_space<semaphore_mem>> -> memref<!tpu.dma_semaphore, #tpu.memory_space<semaphore_mem>>
    tpu.enqueue_dma source(%arg5 : memref<256x128xbf16, #tpu.memory_space<any>>) target(%arg28 : memref<256x128xbf16, #tpu.memory_space<vmem>>) target_semaphore(%7 : memref<!tpu.dma_semaphore, #tpu.memory_space<semaphore_mem>>)
    %c4_i32 = arith.constant 4 : i32
    %8 = tpu.memref_slice %arg34[%c4_i32] : memref<9x!tpu.dma_semaphore, #tpu.memory_space<semaphore_mem>> -> memref<1x!tpu.dma_semaphore, #tpu.memory_space<semaphore_mem>>
    %9 = tpu.memref_squeeze %8 : memref<1x!tpu.dma_semaphore, #tpu.memory_space<semaphore_mem>> -> memref<!tpu.dma_semaphore, #tpu.memory_space<semaphore_mem>>
    tpu.enqueue_dma source(%arg6 : memref<128x256xbf16, #tpu.memory_space<any>>) target(%arg29 : memref<128x256xbf16, #tpu.memory_space<vmem>>) target_semaphore(%9 : memref<!tpu.dma_semaphore, #tpu.memory_space<semaphore_mem>>)
    %c5_i32 = arith.constant 5 : i32
    %10 = tpu.memref_slice %arg34[%c5_i32] : memref<9x!tpu.dma_semaphore, #tpu.memory_space<semaphore_mem>> -> memref<1x!tpu.dma_semaphore, #tpu.memory_space<semaphore_mem>>
    %11 = tpu.memref_squeeze %10 : memref<1x!tpu.dma_semaphore, #tpu.memory_space<semaphore_mem>> -> memref<!tpu.dma_semaphore, #tpu.memory_space<semaphore_mem>>
    tpu.enqueue_dma source(%arg7 : memref<128x256xbf16, #tpu.memory_space<any>>) target(%arg30 : memref<128x256xbf16, #tpu.memory_space<vmem>>) target_semaphore(%11 : memref<!tpu.dma_semaphore, #tpu.memory_space<semaphore_mem>>)
    %c6_i32 = arith.constant 6 : i32
    %12 = tpu.memref_slice %arg34[%c6_i32] : memref<9x!tpu.dma_semaphore, #tpu.memory_space<semaphore_mem>> -> memref<1x!tpu.dma_semaphore, #tpu.memory_space<semaphore_mem>>
    %13 = tpu.memref_squeeze %12 : memref<1x!tpu.dma_semaphore, #tpu.memory_space<semaphore_mem>> -> memref<!tpu.dma_semaphore, #tpu.memory_space<semaphore_mem>>
    tpu.enqueue_dma source(%arg8 : memref<256x512xbf16, #tpu.memory_space<any>>) target(%arg31 : memref<256x512xbf16, #tpu.memory_space<vmem>>) target_semaphore(%13 : memref<!tpu.dma_semaphore, #tpu.memory_space<semaphore_mem>>)
    %c7_i32 = arith.constant 7 : i32
    %14 = tpu.memref_slice %arg34[%c7_i32] : memref<9x!tpu.dma_semaphore, #tpu.memory_space<semaphore_mem>> -> memref<1x!tpu.dma_semaphore, #tpu.memory_space<semaphore_mem>>
    %15 = tpu.memref_squeeze %14 : memref<1x!tpu.dma_semaphore, #tpu.memory_space<semaphore_mem>> -> memref<!tpu.dma_semaphore, #tpu.memory_space<semaphore_mem>>
    tpu.enqueue_dma source(%arg9 : memref<512x1024xbf16, #tpu.memory_space<any>>) target(%arg32 : memref<512x1024xbf16, #tpu.memory_space<vmem>>) target_semaphore(%15 : memref<!tpu.dma_semaphore, #tpu.memory_space<semaphore_mem>>)
    %c8_i32 = arith.constant 8 : i32
    %16 = tpu.memref_slice %arg34[%c8_i32] : memref<9x!tpu.dma_semaphore, #tpu.memory_space<semaphore_mem>> -> memref<1x!tpu.dma_semaphore, #tpu.memory_space<semaphore_mem>>
    %17 = tpu.memref_squeeze %16 : memref<1x!tpu.dma_semaphore, #tpu.memory_space<semaphore_mem>> -> memref<!tpu.dma_semaphore, #tpu.memory_space<semaphore_mem>>
    tpu.enqueue_dma source(%arg10 : memref<1024x512xbf16, #tpu.memory_space<any>>) target(%arg33 : memref<1024x512xbf16, #tpu.memory_space<vmem>>) target_semaphore(%17 : memref<!tpu.dma_semaphore, #tpu.memory_space<semaphore_mem>>)
    %c0 = arith.constant 0 : index
    %c0_0 = arith.constant 0 : index
    %18 = vector.load %arg1[%c0, %c0_0] : memref<8x512xf32, #tpu.memory_space<vmem>>, vector<8x512xf32>
    %c0_i32_1 = arith.constant 0 : i32
    %19 = tpu.memref_slice %arg34[%c0_i32_1] : memref<9x!tpu.dma_semaphore, #tpu.memory_space<semaphore_mem>> -> memref<1x!tpu.dma_semaphore, #tpu.memory_space<semaphore_mem>>
    %20 = tpu.memref_squeeze %19 : memref<1x!tpu.dma_semaphore, #tpu.memory_space<semaphore_mem>> -> memref<!tpu.dma_semaphore, #tpu.memory_space<semaphore_mem>>
    tpu.wait_dma2 semaphore(%20 : memref<!tpu.dma_semaphore, #tpu.memory_space<semaphore_mem>>) src(%arg2 : memref<512x1024xbf16, #tpu.memory_space<any>>) dst(%arg25 : memref<512x1024xbf16, #tpu.memory_space<vmem>>)
    %21 = arith.truncf %18 : vector<8x512xf32> to vector<8x512xbf16>
    %c0_2 = arith.constant 0 : index
    %c0_3 = arith.constant 0 : index
    %22 = vector.load %arg25[%c0_2, %c0_3] : memref<512x1024xbf16, #tpu.memory_space<vmem>>, vector<512x1024xbf16>
    %cst = arith.constant dense<0.000000e+00> : vector<8x1024xf32>
    %23 = tpu.matmul %21, %22, %cst {dimension_numbers = #tpu.dot_dimension_numbers<[1], [0], [0], [1], [0, 0, 1, 1], [], []>} : vector<8x512xbf16>, vector<512x1024xbf16>, vector<8x1024xf32> -> vector<8x1024xf32>
    %c0_4 = arith.constant 0 : index
    %c0_5 = arith.constant 0 : index
    %24 = vector.load %arg11[%c0_4, %c0_5] : memref<1x1024xf32, #tpu.memory_space<vmem>>, vector<1x1024xf32>
    %25 = vector.broadcast %24 : vector<1x1024xf32> to vector<8x1024xf32>
    %26 = arith.addf %23, %25 : vector<8x1024xf32>
    %cst_6 = arith.constant 0.000000e+00 : f32
    %27 = vector.broadcast %cst_6 : f32 to vector<8x1024xf32>
    %28 = arith.maximumf %26, %27 : vector<8x1024xf32>
    %c1_i32_7 = arith.constant 1 : i32
    %29 = tpu.memref_slice %arg34[%c1_i32_7] : memref<9x!tpu.dma_semaphore, #tpu.memory_space<semaphore_mem>> -> memref<1x!tpu.dma_semaphore, #tpu.memory_space<semaphore_mem>>
    %30 = tpu.memref_squeeze %29 : memref<1x!tpu.dma_semaphore, #tpu.memory_space<semaphore_mem>> -> memref<!tpu.dma_semaphore, #tpu.memory_space<semaphore_mem>>
    tpu.wait_dma2 semaphore(%30 : memref<!tpu.dma_semaphore, #tpu.memory_space<semaphore_mem>>) src(%arg3 : memref<1024x512xbf16, #tpu.memory_space<any>>) dst(%arg26 : memref<1024x512xbf16, #tpu.memory_space<vmem>>)
    %31 = arith.truncf %28 : vector<8x1024xf32> to vector<8x1024xbf16>
    %c0_8 = arith.constant 0 : index
    %c0_9 = arith.constant 0 : index
    %32 = vector.load %arg26[%c0_8, %c0_9] : memref<1024x512xbf16, #tpu.memory_space<vmem>>, vector<1024x512xbf16>
    %cst_10 = arith.constant dense<0.000000e+00> : vector<8x512xf32>
    %33 = tpu.matmul %31, %32, %cst_10 {dimension_numbers = #tpu.dot_dimension_numbers<[1], [0], [0], [1], [0, 0, 1, 1], [], []>} : vector<8x1024xbf16>, vector<1024x512xbf16>, vector<8x512xf32> -> vector<8x512xf32>
    %c0_11 = arith.constant 0 : index
    %c0_12 = arith.constant 0 : index
    %34 = vector.load %arg12[%c0_11, %c0_12] : memref<1x512xf32, #tpu.memory_space<vmem>>, vector<1x512xf32>
    %35 = vector.broadcast %34 : vector<1x512xf32> to vector<8x512xf32>
    %36 = arith.addf %33, %35 : vector<8x512xf32>
    %cst_13 = arith.constant 0.000000e+00 : f32
    %37 = vector.broadcast %cst_13 : f32 to vector<8x512xf32>
    %38 = arith.maximumf %36, %37 : vector<8x512xf32>
    %c2_i32_14 = arith.constant 2 : i32
    %39 = tpu.memref_slice %arg34[%c2_i32_14] : memref<9x!tpu.dma_semaphore, #tpu.memory_space<semaphore_mem>> -> memref<1x!tpu.dma_semaphore, #tpu.memory_space<semaphore_mem>>
    %40 = tpu.memref_squeeze %39 : memref<1x!tpu.dma_semaphore, #tpu.memory_space<semaphore_mem>> -> memref<!tpu.dma_semaphore, #tpu.memory_space<semaphore_mem>>
    tpu.wait_dma2 semaphore(%40 : memref<!tpu.dma_semaphore, #tpu.memory_space<semaphore_mem>>) src(%arg4 : memref<512x256xbf16, #tpu.memory_space<any>>) dst(%arg27 : memref<512x256xbf16, #tpu.memory_space<vmem>>)
    %41 = arith.truncf %38 : vector<8x512xf32> to vector<8x512xbf16>
    %c0_15 = arith.constant 0 : index
    %c0_16 = arith.constant 0 : index
    %42 = vector.load %arg27[%c0_15, %c0_16] : memref<512x256xbf16, #tpu.memory_space<vmem>>, vector<512x256xbf16>
    %cst_17 = arith.constant dense<0.000000e+00> : vector<8x256xf32>
    %43 = tpu.matmul %41, %42, %cst_17 {dimension_numbers = #tpu.dot_dimension_numbers<[1], [0], [0], [1], [0, 0, 1, 1], [], []>} : vector<8x512xbf16>, vector<512x256xbf16>, vector<8x256xf32> -> vector<8x256xf32>
    %c0_18 = arith.constant 0 : index
    %c0_19 = arith.constant 0 : index
    %44 = vector.load %arg13[%c0_18, %c0_19] : memref<1x256xf32, #tpu.memory_space<vmem>>, vector<1x256xf32>
    %45 = vector.broadcast %44 : vector<1x256xf32> to vector<8x256xf32>
    %46 = arith.addf %43, %45 : vector<8x256xf32>
    %cst_20 = arith.constant 0.000000e+00 : f32
    %47 = vector.broadcast %cst_20 : f32 to vector<8x256xf32>
    %48 = arith.maximumf %46, %47 : vector<8x256xf32>
    %c3_i32_21 = arith.constant 3 : i32
    %49 = tpu.memref_slice %arg34[%c3_i32_21] : memref<9x!tpu.dma_semaphore, #tpu.memory_space<semaphore_mem>> -> memref<1x!tpu.dma_semaphore, #tpu.memory_space<semaphore_mem>>
    %50 = tpu.memref_squeeze %49 : memref<1x!tpu.dma_semaphore, #tpu.memory_space<semaphore_mem>> -> memref<!tpu.dma_semaphore, #tpu.memory_space<semaphore_mem>>
    tpu.wait_dma2 semaphore(%50 : memref<!tpu.dma_semaphore, #tpu.memory_space<semaphore_mem>>) src(%arg5 : memref<256x128xbf16, #tpu.memory_space<any>>) dst(%arg28 : memref<256x128xbf16, #tpu.memory_space<vmem>>)
    %51 = arith.truncf %48 : vector<8x256xf32> to vector<8x256xbf16>
    %c0_22 = arith.constant 0 : index
    %c0_23 = arith.constant 0 : index
    %52 = vector.load %arg28[%c0_22, %c0_23] : memref<256x128xbf16, #tpu.memory_space<vmem>>, vector<256x128xbf16>
    %cst_24 = arith.constant dense<0.000000e+00> : vector<8x128xf32>
    %53 = tpu.matmul %51, %52, %cst_24 {dimension_numbers = #tpu.dot_dimension_numbers<[1], [0], [0], [1], [0, 0, 1, 1], [], []>} : vector<8x256xbf16>, vector<256x128xbf16>, vector<8x128xf32> -> vector<8x128xf32>
    %c0_25 = arith.constant 0 : index
    %c0_26 = arith.constant 0 : index
    %54 = vector.load %arg14[%c0_25, %c0_26] : memref<1x128xf32, #tpu.memory_space<vmem>>, vector<1x128xf32>
    %55 = vector.broadcast %54 : vector<1x128xf32> to vector<8x128xf32>
    %56 = arith.addf %53, %55 : vector<8x128xf32>
    %cst_27 = arith.constant 0.000000e+00 : f32
    %57 = vector.broadcast %cst_27 : f32 to vector<8x128xf32>
    %58 = arith.maximumf %56, %57 : vector<8x128xf32>
    %c0_28 = arith.constant 0 : index
    %c0_29 = arith.constant 0 : index
    %59 = vector.load %arg21[%c0_28, %c0_29] : memref<8x128xf32, #tpu.memory_space<vmem>>, vector<8x128xf32>
    tpu.vector_store %arg21[%c0_28, %c0_29], %58 {strides = array<i32>} : memref<8x128xf32, #tpu.memory_space<vmem>>, vector<8x128xf32>,
    %c4_i32_30 = arith.constant 4 : i32
    %60 = tpu.memref_slice %arg34[%c4_i32_30] : memref<9x!tpu.dma_semaphore, #tpu.memory_space<semaphore_mem>> -> memref<1x!tpu.dma_semaphore, #tpu.memory_space<semaphore_mem>>
    %61 = tpu.memref_squeeze %60 : memref<1x!tpu.dma_semaphore, #tpu.memory_space<semaphore_mem>> -> memref<!tpu.dma_semaphore, #tpu.memory_space<semaphore_mem>>
    tpu.wait_dma2 semaphore(%61 : memref<!tpu.dma_semaphore, #tpu.memory_space<semaphore_mem>>) src(%arg6 : memref<128x256xbf16, #tpu.memory_space<any>>) dst(%arg29 : memref<128x256xbf16, #tpu.memory_space<vmem>>)
    %62 = arith.truncf %58 : vector<8x128xf32> to vector<8x128xbf16>
    %c0_31 = arith.constant 0 : index
    %c0_32 = arith.constant 0 : index
    %63 = vector.load %arg29[%c0_31, %c0_32] : memref<128x256xbf16, #tpu.memory_space<vmem>>, vector<128x256xbf16>
    %cst_33 = arith.constant dense<0.000000e+00> : vector<8x256xf32>
    %64 = tpu.matmul %62, %63, %cst_33 {dimension_numbers = #tpu.dot_dimension_numbers<[1], [0], [0], [1], [0, 0, 1, 1], [], []>} : vector<8x128xbf16>, vector<128x256xbf16>, vector<8x256xf32> -> vector<8x256xf32>
    %c0_34 = arith.constant 0 : index
    %c0_35 = arith.constant 0 : index
    %65 = vector.load %arg15[%c0_34, %c0_35] : memref<1x256xf32, #tpu.memory_space<vmem>>, vector<1x256xf32>
    %66 = vector.broadcast %65 : vector<1x256xf32> to vector<8x256xf32>
    %67 = arith.addf %64, %66 : vector<8x256xf32>
    %68 = vector.extract_strided_slice %67 {offsets = [0, 0], sizes = [8, 128], strides = [1, 1]} : vector<8x256xf32> to vector<8x128xf32>
    %69 = vector.extract_strided_slice %67 {offsets = [0, 128], sizes = [8, 128], strides = [1, 1]} : vector<8x256xf32> to vector<8x128xf32>
    %c0_36 = arith.constant 0 : index
    %c0_37 = arith.constant 0 : index
    %70 = vector.load %arg23[%c0_36, %c0_37] : memref<8x128xf32, #tpu.memory_space<vmem>>, vector<8x128xf32>
    tpu.vector_store %arg23[%c0_36, %c0_37], %68 {strides = array<i32>} : memref<8x128xf32, #tpu.memory_space<vmem>>, vector<8x128xf32>,
    %c0_38 = arith.constant 0 : index
    %c0_39 = arith.constant 0 : index
    %71 = vector.load %arg24[%c0_38, %c0_39] : memref<8x128xf32, #tpu.memory_space<vmem>>, vector<8x128xf32>
    tpu.vector_store %arg24[%c0_38, %c0_39], %69 {strides = array<i32>} : memref<8x128xf32, #tpu.memory_space<vmem>>, vector<8x128xf32>,
    %c0_40 = arith.constant 0 : index
    %c0_41 = arith.constant 0 : index
    %72 = vector.load %arg20[%c0_40, %c0_41] : memref<8x128xf32, #tpu.memory_space<vmem>>, vector<8x128xf32>
    %cst_42 = arith.constant 5.000000e-01 : f32
    %73 = vector.broadcast %cst_42 : f32 to vector<8x128xf32>
    %74 = arith.mulf %73, %69 : vector<8x128xf32>
    %75 = math.exp %74 : vector<8x128xf32>
    %76 = arith.mulf %72, %75 : vector<8x128xf32>
    %77 = arith.addf %68, %76 : vector<8x128xf32>
    %c5_i32_43 = arith.constant 5 : i32
    %78 = tpu.memref_slice %arg34[%c5_i32_43] : memref<9x!tpu.dma_semaphore, #tpu.memory_space<semaphore_mem>> -> memref<1x!tpu.dma_semaphore, #tpu.memory_space<semaphore_mem>>
    %79 = tpu.memref_squeeze %78 : memref<1x!tpu.dma_semaphore, #tpu.memory_space<semaphore_mem>> -> memref<!tpu.dma_semaphore, #tpu.memory_space<semaphore_mem>>
    tpu.wait_dma2 semaphore(%79 : memref<!tpu.dma_semaphore, #tpu.memory_space<semaphore_mem>>) src(%arg7 : memref<128x256xbf16, #tpu.memory_space<any>>) dst(%arg30 : memref<128x256xbf16, #tpu.memory_space<vmem>>)
    %80 = arith.truncf %77 : vector<8x128xf32> to vector<8x128xbf16>
    %c0_44 = arith.constant 0 : index
    %c0_45 = arith.constant 0 : index
    %81 = vector.load %arg30[%c0_44, %c0_45] : memref<128x256xbf16, #tpu.memory_space<vmem>>, vector<128x256xbf16>
    %cst_46 = arith.constant dense<0.000000e+00> : vector<8x256xf32>
    %82 = tpu.matmul %80, %81, %cst_46 {dimension_numbers = #tpu.dot_dimension_numbers<[1], [0], [0], [1], [0, 0, 1, 1], [], []>} : vector<8x128xbf16>, vector<128x256xbf16>, vector<8x256xf32> -> vector<8x256xf32>
    %c0_47 = arith.constant 0 : index
    %c0_48 = arith.constant 0 : index
    %83 = vector.load %arg16[%c0_47, %c0_48] : memref<1x256xf32, #tpu.memory_space<vmem>>, vector<1x256xf32>
    %84 = vector.broadcast %83 : vector<1x256xf32> to vector<8x256xf32>
    %85 = arith.addf %82, %84 : vector<8x256xf32>
    %cst_49 = arith.constant 0.000000e+00 : f32
    %86 = vector.broadcast %cst_49 : f32 to vector<8x256xf32>
    %87 = arith.maximumf %85, %86 : vector<8x256xf32>
    %c6_i32_50 = arith.constant 6 : i32
    %88 = tpu.memref_slice %arg34[%c6_i32_50] : memref<9x!tpu.dma_semaphore, #tpu.memory_space<semaphore_mem>> -> memref<1x!tpu.dma_semaphore, #tpu.memory_space<semaphore_mem>>
    %89 = tpu.memref_squeeze %88 : memref<1x!tpu.dma_semaphore, #tpu.memory_space<semaphore_mem>> -> memref<!tpu.dma_semaphore, #tpu.memory_space<semaphore_mem>>
    tpu.wait_dma2 semaphore(%89 : memref<!tpu.dma_semaphore, #tpu.memory_space<semaphore_mem>>) src(%arg8 : memref<256x512xbf16, #tpu.memory_space<any>>) dst(%arg31 : memref<256x512xbf16, #tpu.memory_space<vmem>>)
    %90 = arith.truncf %87 : vector<8x256xf32> to vector<8x256xbf16>
    %c0_51 = arith.constant 0 : index
    %c0_52 = arith.constant 0 : index
    %91 = vector.load %arg31[%c0_51, %c0_52] : memref<256x512xbf16, #tpu.memory_space<vmem>>, vector<256x512xbf16>
    %cst_53 = arith.constant dense<0.000000e+00> : vector<8x512xf32>
    %92 = tpu.matmul %90, %91, %cst_53 {dimension_numbers = #tpu.dot_dimension_numbers<[1], [0], [0], [1], [0, 0, 1, 1], [], []>} : vector<8x256xbf16>, vector<256x512xbf16>, vector<8x512xf32> -> vector<8x512xf32>
    %c0_54 = arith.constant 0 : index
    %c0_55 = arith.constant 0 : index
    %93 = vector.load %arg17[%c0_54, %c0_55] : memref<1x512xf32, #tpu.memory_space<vmem>>, vector<1x512xf32>
    %94 = vector.broadcast %93 : vector<1x512xf32> to vector<8x512xf32>
    %95 = arith.addf %92, %94 : vector<8x512xf32>
    %cst_56 = arith.constant 0.000000e+00 : f32
    %96 = vector.broadcast %cst_56 : f32 to vector<8x512xf32>
    %97 = arith.maximumf %95, %96 : vector<8x512xf32>
    %c7_i32_57 = arith.constant 7 : i32
    %98 = tpu.memref_slice %arg34[%c7_i32_57] : memref<9x!tpu.dma_semaphore, #tpu.memory_space<semaphore_mem>> -> memref<1x!tpu.dma_semaphore, #tpu.memory_space<semaphore_mem>>
    %99 = tpu.memref_squeeze %98 : memref<1x!tpu.dma_semaphore, #tpu.memory_space<semaphore_mem>> -> memref<!tpu.dma_semaphore, #tpu.memory_space<semaphore_mem>>
    tpu.wait_dma2 semaphore(%99 : memref<!tpu.dma_semaphore, #tpu.memory_space<semaphore_mem>>) src(%arg9 : memref<512x1024xbf16, #tpu.memory_space<any>>) dst(%arg32 : memref<512x1024xbf16, #tpu.memory_space<vmem>>)
    %100 = arith.truncf %97 : vector<8x512xf32> to vector<8x512xbf16>
    %c0_58 = arith.constant 0 : index
    %c0_59 = arith.constant 0 : index
    %101 = vector.load %arg32[%c0_58, %c0_59] : memref<512x1024xbf16, #tpu.memory_space<vmem>>, vector<512x1024xbf16>
    %cst_60 = arith.constant dense<0.000000e+00> : vector<8x1024xf32>
    %102 = tpu.matmul %100, %101, %cst_60 {dimension_numbers = #tpu.dot_dimension_numbers<[1], [0], [0], [1], [0, 0, 1, 1], [], []>} : vector<8x512xbf16>, vector<512x1024xbf16>, vector<8x1024xf32> -> vector<8x1024xf32>
    %c0_61 = arith.constant 0 : index
    %c0_62 = arith.constant 0 : index
    %103 = vector.load %arg18[%c0_61, %c0_62] : memref<1x1024xf32, #tpu.memory_space<vmem>>, vector<1x1024xf32>
    %104 = vector.broadcast %103 : vector<1x1024xf32> to vector<8x1024xf32>
    %105 = arith.addf %102, %104 : vector<8x1024xf32>
    %cst_63 = arith.constant 0.000000e+00 : f32
    %106 = vector.broadcast %cst_63 : f32 to vector<8x1024xf32>
    %107 = arith.maximumf %105, %106 : vector<8x1024xf32>
    %c8_i32_64 = arith.constant 8 : i32
    %108 = tpu.memref_slice %arg34[%c8_i32_64] : memref<9x!tpu.dma_semaphore, #tpu.memory_space<semaphore_mem>> -> memref<1x!tpu.dma_semaphore, #tpu.memory_space<semaphore_mem>>
    %109 = tpu.memref_squeeze %108 : memref<1x!tpu.dma_semaphore, #tpu.memory_space<semaphore_mem>> -> memref<!tpu.dma_semaphore, #tpu.memory_space<semaphore_mem>>
    tpu.wait_dma2 semaphore(%109 : memref<!tpu.dma_semaphore, #tpu.memory_space<semaphore_mem>>) src(%arg10 : memref<1024x512xbf16, #tpu.memory_space<any>>) dst(%arg33 : memref<1024x512xbf16, #tpu.memory_space<vmem>>)
    %110 = arith.truncf %107 : vector<8x1024xf32> to vector<8x1024xbf16>
    %c0_65 = arith.constant 0 : index
    %c0_66 = arith.constant 0 : index
    %111 = vector.load %arg33[%c0_65, %c0_66] : memref<1024x512xbf16, #tpu.memory_space<vmem>>, vector<1024x512xbf16>
    %cst_67 = arith.constant dense<0.000000e+00> : vector<8x512xf32>
    %112 = tpu.matmul %110, %111, %cst_67 {dimension_numbers = #tpu.dot_dimension_numbers<[1], [0], [0], [1], [0, 0, 1, 1], [], []>} : vector<8x1024xbf16>, vector<1024x512xbf16>, vector<8x512xf32> -> vector<8x512xf32>
    %c0_68 = arith.constant 0 : index
    %c0_69 = arith.constant 0 : index
    %113 = vector.load %arg19[%c0_68, %c0_69] : memref<1x512xf32, #tpu.memory_space<vmem>>, vector<1x512xf32>
    %114 = vector.broadcast %113 : vector<1x512xf32> to vector<8x512xf32>
    %115 = arith.addf %112, %114 : vector<8x512xf32>
    %c0_70 = arith.constant 0 : index
    %c0_71 = arith.constant 0 : index
    %116 = vector.load %arg22[%c0_70, %c0_71] : memref<8x512xf32, #tpu.memory_space<vmem>>, vector<8x512xf32>
    tpu.vector_store %arg22[%c0_70, %c0_71], %115 {strides = array<i32>} : memref<8x512xf32, #tpu.memory_space<vmem>>, vector<8x512xf32>,
    return
  }
  func.func @transform_0(%arg0: i32) -> (i32, i32) {
    %c0_i32 = arith.constant 0 : i32
    %c0_i32_0 = arith.constant 0 : i32
    %c0_i32_1 = arith.constant 0 : i32
    return %c0_i32, %c0_i32_0 : i32, i32
  }
  func.func @transform_10(%arg0: i32) -> (i32, i32) {
    %c0_i32 = arith.constant 0 : i32
    %c0_i32_0 = arith.constant 0 : i32
    %c0_i32_1 = arith.constant 0 : i32
    return %c0_i32, %c0_i32_0 : i32, i32
  }
  func.func @transform_11(%arg0: i32) -> (i32, i32) {
    %c0_i32 = arith.constant 0 : i32
    %c0_i32_0 = arith.constant 0 : i32
    %c0_i32_1 = arith.constant 0 : i32
    return %c0_i32, %c0_i32_0 : i32, i32
  }
  func.func @transform_12(%arg0: i32) -> (i32, i32) {
    %c0_i32 = arith.constant 0 : i32
    %c0_i32_0 = arith.constant 0 : i32
    %c0_i32_1 = arith.constant 0 : i32
    return %c0_i32, %c0_i32_0 : i32, i32
  }
  func.func @transform_13(%arg0: i32) -> (i32, i32) {
    %c0_i32 = arith.constant 0 : i32
    %c0_i32_0 = arith.constant 0 : i32
    %c0_i32_1 = arith.constant 0 : i32
    return %c0_i32, %c0_i32_0 : i32, i32
  }
  func.func @transform_14(%arg0: i32) -> (i32, i32) {
    %c0_i32 = arith.constant 0 : i32
    %c0_i32_0 = arith.constant 0 : i32
    %c0_i32_1 = arith.constant 0 : i32
    return %c0_i32, %c0_i32_0 : i32, i32
  }
  func.func @transform_15(%arg0: i32) -> (i32, i32) {
    %c0_i32 = arith.constant 0 : i32
    %c0_i32_0 = arith.constant 0 : i32
    %c0_i32_1 = arith.constant 0 : i32
    return %c0_i32, %c0_i32_0 : i32, i32
  }
  func.func @transform_16(%arg0: i32) -> (i32, i32) {
    %c0_i32 = arith.constant 0 : i32
    %c0_i32_0 = arith.constant 0 : i32
    %c0_i32_1 = arith.constant 0 : i32
    return %c0_i32, %c0_i32_0 : i32, i32
  }
  func.func @transform_17(%arg0: i32) -> (i32, i32) {
    %c0_i32 = arith.constant 0 : i32
    %c0_i32_0 = arith.constant 0 : i32
    %c0_i32_1 = arith.constant 0 : i32
    return %c0_i32, %c0_i32_0 : i32, i32
  }
  func.func @transform_18(%arg0: i32) -> (i32, i32) {
    %c0_i32 = arith.constant 0 : i32
    %c0_i32_0 = arith.constant 0 : i32
    %c0_i32_1 = arith.constant 0 : i32
    return %c0_i32, %c0_i32_0 : i32, i32
  }
  func.func @transform_19(%arg0: i32) -> (i32, i32) {
    %c0_i32 = arith.constant 0 : i32
    %c0_i32_0 = arith.constant 0 : i32
    %c0_i32_1 = arith.constant 0 : i32
    return %c0_i32, %c0_i32_0 : i32, i32
  }
  func.func @transform_20(%arg0: i32) -> (i32, i32) {
    %c0_i32 = arith.constant 0 : i32
    %c0_i32_0 = arith.constant 0 : i32
    %c0_i32_1 = arith.constant 0 : i32
    return %c0_i32, %c0_i32_0 : i32, i32
  }
  func.func @transform_21(%arg0: i32) -> (i32, i32) {
    %c0_i32 = arith.constant 0 : i32
    %c0_i32_0 = arith.constant 0 : i32
    %c0_i32_1 = arith.constant 0 : i32
    return %c0_i32, %c0_i32_0 : i32, i32
  }
  func.func @transform_22(%arg0: i32) -> (i32, i32) {
    %c0_i32 = arith.constant 0 : i32
    %c0_i32_0 = arith.constant 0 : i32
    %c0_i32_1 = arith.constant 0 : i32
    return %c0_i32, %c0_i32_0 : i32, i32
  }
  func.func @transform_23(%arg0: i32) -> (i32, i32) {
    %c0_i32 = arith.constant 0 : i32
    %c0_i32_0 = arith.constant 0 : i32
    %c0_i32_1 = arith.constant 0 : i32
    return %c0_i32, %c0_i32_0 : i32, i32
  }
}

</mosaic_0001>

<llo_original>
// kernel: tpu_custom_call.1
$region0: #{tpu_custom_call.1}
  #allocation0 [shape = 'u32[]', space=smem, size = 0x4, offset = 0x4, fixed_abs, tag = 'smem constant byte address 0x4 - core index']
  #allocation1 [shape = 'u32[144,128]{1,0:T(1,128)}', space=vmem, size = 0x12000, scoped, tag = 'internal scratch']
  #allocation2 [shape = 'bf16[512,1024]{1,0:T(16,128)(2,1)}', space=vmem, size = 0x100000, scoped, tag = 'scratch operand']
  #allocation3 [shape = 'bf16[1024,512]{1,0:T(16,128)(2,1)}', space=vmem, size = 0x100000, scoped, tag = 'scratch operand']
  #allocation4 [shape = 'bf16[512,256]{1,0:T(16,128)(2,1)}', space=vmem, size = 0x40000, scoped, tag = 'scratch operand']
  #allocation5 [shape = 'bf16[256,128]{1,0:T(16,128)(2,1)}', space=vmem, size = 0x10000, scoped, tag = 'scratch operand']
  #allocation6 [shape = 'bf16[128,256]{1,0:T(16,128)(2,1)}', space=vmem, size = 0x10000, scoped, tag = 'scratch operand']
  #allocation7 [shape = 'bf16[128,256]{1,0:T(16,128)(2,1)}', space=vmem, size = 0x10000, scoped, tag = 'scratch operand']
  #allocation8 [shape = 'bf16[256,512]{1,0:T(16,128)(2,1)}', space=vmem, size = 0x40000, scoped, tag = 'scratch operand']
  #allocation9 [shape = 'bf16[512,1024]{1,0:T(16,128)(2,1)}', space=vmem, size = 0x100000, scoped, tag = 'scratch operand']
  #allocation10 [shape = 'bf16[1024,512]{1,0:T(16,128)(2,1)}', space=vmem, size = 0x100000, scoped, tag = 'scratch operand']
  #allocation11 [shape = 's32[9]{0}', space=sflag, size = 0x24, scoped, tag = 'scratch operand']
  #allocation21 [shape = 's32[]', space=sflag, size = 0x4, offset = 0, fixed_abs, tag = 'sflag constant byte address 0x0 - dummy sync flag']
  #allocation23 [shape = 's32[]', space=sflag, size = 0x4, offset = 0, fixed_abs, tag = 'sflag constant byte address 0x0 - dummy sync flag']
  #allocation25 [shape = 's32[]', space=sflag, size = 0x4, offset = 0, fixed_abs, tag = 'sflag constant byte address 0x0 - dummy sync flag']
  #allocation27 [shape = 's32[]', space=sflag, size = 0x4, offset = 0, fixed_abs, tag = 'sflag constant byte address 0x0 - dummy sync flag']
  #allocation28 [shape = 's32[]', space=sflag, size = 0x4, offset = 0, fixed_abs, tag = 'sflag constant byte address 0x0 - dummy sync flag']
  #allocation29 [shape = 'u32[]', space=smem, size = 0x4, offset = 0x44, fixed_abs, tag = 'smem constant byte address 0x44 - assertion arg 0']
  #allocation30 [shape = 'u32[]', space=smem, size = 0x4, offset = 0x48, fixed_abs, tag = 'smem constant byte address 0x48 - assertion arg 1']
  #allocation31 [shape = 's32[]', space=sflag, size = 0x4, offset = 0, fixed_abs, tag = 'sflag constant byte address 0x0 - dummy sync flag']
  #allocation33 [shape = 's32[]', space=sflag, size = 0x4, offset = 0, fixed_abs, tag = 'sflag constant byte address 0x0 - dummy sync flag']
  #allocation35 [shape = 's32[]', space=sflag, size = 0x4, offset = 0, fixed_abs, tag = 'sflag constant byte address 0x0 - dummy sync flag']
  #allocation37 [shape = 's32[]', space=sflag, size = 0x4, offset = 0, fixed_abs, tag = 'sflag constant byte address 0x0 - dummy sync flag']
  #allocation39 [shape = 's32[]', space=sflag, size = 0x4, offset = 0, fixed_abs, tag = 'sflag constant byte address 0x0 - dummy sync flag']
  %s0 = inlined_call_operand.hbm [shape: f32[8,512], index: 0, kind: input, shape index: {}]
  %s1 = inlined_call_operand.hbm [shape: bf16[512,1024], index: 1, kind: input, shape index: {}]
  %s2 = inlined_call_operand.hbm [shape: bf16[1024,512], index: 2, kind: input, shape index: {}]
  %s3 = inlined_call_operand.hbm [shape: bf16[512,256], index: 3, kind: input, shape index: {}]
  %s4 = inlined_call_operand.hbm [shape: bf16[256,128], index: 4, kind: input, shape index: {}]
  %s5 = inlined_call_operand.hbm [shape: bf16[128,256], index: 5, kind: input, shape index: {}]
  %s6 = inlined_call_operand.hbm [shape: bf16[128,256], index: 6, kind: input, shape index: {}]
  %s7 = inlined_call_operand.hbm [shape: bf16[256,512], index: 7, kind: input, shape index: {}]
  %s8 = inlined_call_operand.hbm [shape: bf16[512,1024], index: 8, kind: input, shape index: {}]
  %s9 = inlined_call_operand.hbm [shape: bf16[1024,512], index: 9, kind: input, shape index: {}]
  %s10 = inlined_call_operand.vmem [shape: f32[1,1024], index: 10, kind: input, shape index: {}]
  %s11 = inlined_call_operand.vmem [shape: f32[1,512], index: 11, kind: input, shape index: {}]
  %s12 = inlined_call_operand.vmem [shape: f32[1,256], index: 12, kind: input, shape index: {}]
  %s13 = inlined_call_operand.vmem [shape: f32[1,128], index: 13, kind: input, shape index: {}]
  %s14 = inlined_call_operand.vmem [shape: f32[1,256], index: 14, kind: input, shape index: {}]
  %s15 = inlined_call_operand.vmem [shape: f32[1,256], index: 15, kind: input, shape index: {}]
  %s16 = inlined_call_operand.vmem [shape: f32[1,512], index: 16, kind: input, shape index: {}]
  %s17 = inlined_call_operand.vmem [shape: f32[1,1024], index: 17, kind: input, shape index: {}]
  %s18 = inlined_call_operand.vmem [shape: f32[1,512], index: 18, kind: input, shape index: {}]
  %s19 = inlined_call_operand.vmem [shape: f32[8,128], index: 19, kind: input, shape index: {}]
  %s20 = inlined_call_operand.hbm [shape: f32[8,128], index: 20, kind: output, shape index: {0}]
  %s21 = inlined_call_operand.hbm [shape: f32[8,512], index: 21, kind: output, shape index: {1}]
  %s22 = inlined_call_operand.hbm [shape: f32[8,128], index: 22, kind: output, shape index: {2}]
  %s23 = inlined_call_operand.hbm [shape: f32[8,128], index: 23, kind: output, shape index: {3}]
  %24 = xla_tuple %s20, %s21, %s22, %s23
  %s25 = sld [smem:[#allocation0]]
  $region86: #{tpu_custom_call.1} parent=0
    _
  %s27 = ssub.s32 1, %s25
  %s28 = scalar_select 0, %s27, %s25
  $region1: #{tpu_custom_call.1} parent=0
    #allocation12 [shape = 'u8[16384]{0}', space=vmem, size = 0x4000, scoped, tag = 'input window, operand 0, single buffered']
    #allocation13 [shape = 's32[1]{0}', space=sflag, size = 0x4, scoped, tag = 'scoped memory for tpu_custom_call.1']
    #allocation14 [shape = 's32[1]{0}', space=sflag, size = 0x4, scoped, tag = 'scoped memory for tpu_custom_call.1']
    #allocation15 [shape = 'u8[4096]{0}', space=vmem, size = 0x1000, scoped, tag = 'output window, operand 0, single buffered']
    #allocation16 [shape = 'u8[16384]{0}', space=vmem, size = 0x4000, scoped, tag = 'output window, operand 1, single buffered']
    #allocation17 [shape = 's32[1]{0}', space=sflag, size = 0x4, scoped, tag = 'scoped memory for tpu_custom_call.1']
    #allocation18 [shape = 'u8[4096]{0}', space=vmem, size = 0x1000, scoped, tag = 'output window, operand 2, single buffered']
    #allocation19 [shape = 'u8[4096]{0}', space=vmem, size = 0x1000, scoped, tag = 'output window, operand 3, single buffered']
    #allocation20 [shape = 's32[1]{0}', space=sflag, size = 0x4, scoped, tag = 'scoped memory for tpu_custom_call.1']
    #allocation22 [shape = 'u32[9]{0}', space=smem, size = 0x24, scoped, tag = 'DMA stride descriptor']
    #allocation24 [shape = 'u32[9]{0}', space=smem, size = 0x24, scoped, tag = 'DMA stride descriptor']
    #allocation26 [shape = 'u32[9]{0}', space=smem, size = 0x24, scoped, tag = 'DMA stride descriptor']
    #allocation32 [shape = 'u32[9]{0}', space=smem, size = 0x24, scoped, tag = 'DMA stride descriptor']
    #allocation34 [shape = 'u32[9]{0}', space=smem, size = 0x24, scoped, tag = 'DMA stride descriptor']
    #allocation36 [shape = 'u32[9]{0}', space=smem, size = 0x24, scoped, tag = 'DMA stride descriptor']
    #allocation38 [shape = 'u32[9]{0}', space=smem, size = 0x24, scoped, tag = 'DMA stride descriptor']
    #allocation40 [shape = 'u32[9]{0}', space=smem, size = 0x24, scoped, tag = 'DMA stride descriptor']
    %29 = vsyncpa [#allocation13], 0
    %30 = vsyncpa [#allocation14], 0
    %31 = vsyncpa [#allocation17], 0
    %32 = vsyncpa [#allocation20], 0
    // Predicated region
    $region2: #{tpu_custom_call.1} parent=1 // pred_check
      _
    $region3: #{tpu_custom_call.1} parent=1 // pred_check_branch
      %34 = sbr.rel (0) target = $region5
    $region4: #{tpu_custom_call.1} parent=1 // pred_region
      %s36 = ssub.s32 512, 512
      %37 = vsyncadd [#allocation13], %s36
      %s39 = sshll.u32 [#allocation12], 4
      %s40 = int_to_ptr.vmem [resolvable:$true] %s39
      %42 = dma.hbm_to_vmem [thread:$0]  %s0, 512, %s40, [#allocation13]
    $region5: #{tpu_custom_call.1} parent=1 // pred_fallthru
      _
    // Predicated region
    $region6: #{tpu_custom_call.1} parent=1 // pred_check
      _
    $region7: #{tpu_custom_call.1} parent=1 // pred_check_branch
      %44 = sbr.rel (0) target = $region9
    $region8: #{tpu_custom_call.1} parent=1 // pred_region
      _
    $region9: #{tpu_custom_call.1} parent=1 // pred_fallthru
      _
    // Predicated region
    $region10: #{tpu_custom_call.1} parent=1 // pred_check
      _
    $region11: #{tpu_custom_call.1} parent=1 // pred_check_branch
      %46 = sbr.rel (0) target = $region13
    $region12: #{tpu_custom_call.1} parent=1 // pred_region
      _
    $region13: #{tpu_custom_call.1} parent=1 // pred_fallthru
      _
    // Predicated region
    $region14: #{tpu_custom_call.1} parent=1 // pred_check
      _
    $region15: #{tpu_custom_call.1} parent=1 // pred_check_branch
      %48 = sbr.rel (0) target = $region17
    $region16: #{tpu_custom_call.1} parent=1 // pred_region
      _
    $region17: #{tpu_custom_call.1} parent=1 // pred_fallthru
      _
    // Predicated region
    $region18: #{tpu_custom_call.1} parent=1 // pred_check
      _
    $region19: #{tpu_custom_call.1} parent=1 // pred_check_branch
      %50 = sbr.rel (0) target = $region21
    $region20: #{tpu_custom_call.1} parent=1 // pred_region
      _
    $region21: #{tpu_custom_call.1} parent=1 // pred_fallthru
      _
    // Predicated region
    $region22: #{tpu_custom_call.1} parent=1 // pred_check
      _
    $region23: #{tpu_custom_call.1} parent=1 // pred_check_branch
      %52 = sbr.rel (0) target = $region25
    $region24: #{tpu_custom_call.1} parent=1 // pred_region
      _
    $region25: #{tpu_custom_call.1} parent=1 // pred_fallthru
      _
    // Predicated region
    $region26: #{tpu_custom_call.1} parent=1 // pred_check
      _
    $region27: #{tpu_custom_call.1} parent=1 // pred_check_branch
      %54 = sbr.rel (0) target = $region29
    $region28: #{tpu_custom_call.1} parent=1 // pred_region
      _
    $region29: #{tpu_custom_call.1} parent=1 // pred_fallthru
      _
    // Predicated region
    $region30: #{tpu_custom_call.1} parent=1 // pred_check
      _
    $region31: #{tpu_custom_call.1} parent=1 // pred_check_branch
      %56 = sbr.rel (0) target = $region33
    $region32: #{tpu_custom_call.1} parent=1 // pred_region
      _
    $region33: #{tpu_custom_call.1} parent=1 // pred_fallthru
      _
    // Predicated region
    $region34: #{tpu_custom_call.1} parent=1 // pred_check
      _
    $region35: #{tpu_custom_call.1} parent=1 // pred_check_branch
      %58 = sbr.rel (0) target = $region37
    $region36: #{tpu_custom_call.1} parent=1 // pred_region
      _
    $region37: #{tpu_custom_call.1} parent=1 // pred_fallthru
      _
    // Predicated region
    $region38: #{tpu_custom_call.1} parent=1 // pred_check
      _
    $region39: #{tpu_custom_call.1} parent=1 // pred_check_branch
      %60 = sbr.rel (0) target = $region41
    $region40: #{tpu_custom_call.1} parent=1 // pred_region
      _
    $region41: #{tpu_custom_call.1} parent=1 // pred_fallthru
      _
    // Predicated region
    $region42: #{tpu_custom_call.1} parent=1 // pred_check
      _
    $region43: #{tpu_custom_call.1} parent=1 // pred_check_branch
      %62 = sbr.rel (0) target = $region45
    $region44: #{tpu_custom_call.1} parent=1 // pred_region
      _
    $region45: #{tpu_custom_call.1} parent=1 // pred_fallthru
      _
    // Predicated region
    $region46: #{tpu_custom_call.1} parent=1 // pred_check
      _
    $region47: #{tpu_custom_call.1} parent=1 // pred_check_branch
      %64 = sbr.rel (0) target = $region49
    $region48: #{tpu_custom_call.1} parent=1 // pred_region
      %65 = dma.done [#allocation13], 512
    $region49: #{tpu_custom_call.1} parent=1 // pred_fallthru
      _
    %s68 = sshll.u32 1, 14
    %s69 = sxor.u32 4294967295, %s68
    %s71 = sld [smem:[#allocation0]]
    %s72 = sadd.s32 2, %s71
    %s74 = sshll.u32 7, 26
    %s75 = sxor.u32 4294967295, %s74
    %s76 = sand.u32 0, %s75
    %s77 = sshll.u32 %s72, 26
    %s78 = sor.u32 %s76, %s77
    %s79 = sshll.u32 [#allocation2], 4
    %s80 = int_to_ptr.vmem [resolvable:$true] %s79
    %83 = sst [smem:[#allocation22]] 1024
    %s84 = scalar_lea.smem [#allocation22], 1
    %85 = sst [smem:[%s84]] 1024
    %s86 = scalar_lea.smem [#allocation22], 2
    %87 = sst [smem:[%s86]] 8
    %s88 = scalar_lea.smem [#allocation22], 3
    %89 = sst [smem:[%s88]] 64
    %s90 = scalar_lea.smem [#allocation22], 4
    %91 = sst [smem:[%s90]] 128
    %s92 = scalar_lea.smem [#allocation22], 5
    %93 = sst [smem:[%s92]] 2
    %s94 = scalar_lea.smem [#allocation22], 6
    %95 = sst [smem:[%s94]] 512
    %s96 = scalar_lea.smem [#allocation22], 7
    %97 = sst [smem:[%s96]] 64
    %s98 = scalar_lea.smem [#allocation22], 8
    %99 = sst [smem:[%s98]] 4
    %101 = dma.general %s1, 32768, %s80, [#allocation11], [#allocation21], [#allocation22], %s78, 0
    %s102 = scalar_lea.sflag [#allocation11], 1
    %s104 = sshll.u32 1, 14
    %s105 = sxor.u32 4294967295, %s104
    %s107 = sadd.s32 2, %s71
    %s109 = sshll.u32 7, 26
    %s110 = sxor.u32 4294967295, %s109
    %s111 = sand.u32 0, %s110
    %s112 = sshll.u32 %s107, 26
    %s113 = sor.u32 %s111, %s112
    %s114 = sshll.u32 [#allocation3], 4
    %s115 = int_to_ptr.vmem [resolvable:$true] %s114
    %118 = sst [smem:[#allocation24]] 512
    %s119 = scalar_lea.smem [#allocation24], 1
    %120 = sst [smem:[%s119]] 512
    %s121 = scalar_lea.smem [#allocation24], 2
    %122 = sst [smem:[%s121]] 4
    %s123 = scalar_lea.smem [#allocation24], 3
    %124 = sst [smem:[%s123]] 64
    %s125 = scalar_lea.smem [#allocation24], 4
    %126 = sst [smem:[%s125]] 128
    %s127 = scalar_lea.smem [#allocation24], 5
    %128 = sst [smem:[%s127]] 2
    %s129 = scalar_lea.smem [#allocation24], 6
    %130 = sst [smem:[%s129]] 256
    %s131 = scalar_lea.smem [#allocation24], 7
    %132 = sst [smem:[%s131]] 64
    %s133 = scalar_lea.smem [#allocation24], 8
    %134 = sst [smem:[%s133]] 4
    %136 = dma.general %s2, 32768, %s115, %s102, [#allocation23], [#allocation24], %s113, 0
    %s137 = scalar_lea.sflag [#allocation11], 2
    %s139 = sshll.u32 1, 14
    %s140 = sxor.u32 4294967295, %s139
    %s142 = sadd.s32 2, %s71
    %s144 = sshll.u32 7, 26
    %s145 = sxor.u32 4294967295, %s144
    %s146 = sand.u32 0, %s145
    %s147 = sshll.u32 %s142, 26
    %s148 = sor.u32 %s146, %s147
    %s149 = sshll.u32 [#allocation4], 4
    %s150 = int_to_ptr.vmem [resolvable:$true] %s149
    %153 = sst [smem:[#allocation26]] 256
    %s154 = scalar_lea.smem [#allocation26], 1
    %155 = sst [smem:[%s154]] 256
    %s156 = scalar_lea.smem [#allocation26], 2
    %157 = sst [smem:[%s156]] 2
    %s158 = scalar_lea.smem [#allocation26], 3
    %159 = sst [smem:[%s158]] 64
    %s160 = scalar_lea.smem [#allocation26], 4
    %161 = sst [smem:[%s160]] 128
    %s162 = scalar_lea.smem [#allocation26], 5
    %163 = sst [smem:[%s162]] 2
    %s164 = scalar_lea.smem [#allocation26], 6
    %165 = sst [smem:[%s164]] 128
    %s166 = scalar_lea.smem [#allocation26], 7
    %167 = sst [smem:[%s166]] 64
    %s168 = scalar_lea.smem [#allocation26], 8
    %169 = sst [smem:[%s168]] 4
    %171 = dma.general %s3, 8192, %s150, %s137, [#allocation25], [#allocation26], %s148, 0
    %s172 = scalar_lea.sflag [#allocation11], 3
    // Predicated region
    $region50: #{tpu_custom_call.1} parent=1 // pred_check
      _
    $region51: #{tpu_custom_call.1} parent=1 // pred_check_branch
      %174 = sbr.rel target = $region53
    $region52: #{tpu_custom_call.1} parent=1 // pred_region
      %175 = sst [smem:[#allocation29]] [#allocation28]
      %176 = sst [smem:[#allocation30]] [#allocation27]
    $region53: #{tpu_custom_call.1} parent=1 // pred_fallthru
      _
    %178 = shalt.err (0)
    %s180 = sshll.u32 [#allocation5], 4
    %s181 = int_to_ptr.vmem [resolvable:$true] %s180
    %183 = dma.hbm_to_vmem [thread:$0]  %s4, 2048, %s181, %s172
    %s184 = scalar_lea.sflag [#allocation11], 4
    %s186 = sshll.u32 1, 14
    %s187 = sxor.u32 4294967295, %s186
    %s189 = sadd.s32 2, %s71
    %s191 = sshll.u32 7, 26
    %s192 = sxor.u32 4294967295, %s191
    %s193 = sand.u32 0, %s192
    %s194 = sshll.u32 %s189, 26
    %s195 = sor.u32 %s193, %s194
    %s196 = sshll.u32 [#allocation6], 4
    %s197 = int_to_ptr.vmem [resolvable:$true] %s196
    %200 = sst [smem:[#allocation32]] 256
    %s201 = scalar_lea.smem [#allocation32], 1
    %202 = sst [smem:[%s201]] 256
    %s203 = scalar_lea.smem [#allocation32], 2
    %204 = sst [smem:[%s203]] 2
    %s205 = scalar_lea.smem [#allocation32], 3
    %206 = sst [smem:[%s205]] 64
    %s207 = scalar_lea.smem [#allocation32], 4
    %208 = sst [smem:[%s207]] 128
    %s209 = scalar_lea.smem [#allocation32], 5
    %210 = sst [smem:[%s209]] 2
    %s211 = scalar_lea.smem [#allocation32], 6
    %212 = sst [smem:[%s211]] 128
    %s213 = scalar_lea.smem [#allocation32], 7
    %214 = sst [smem:[%s213]] 64
    %s215 = scalar_lea.smem [#allocation32], 8
    %216 = sst [smem:[%s215]] 4
    %218 = dma.general %s5, 2048, %s197, %s184, [#allocation31], [#allocation32], %s195, 0
    %s219 = scalar_lea.sflag [#allocation11], 5
    %s221 = sshll.u32 1, 14
    %s222 = sxor.u32 4294967295, %s221
    %s224 = sadd.s32 2, %s71
    %s226 = sshll.u32 7, 26
    %s227 = sxor.u32 4294967295, %s226
    %s228 = sand.u32 0, %s227
    %s229 = sshll.u32 %s224, 26
    %s230 = sor.u32 %s228, %s229
    %s231 = sshll.u32 [#allocation7], 4
    %s232 = int_to_ptr.vmem [resolvable:$true] %s231
    %235 = sst [smem:[#allocation34]] 256
    %s236 = scalar_lea.smem [#allocation34], 1
    %237 = sst [smem:[%s236]] 256
    %s238 = scalar_lea.smem [#allocation34], 2
    %239 = sst [smem:[%s238]] 2
    %s240 = scalar_lea.smem [#allocation34], 3
    %241 = sst [smem:[%s240]] 64
    %s242 = scalar_lea.smem [#allocation34], 4
    %243 = sst [smem:[%s242]] 128
    %s244 = scalar_lea.smem [#allocation34], 5
    %245 = sst [smem:[%s244]] 2
    %s246 = scalar_lea.smem [#allocation34], 6
    %247 = sst [smem:[%s246]] 128
    %s248 = scalar_lea.smem [#allocation34], 7
    %249 = sst [smem:[%s248]] 64
    %s250 = scalar_lea.smem [#allocation34], 8
    %251 = sst [smem:[%s250]] 4
    %253 = dma.general %s6, 2048, %s232, %s219, [#allocation33], [#allocation34], %s230, 0
    %s254 = scalar_lea.sflag [#allocation11], 6
    %s256 = sshll.u32 1, 14
    %s257 = sxor.u32 4294967295, %s256
    %s259 = sadd.s32 2, %s71
    %s261 = sshll.u32 7, 26
    %s262 = sxor.u32 4294967295, %s261
    %s263 = sand.u32 0, %s262
    %s264 = sshll.u32 %s259, 26
    %s265 = sor.u32 %s263, %s264
    %s266 = sshll.u32 [#allocation8], 4
    %s267 = int_to_ptr.vmem [resolvable:$true] %s266
    %270 = sst [smem:[#allocation36]] 512
    %s271 = scalar_lea.smem [#allocation36], 1
    %272 = sst [smem:[%s271]] 512
    %s273 = scalar_lea.smem [#allocation36], 2
    %274 = sst [smem:[%s273]] 4
    %s275 = scalar_lea.smem [#allocation36], 3
    %276 = sst [smem:[%s275]] 64
    %s277 = scalar_lea.smem [#allocation36], 4
    %278 = sst [smem:[%s277]] 128
    %s279 = scalar_lea.smem [#allocation36], 5
    %280 = sst [smem:[%s279]] 2
    %s281 = scalar_lea.smem [#allocation36], 6
    %282 = sst [smem:[%s281]] 256
    %s283 = scalar_lea.smem [#allocation36], 7
    %284 = sst [smem:[%s283]] 64
    %s285 = scalar_lea.smem [#allocation36], 8
    %286 = sst [smem:[%s285]] 4
    %288 = dma.general %s7, 8192, %s267, %s254, [#allocation35], [#allocation36], %s265, 0
    %s289 = scalar_lea.sflag [#allocation11], 7
    %s291 = sshll.u32 1, 14
    %s292 = sxor.u32 4294967295, %s291
    %s294 = sadd.s32 2, %s71
    %s296 = sshll.u32 7, 26
    %s297 = sxor.u32 4294967295, %s296
    %s298 = sand.u32 0, %s297
    %s299 = sshll.u32 %s294, 26
    %s300 = sor.u32 %s298, %s299
    %s301 = sshll.u32 [#allocation9], 4
    %s302 = int_to_ptr.vmem [resolvable:$true] %s301
    %305 = sst [smem:[#allocation38]] 1024
    %s306 = scalar_lea.smem [#allocation38], 1
    %307 = sst [smem:[%s306]] 1024
    %s308 = scalar_lea.smem [#allocation38], 2
    %309 = sst [smem:[%s308]] 8
    %s310 = scalar_lea.smem [#allocation38], 3
    %311 = sst [smem:[%s310]] 64
    %s312 = scalar_lea.smem [#allocation38], 4
    %313 = sst [smem:[%s312]] 128
    %s314 = scalar_lea.smem [#allocation38], 5
    %315 = sst [smem:[%s314]] 2
    %s316 = scalar_lea.smem [#allocation38], 6
    %317 = sst [smem:[%s316]] 512
    %s318 = scalar_lea.smem [#allocation38], 7
    %319 = sst [smem:[%s318]] 64
    %s320 = scalar_lea.smem [#allocation38], 8
    %321 = sst [smem:[%s320]] 4
    %323 = dma.general %s8, 32768, %s302, %s289, [#allocation37], [#allocation38], %s300, 0
    %s324 = scalar_lea.sflag [#allocation11], 8
    %s326 = sshll.u32 1, 14
    %s327 = sxor.u32 4294967295, %s326
    %s329 = sadd.s32 2, %s71
    %s331 = sshll.u32 7, 26
    %s332 = sxor.u32 4294967295, %s331
    %s333 = sand.u32 0, %s332
    %s334 = sshll.u32 %s329, 26
    %s335 = sor.u32 %s333, %s334
    %s336 = sshll.u32 [#allocation10], 4
    %s337 = int_to_ptr.vmem [resolvable:$true] %s336
    %340 = sst [smem:[#allocation40]] 512
    %s341 = scalar_lea.smem [#allocation40], 1
    %342 = sst [smem:[%s341]] 512
    %s343 = scalar_lea.smem [#allocation40], 2
    %344 = sst [smem:[%s343]] 4
    %s345 = scalar_lea.smem [#allocation40], 3
    %346 = sst [smem:[%s345]] 64
    %s347 = scalar_lea.smem [#allocation40], 4
    %348 = sst [smem:[%s347]] 128
    %s349 = scalar_lea.smem [#allocation40], 5
    %350 = sst [smem:[%s349]] 2
    %s351 = scalar_lea.smem [#allocation40], 6
    %352 = sst [smem:[%s351]] 256
    %s353 = scalar_lea.smem [#allocation40], 7
    %354 = sst [smem:[%s353]] 64
    %s355 = scalar_lea.smem [#allocation40], 8
    %356 = sst [smem:[%s355]] 4
    %358 = dma.general %s9, 32768, %s337, %s324, [#allocation39], [#allocation40], %s335, 0
    %v359 = vld [vmem:[#allocation12] sm:$0xff]
    %v360 = vld [vmem:[#allocation12 + $0x8] sm:$0xff]
    %v361 = vld [vmem:[#allocation12 + $0x10] sm:$0xff]
    %v362 = vld [vmem:[#allocation12 + $0x18] sm:$0xff]
    %s363 = smul.u32 4, 64
    %s364 = smul.u32 %s363, 8
    %s365 = sshll.u32 %s364, 4
    %366 = dma.done [#allocation11], %s365
    %v367 = vpack.c.bf16 %v359, %v359
    %v368 = vpack.c.bf16 %v360, %v360
    %v369 = vpack.c.bf16 %v361, %v361
    %v370 = vpack.c.bf16 %v362, %v362
    %v371 = vld [vmem:[#allocation2] sm:$0xff]
    %v372 = vld [vmem:[#allocation2 + $0x8] sm:$0xff]
    %v373 = vld [vmem:[#allocation2 + $0x10] sm:$0xff]
    %v374 = vld [vmem:[#allocation2 + $0x18] sm:$0xff]
    %v375 = vld [vmem:[#allocation2 + $0x20] sm:$0xff]
    %v376 = vld [vmem:[#allocation2 + $0x28] sm:$0xff]
    %v377 = vld [vmem:[#allocation2 + $0x30] sm:$0xff]
    %v378 = vld [vmem:[#allocation2 + $0x38] sm:$0xff]
    %v379 = vld [vmem:[#allocation2 + $0x40] sm:$0xff]
    %v380 = vld [vmem:[#allocation2 + $0x48] sm:$0xff]
    %v381 = vld [vmem:[#allocation2 + $0x50] sm:$0xff]
    %v382 = vld [vmem:[#allocation2 + $0x58] sm:$0xff]
    %v383 = vld [vmem:[#allocation2 + $0x60] sm:$0xff]
    %v384 = vld [vmem:[#allocation2 + $0x68] sm:$0xff]
    %v385 = vld [vmem:[#allocation2 + $0x70] sm:$0xff]
    %v386 = vld [vmem:[#allocation2 + $0x78] sm:$0xff]
    %v387 = vld [vmem:[#allocation2 + $0x80] sm:$0xff]
    %v388 = vld [vmem:[#allocation2 + $0x88] sm:$0xff]
    %v389 = vld [vmem:[#allocation2 + $0x90] sm:$0xff]
    %v390 = vld [vmem:[#allocation2 + $0x98] sm:$0xff]
    %v391 = vld [vmem:[#allocation2 + $0xa0] sm:$0xff]
    %v392 = vld [vmem:[#allocation2 + $0xa8] sm:$0xff]
    %v393 = vld [vmem:[#allocation2 + $0xb0] sm:$0xff]
    %v394 = vld [vmem:[#allocation2 + $0xb8] sm:$0xff]
    %v395 = vld [vmem:[#allocation2 + $0xc0] sm:$0xff]
    %v396 = vld [vmem:[#allocation2 + $0xc8] sm:$0xff]
    %v397 = vld [vmem:[#allocation2 + $0xd0] sm:$0xff]
    %v398 = vld [vmem:[#allocation2 + $0xd8] sm:$0xff]
    %v399 = vld [vmem:[#allocation2 + $0xe0] sm:$0xff]
    %v400 = vld [vmem:[#allocation2 + $0xe8] sm:$0xff]
    %v401 = vld [vmem:[#allocation2 + $0xf0] sm:$0xff]
    %v402 = vld [vmem:[#allocation2 + $0xf8] sm:$0xff]
    %v403 = vld [vmem:[#allocation2 + $0x100] sm:$0xff]
    %v404 = vld [vmem:[#allocation2 + $0x108] sm:$0xff]
    %v405 = vld [vmem:[#allocation2 + $0x110] sm:$0xff]
    %v406 = vld [vmem:[#allocation2 + $0x118] sm:$0xff]
    %v407 = vld [vmem:[#allocation2 + $0x120] sm:$0xff]
    %v408 = vld [vmem:[#allocation2 + $0x128] sm:$0xff]
    %v409 = vld [vmem:[#allocation2 + $0x130] sm:$0xff]
    %v410 = vld [vmem:[#allocation2 + $0x138] sm:$0xff]
    %v411 = vld [vmem:[#allocation2 + $0x140] sm:$0xff]
    %v412 = vld [vmem:[#allocation2 + $0x148] sm:$0xff]
    %v413 = vld [vmem:[#allocation2 + $0x150] sm:$0xff]
    %v414 = vld [vmem:[#allocation2 + $0x158] sm:$0xff]
    %v415 = vld [vmem:[#allocation2 + $0x160] sm:$0xff]
    %v416 = vld [vmem:[#allocation2 + $0x168] sm:$0xff]
    %v417 = vld [vmem:[#allocation2 + $0x170] sm:$0xff]
    %v418 = vld [vmem:[#allocation2 + $0x178] sm:$0xff]
    %v419 = vld [vmem:[#allocation2 + $0x180] sm:$0xff]
    %v420 = vld [vmem:[#allocation2 + $0x188] sm:$0xff]
    %v421 = vld [vmem:[#allocation2 + $0x190] sm:$0xff]
    %v422 = vld [vmem:[#allocation2 + $0x198] sm:$0xff]
    %v423 = vld [vmem:[#allocation2 + $0x1a0] sm:$0xff]
    %v424 = vld [vmem:[#allocation2 + $0x1a8] sm:$0xff]
    %v425 = vld [vmem:[#allocation2 + $0x1b0] sm:$0xff]
    %v426 = vld [vmem:[#allocation2 + $0x1b8] sm:$0xff]
    %v427 = vld [vmem:[#allocation2 + $0x1c0] sm:$0xff]
    %v428 = vld [vmem:[#allocation2 + $0x1c8] sm:$0xff]
    %v429 = vld [vmem:[#allocation2 + $0x1d0] sm:$0xff]
    %v430 = vld [vmem:[#allocation2 + $0x1d8] sm:$0xff]
    %v431 = vld [vmem:[#allocation2 + $0x1e0] sm:$0xff]
    %v432 = vld [vmem:[#allocation2 + $0x1e8] sm:$0xff]
    %v433 = vld [vmem:[#allocation2 + $0x1f0] sm:$0xff]
    %v434 = vld [vmem:[#allocation2 + $0x1f8] sm:$0xff]
    %v435 = vld [vmem:[#allocation2 + $0x200] sm:$0xff]
    %v436 = vld [vmem:[#allocation2 + $0x208] sm:$0xff]
    %v437 = vld [vmem:[#allocation2 + $0x210] sm:$0xff]
    %v438 = vld [vmem:[#allocation2 + $0x218] sm:$0xff]
    %v439 = vld [vmem:[#allocation2 + $0x220] sm:$0xff]
    %v440 = vld [vmem:[#allocation2 + $0x228] sm:$0xff]
    %v441 = vld [vmem:[#allocation2 + $0x230] sm:$0xff]
    %v442 = vld [vmem:[#allocation2 + $0x238] sm:$0xff]
    %v443 = vld [vmem:[#allocation2 + $0x240] sm:$0xff]
    %v444 = vld [vmem:[#allocation2 + $0x248] sm:$0xff]
    %v445 = vld [vmem:[#allocation2 + $0x250] sm:$0xff]
    %v446 = vld [vmem:[#allocation2 + $0x258] sm:$0xff]
    %v447 = vld [vmem:[#allocation2 + $0x260] sm:$0xff]
    %v448 = vld [vmem:[#allocation2 + $0x268] sm:$0xff]
    %v449 = vld [vmem:[#allocation2 + $0x270] sm:$0xff]
    %v450 = vld [vmem:[#allocation2 + $0x278] sm:$0xff]
    %v451 = vld [vmem:[#allocation2 + $0x280] sm:$0xff]
    %v452 = vld [vmem:[#allocation2 + $0x288] sm:$0xff]
    %v453 = vld [vmem:[#allocation2 + $0x290] sm:$0xff]
    %v454 = vld [vmem:[#allocation2 + $0x298] sm:$0xff]
    %v455 = vld [vmem:[#allocation2 + $0x2a0] sm:$0xff]
    %v456 = vld [vmem:[#allocation2 + $0x2a8] sm:$0xff]
    %v457 = vld [vmem:[#allocation2 + $0x2b0] sm:$0xff]
    %v458 = vld [vmem:[#allocation2 + $0x2b8] sm:$0xff]
    %v459 = vld [vmem:[#allocation2 + $0x2c0] sm:$0xff]
    %v460 = vld [vmem:[#allocation2 + $0x2c8] sm:$0xff]
    %v461 = vld [vmem:[#allocation2 + $0x2d0] sm:$0xff]
    %v462 = vld [vmem:[#allocation2 + $0x2d8] sm:$0xff]
    %v463 = vld [vmem:[#allocation2 + $0x2e0] sm:$0xff]
    %v464 = vld [vmem:[#allocation2 + $0x2e8] sm:$0xff]
    %v465 = vld [vmem:[#allocation2 + $0x2f0] sm:$0xff]
    %v466 = vld [vmem:[#allocation2 + $0x2f8] sm:$0xff]
    %v467 = vld [vmem:[#allocation2 + $0x300] sm:$0xff]
    %v468 = vld [vmem:[#allocation2 + $0x308] sm:$0xff]
    %v469 = vld [vmem:[#allocation2 + $0x310] sm:$0xff]
    %v470 = vld [vmem:[#allocation2 + $0x318] sm:$0xff]
    %v471 = vld [vmem:[#allocation2 + $0x320] sm:$0xff]
    %v472 = vld [vmem:[#allocation2 + $0x328] sm:$0xff]
    %v473 = vld [vmem:[#allocation2 + $0x330] sm:$0xff]
    %v474 = vld [vmem:[#allocation2 + $0x338] sm:$0xff]
    %v475 = vld [vmem:[#allocation2 + $0x340] sm:$0xff]
    %v476 = vld [vmem:[#allocation2 + $0x348] sm:$0xff]
    %v477 = vld [vmem:[#allocation2 + $0x350] sm:$0xff]
    %v478 = vld [vmem:[#allocation2 + $0x358] sm:$0xff]
    %v479 = vld [vmem:[#allocation2 + $0x360] sm:$0xff]
    %v480 = vld [vmem:[#allocation2 + $0x368] sm:$0xff]
    %v481 = vld [vmem:[#allocation2 + $0x370] sm:$0xff]
    %v482 = vld [vmem:[#allocation2 + $0x378] sm:$0xff]
    %v483 = vld [vmem:[#allocation2 + $0x380] sm:$0xff]
    %v484 = vld [vmem:[#allocation2 + $0x388] sm:$0xff]
    %v485 = vld [vmem:[#allocation2 + $0x390] sm:$0xff]
    %v486 = vld [vmem:[#allocation2 + $0x398] sm:$0xff]
    %v487 = vld [vmem:[#allocation2 + $0x3a0] sm:$0xff]
    %v488 = vld [vmem:[#allocation2 + $0x3a8] sm:$0xff]
    %v489 = vld [vmem:[#allocation2 + $0x3b0] sm:$0xff]
    %v490 = vld [vmem:[#allocation2 + $0x3b8] sm:$0xff]
    %v491 = vld [vmem:[#allocation2 + $0x3c0] sm:$0xff]
    %v492 = vld [vmem:[#allocation2 + $0x3c8] sm:$0xff]
    %v493 = vld [vmem:[#allocation2 + $0x3d0] sm:$0xff]
    %v494 = vld [vmem:[#allocation2 + $0x3d8] sm:$0xff]
    %v495 = vld [vmem:[#allocation2 + $0x3e0] sm:$0xff]
    %v496 = vld [vmem:[#allocation2 + $0x3e8] sm:$0xff]
    %v497 = vld [vmem:[#allocation2 + $0x3f0] sm:$0xff]
    %v498 = vld [vmem:[#allocation2 + $0x3f8] sm:$0xff]
    %v499 = vld [vmem:[#allocation2 + $0x400] sm:$0xff]
    %v500 = vld [vmem:[#allocation2 + $0x408] sm:$0xff]
    %v501 = vld [vmem:[#allocation2 + $0x410] sm:$0xff]
    %v502 = vld [vmem:[#allocation2 + $0x418] sm:$0xff]
    %v503 = vld [vmem:[#allocation2 + $0x420] sm:$0xff]
    %v504 = vld [vmem:[#allocation2 + $0x428] sm:$0xff]
    %v505 = vld [vmem:[#allocation2 + $0x430] sm:$0xff]
    %v506 = vld [vmem:[#allocation2 + $0x438] sm:$0xff]
    %v507 = vld [vmem:[#allocation2 + $0x440] sm:$0xff]
    %v508 = vld [vmem:[#allocation2 + $0x448] sm:$0xff]
    %v509 = vld [vmem:[#allocation2 + $0x450] sm:$0xff]
    %v510 = vld [vmem:[#allocation2 + $0x458] sm:$0xff]
    %v511 = vld [vmem:[#allocation2 + $0x460] sm:$0xff]
    %v512 = vld [vmem:[#allocation2 + $0x468] sm:$0xff]
    %v513 = vld [vmem:[#allocation2 + $0x470] sm:$0xff]
    %v514 = vld [vmem:[#allocation2 + $0x478] sm:$0xff]
    %v515 = vld [vmem:[#allocation2 + $0x480] sm:$0xff]
    %v516 = vld [vmem:[#allocation2 + $0x488] sm:$0xff]
    %v517 = vld [vmem:[#allocation2 + $0x490] sm:$0xff]
    %v518 = vld [vmem:[#allocation2 + $0x498] sm:$0xff]
    %v519 = vld [vmem:[#allocation2 + $0x4a0] sm:$0xff]
    %v520 = vld [vmem:[#allocation2 + $0x4a8] sm:$0xff]
    %v521 = vld [vmem:[#allocation2 + $0x4b0] sm:$0xff]
    %v522 = vld [vmem:[#allocation2 + $0x4b8] sm:$0xff]
    %v523 = vld [vmem:[#allocation2 + $0x4c0] sm:$0xff]
    %v524 = vld [vmem:[#allocation2 + $0x4c8] sm:$0xff]
    %v525 = vld [vmem:[#allocation2 + $0x4d0] sm:$0xff]
    %v526 = vld [vmem:[#allocation2 + $0x4d8] sm:$0xff]
    %v527 = vld [vmem:[#allocation2 + $0x4e0] sm:$0xff]
    %v528 = vld [vmem:[#allocation2 + $0x4e8] sm:$0xff]
    %v529 = vld [vmem:[#allocation2 + $0x4f0] sm:$0xff]
    %v530 = vld [vmem:[#allocation2 + $0x4f8] sm:$0xff]
    %v531 = vld [vmem:[#allocation2 + $0x500] sm:$0xff]
    %v532 = vld [vmem:[#allocation2 + $0x508] sm:$0xff]
    %v533 = vld [vmem:[#allocation2 + $0x510] sm:$0xff]
    %v534 = vld [vmem:[#allocation2 + $0x518] sm:$0xff]
    %v535 = vld [vmem:[#allocation2 + $0x520] sm:$0xff]
    %v536 = vld [vmem:[#allocation2 + $0x528] sm:$0xff]
    %v537 = vld [vmem:[#allocation2 + $0x530] sm:$0xff]
    %v538 = vld [vmem:[#allocation2 + $0x538] sm:$0xff]
    %v539 = vld [vmem:[#allocation2 + $0x540] sm:$0xff]
    %v540 = vld [vmem:[#allocation2 + $0x548] sm:$0xff]
    %v541 = vld [vmem:[#allocation2 + $0x550] sm:$0xff]
    %v542 = vld [vmem:[#allocation2 + $0x558] sm:$0xff]
    %v543 = vld [vmem:[#allocation2 + $0x560] sm:$0xff]
    %v544 = vld [vmem:[#allocation2 + $0x568] sm:$0xff]
    %v545 = vld [vmem:[#allocation2 + $0x570] sm:$0xff]
    %v546 = vld [vmem:[#allocation2 + $0x578] sm:$0xff]
    %v547 = vld [vmem:[#allocation2 + $0x580] sm:$0xff]
    %v548 = vld [vmem:[#allocation2 + $0x588] sm:$0xff]
    %v549 = vld [vmem:[#allocation2 + $0x590] sm:$0xff]
    %v550 = vld [vmem:[#allocation2 + $0x598] sm:$0xff]
    %v551 = vld [vmem:[#allocation2 + $0x5a0] sm:$0xff]
    %v552 = vld [vmem:[#allocation2 + $0x5a8] sm:$0xff]
    %v553 = vld [vmem:[#allocation2 + $0x5b0] sm:$0xff]
    %v554 = vld [vmem:[#allocation2 + $0x5b8] sm:$0xff]
    %v555 = vld [vmem:[#allocation2 + $0x5c0] sm:$0xff]
    %v556 = vld [vmem:[#allocation2 + $0x5c8] sm:$0xff]
    %v557 = vld [vmem:[#allocation2 + $0x5d0] sm:$0xff]
    %v558 = vld [vmem:[#allocation2 + $0x5d8] sm:$0xff]
    %v559 = vld [vmem:[#allocation2 + $0x5e0] sm:$0xff]
    %v560 = vld [vmem:[#allocation2 + $0x5e8] sm:$0xff]
    %v561 = vld [vmem:[#allocation2 + $0x5f0] sm:$0xff]
    %v562 = vld [vmem:[#allocation2 + $0x5f8] sm:$0xff]
    %v563 = vld [vmem:[#allocation2 + $0x600] sm:$0xff]
    %v564 = vld [vmem:[#allocation2 + $0x608] sm:$0xff]
    %v565 = vld [vmem:[#allocation2 + $0x610] sm:$0xff]
    %v566 = vld [vmem:[#allocation2 + $0x618] sm:$0xff]
    %v567 = vld [vmem:[#allocation2 + $0x620] sm:$0xff]
    %v568 = vld [vmem:[#allocation2 + $0x628] sm:$0xff]
    %v569 = vld [vmem:[#allocation2 + $0x630] sm:$0xff]
    %v570 = vld [vmem:[#allocation2 + $0x638] sm:$0xff]
    %v571 = vld [vmem:[#allocation2 + $0x640] sm:$0xff]
    %v572 = vld [vmem:[#allocation2 + $0x648] sm:$0xff]
    %v573 = vld [vmem:[#allocation2 + $0x650] sm:$0xff]
    %v574 = vld [vmem:[#allocation2 + $0x658] sm:$0xff]
    %v575 = vld [vmem:[#allocation2 + $0x660] sm:$0xff]
    %v576 = vld [vmem:[#allocation2 + $0x668] sm:$0xff]
    %v577 = vld [vmem:[#allocation2 + $0x670] sm:$0xff]
    %v578 = vld [vmem:[#allocation2 + $0x678] sm:$0xff]
    %v579 = vld [vmem:[#allocation2 + $0x680] sm:$0xff]
    %v580 = vld [vmem:[#allocation2 + $0x688] sm:$0xff]
    %v581 = vld [vmem:[#allocation2 + $0x690] sm:$0xff]
    %v582 = vld [vmem:[#allocation2 + $0x698] sm:$0xff]
    %v583 = vld [vmem:[#allocation2 + $0x6a0] sm:$0xff]
    %v584 = vld [vmem:[#allocation2 + $0x6a8] sm:$0xff]
    %v585 = vld [vmem:[#allocation2 + $0x6b0] sm:$0xff]
    %v586 = vld [vmem:[#allocation2 + $0x6b8] sm:$0xff]
    %v587 = vld [vmem:[#allocation2 + $0x6c0] sm:$0xff]
    %v588 = vld [vmem:[#allocation2 + $0x6c8] sm:$0xff]
    %v589 = vld [vmem:[#allocation2 + $0x6d0] sm:$0xff]
    %v590 = vld [vmem:[#allocation2 + $0x6d8] sm:$0xff]
    %v591 = vld [vmem:[#allocation2 + $0x6e0] sm:$0xff]
    %v592 = vld [vmem:[#allocation2 + $0x6e8] sm:$0xff]
    %v593 = vld [vmem:[#allocation2 + $0x6f0] sm:$0xff]
    %v594 = vld [vmem:[#allocation2 + $0x6f8] sm:$0xff]
    %v595 = vld [vmem:[#allocation2 + $0x700] sm:$0xff]
    %v596 = vld [vmem:[#allocation2 + $0x708] sm:$0xff]
    %v597 = vld [vmem:[#allocation2 + $0x710] sm:$0xff]
    %v598 = vld [vmem:[#allocation2 + $0x718] sm:$0xff]
    %v599 = vld [vmem:[#allocation2 + $0x720] sm:$0xff]
    %v600 = vld [vmem:[#allocation2 + $0x728] sm:$0xff]
    %v601 = vld [vmem:[#allocation2 + $0x730] sm:$0xff]
    %v602 = vld [vmem:[#allocation2 + $0x738] sm:$0xff]
    %v603 = vld [vmem:[#allocation2 + $0x740] sm:$0xff]
    %v604 = vld [vmem:[#allocation2 + $0x748] sm:$0xff]
    %v605 = vld [vmem:[#allocation2 + $0x750] sm:$0xff]
    %v606 = vld [vmem:[#allocation2 + $0x758] sm:$0xff]
    %v607 = vld [vmem:[#allocation2 + $0x760] sm:$0xff]
    %v608 = vld [vmem:[#allocation2 + $0x768] sm:$0xff]
    %v609 = vld [vmem:[#allocation2 + $0x770] sm:$0xff]
    %v610 = vld [vmem:[#allocation2 + $0x778] sm:$0xff]
    %v611 = vld [vmem:[#allocation2 + $0x780] sm:$0xff]
    %v612 = vld [vmem:[#allocation2 + $0x788] sm:$0xff]
    %v613 = vld [vmem:[#allocation2 + $0x790] sm:$0xff]
    %v614 = vld [vmem:[#allocation2 + $0x798] sm:$0xff]
    %v615 = vld [vmem:[#allocation2 + $0x7a0] sm:$0xff]
    %v616 = vld [vmem:[#allocation2 + $0x7a8] sm:$0xff]
    %v617 = vld [vmem:[#allocation2 + $0x7b0] sm:$0xff]
    %v618 = vld [vmem:[#allocation2 + $0x7b8] sm:$0xff]
    %v619 = vld [vmem:[#allocation2 + $0x7c0] sm:$0xff]
    %v620 = vld [vmem:[#allocation2 + $0x7c8] sm:$0xff]
    %v621 = vld [vmem:[#allocation2 + $0x7d0] sm:$0xff]
    %v622 = vld [vmem:[#allocation2 + $0x7d8] sm:$0xff]
    %v623 = vld [vmem:[#allocation2 + $0x7e0] sm:$0xff]
    %v624 = vld [vmem:[#allocation2 + $0x7e8] sm:$0xff]
    %v625 = vld [vmem:[#allocation2 + $0x7f0] sm:$0xff]
    %v626 = vld [vmem:[#allocation2 + $0x7f8] sm:$0xff]
    %v627 = vld [vmem:[%s10] sm:$0xff]
    %v629 = vlaneseq
    %v630 = vshrl.u32 %v629, 7
    %v631 = vsub.s32 0, %v630
    %v632 = vrot.slane %v627, %v631
    %v633 = vlaneseq
    %v634 = vshrl.u32 %v633, 7
    %v635 = vsub.s32 1, %v634
    %v636 = vrot.slane %v627, %v635
    %v637 = vlaneseq
    %v638 = vshrl.u32 %v637, 7
    %v639 = vsub.s32 2, %v638
    %v640 = vrot.slane %v627, %v639
    %v641 = vlaneseq
    %v642 = vshrl.u32 %v641, 7
    %v643 = vsub.s32 3, %v642
    %v644 = vrot.slane %v627, %v643
    %v645 = vlaneseq
    %v646 = vshrl.u32 %v645, 7
    %v647 = vsub.s32 4, %v646
    %v648 = vrot.slane %v627, %v647
    %v649 = vlaneseq
    %v650 = vshrl.u32 %v649, 7
    %v651 = vsub.s32 5, %v650
    %v652 = vrot.slane %v627, %v651
    %v653 = vlaneseq
    %v654 = vshrl.u32 %v653, 7
    %v655 = vsub.s32 6, %v654
    %v656 = vrot.slane %v627, %v655
    %v657 = vlaneseq
    %v658 = vshrl.u32 %v657, 7
    %v659 = vsub.s32 7, %v658
    %v660 = vrot.slane %v627, %v659
    %669 = vmatprep.subr.bf16.mxu0 %v372
    %670 = vmatpush1.bf16.msra.mxu0 %v371
    %671 = vmatprep.subr.bf16.mxu0 %v380
    %672 = vmatpush1.bf16.msra.mxu0 %v379
    %673 = vmatprep.subr.bf16.mxu0 %v388
    %674 = vmatpush1.bf16.msra.mxu0 %v387
    %675 = vmatprep.subr.bf16.mxu0 %v396
    %676 = vmatpush1.bf16.msra.mxu0 %v395
    %677 = vmatprep.subr.bf16.mxu0 %v404
    %678 = vmatpush1.bf16.msra.mxu0 %v403
    %679 = vmatprep.subr.bf16.mxu0 %v412
    %680 = vmatpush1.bf16.msra.mxu0 %v411
    %681 = vmatprep.subr.bf16.mxu0 %v420
    %682 = vmatpush1.bf16.msra.mxu0 %v419
    %683 = vmatprep.subr.bf16.mxu0 %v428
    %684 = vmatpush1.bf16.msra.mxu0 %v427
    %685 = vmatprep.subr.bf16.mxu0 %v436
    %686 = vmatpush1.bf16.msra.mxu0 %v435
    %687 = vmatprep.subr.bf16.mxu0 %v444
    %688 = vmatpush1.bf16.msra.mxu0 %v443
    %689 = vmatprep.subr.bf16.mxu0 %v452
    %690 = vmatpush1.bf16.msra.mxu0 %v451
    %691 = vmatprep.subr.bf16.mxu0 %v460
    %692 = vmatpush1.bf16.msra.mxu0 %v459
    %693 = vmatprep.subr.bf16.mxu0 %v468
    %694 = vmatpush1.bf16.msra.mxu0 %v467
    %695 = vmatprep.subr.bf16.mxu0 %v476
    %696 = vmatpush1.bf16.msra.mxu0 %v475
    %697 = vmatprep.subr.bf16.mxu0 %v484
    %698 = vmatpush1.bf16.msra.mxu0 %v483
    %699 = vmatprep.subr.bf16.mxu0 %v492
    %700 = vmatpush1.bf16.msra.mxu0 %v491
    %701 = vmatprep.mubr.bf16.mxu0 %v368
    %702 = vmatmul.mubr.bf16.gmra.mrb[0].mxu0 %v367
    %v703 = vpop.f32.mrb[0].mxu0
    %v704 = vadd.f32 %v632, %v703
    %v705 = vpop.f32.mrb[0].mxu0
    %v706 = vadd.f32 %v636, %v705
    %v707 = vpop.f32.mrb[0].mxu0
    %v708 = vpop.f32.mrb[0].mxu0
    %709 = vdwg.mxu0
    %710 = vmatprep.subr.bf16.mxu0 %v500
    %711 = vmatpush1.bf16.msra.mxu0 %v499
    %712 = vmatprep.subr.bf16.mxu0 %v508
    %713 = vmatpush1.bf16.msra.mxu0 %v507
    %714 = vmatprep.subr.bf16.mxu0 %v516
    %715 = vmatpush1.bf16.msra.mxu0 %v515
    %716 = vmatprep.subr.bf16.mxu0 %v524
    %717 = vmatpush1.bf16.msra.mxu0 %v523
    %718 = vmatprep.subr.bf16.mxu0 %v532
    %719 = vmatpush1.bf16.msra.mxu0 %v531
    %720 = vmatprep.subr.bf16.mxu0 %v540
    %721 = vmatpush1.bf16.msra.mxu0 %v539
    %722 = vmatprep.subr.bf16.mxu0 %v548
    %723 = vmatpush1.bf16.msra.mxu0 %v547
    %724 = vmatprep.subr.bf16.mxu0 %v556
    %725 = vmatpush1.bf16.msra.mxu0 %v555
    %726 = vmatprep.subr.bf16.mxu0 %v564
    %727 = vmatpush1.bf16.msra.mxu0 %v563
    %728 = vmatprep.subr.bf16.mxu0 %v572
    %729 = vmatpush1.bf16.msra.mxu0 %v571
    %730 = vmatprep.subr.bf16.mxu0 %v580
    %731 = vmatpush1.bf16.msra.mxu0 %v579
    %732 = vmatprep.subr.bf16.mxu0 %v588
    %733 = vmatpush1.bf16.msra.mxu0 %v587
    %734 = vmatprep.subr.bf16.mxu0 %v596
    %735 = vmatpush1.bf16.msra.mxu0 %v595
    %736 = vmatprep.subr.bf16.mxu0 %v604
    %737 = vmatpush1.bf16.msra.mxu0 %v603
    %738 = vmatprep.subr.bf16.mxu0 %v612
    %739 = vmatpush1.bf16.msra.mxu0 %v611
    %740 = vmatprep.subr.bf16.mxu0 %v620
    %741 = vmatpush1.bf16.msra.mxu0 %v619
    %742 = vmatprep.mubr.bf16.mxu0 %v370
    %743 = vmatmul.mubr.bf16.gmra.mrb[0].mxu0 %v369
    %v744 = vpop.f32.mrb[0].mxu0
    %v745 = vadd.f32 %v704, %v744
    %v746 = vpop.f32.mrb[0].mxu0
    %v747 = vadd.f32 %v706, %v746
    %v748 = vpop.f32.mrb[0].mxu0
    %v749 = vpop.f32.mrb[0].mxu0
    %750 = vdwg.mxu0
    %751 = vmatprep.subr.bf16.mxu0 %v374
    %752 = vmatpush1.bf16.msra.mxu0 %v373
    %753 = vmatprep.subr.bf16.mxu0 %v382
    %754 = vmatpush1.bf16.msra.mxu0 %v381
    %755 = vmatprep.subr.bf16.mxu0 %v390
    %756 = vmatpush1.bf16.msra.mxu0 %v389
    %757 = vmatprep.subr.bf16.mxu0 %v398
    %758 = vmatpush1.bf16.msra.mxu0 %v397
    %759 = vmatprep.subr.bf16.mxu0 %v406
    %760 = vmatpush1.bf16.msra.mxu0 %v405
    %761 = vmatprep.subr.bf16.mxu0 %v414
    %762 = vmatpush1.bf16.msra.mxu0 %v413
    %763 = vmatprep.subr.bf16.mxu0 %v422
    %764 = vmatpush1.bf16.msra.mxu0 %v421
    %765 = vmatprep.subr.bf16.mxu0 %v430
    %766 = vmatpush1.bf16.msra.mxu0 %v429
    %767 = vmatprep.subr.bf16.mxu0 %v438
    %768 = vmatpush1.bf16.msra.mxu0 %v437
    %769 = vmatprep.subr.bf16.mxu0 %v446
    %770 = vmatpush1.bf16.msra.mxu0 %v445
    %771 = vmatprep.subr.bf16.mxu0 %v454
    %772 = vmatpush1.bf16.msra.mxu0 %v453
    %773 = vmatprep.subr.bf16.mxu0 %v462
    %774 = vmatpush1.bf16.msra.mxu0 %v461
    %775 = vmatprep.subr.bf16.mxu0 %v470
    %776 = vmatpush1.bf16.msra.mxu0 %v469
    %777 = vmatprep.subr.bf16.mxu0 %v478
    %778 = vmatpush1.bf16.msra.mxu0 %v477
    %779 = vmatprep.subr.bf16.mxu0 %v486
    %780 = vmatpush1.bf16.msra.mxu0 %v485
    %781 = vmatprep.subr.bf16.mxu0 %v494
    %782 = vmatpush1.bf16.msra.mxu0 %v493
    %783 = vmatprep.mubr.bf16.mxu0 %v368
    %784 = vmatmul.mubr.bf16.gmra.mrb[0].mxu0 %v367
    %v785 = vpop.f32.mrb[0].mxu0
    %v786 = vadd.f32 %v640, %v785
    %v787 = vpop.f32.mrb[0].mxu0
    %v788 = vadd.f32 %v644, %v787
    %v789 = vpop.f32.mrb[0].mxu0
    %v790 = vpop.f32.mrb[0].mxu0
    %791 = vdwg.mxu0
    %792 = vmatprep.subr.bf16.mxu0 %v502
    %793 = vmatpush1.bf16.msra.mxu0 %v501
    %794 = vmatprep.subr.bf16.mxu0 %v510
    %795 = vmatpush1.bf16.msra.mxu0 %v509
    %796 = vmatprep.subr.bf16.mxu0 %v518
    %797 = vmatpush1.bf16.msra.mxu0 %v517
    %798 = vmatprep.subr.bf16.mxu0 %v526
    %799 = vmatpush1.bf16.msra.mxu0 %v525
    %800 = vmatprep.subr.bf16.mxu0 %v534
    %801 = vmatpush1.bf16.msra.mxu0 %v533
    %802 = vmatprep.subr.bf16.mxu0 %v542
    %803 = vmatpush1.bf16.msra.mxu0 %v541
    %804 = vmatprep.subr.bf16.mxu0 %v550
    %805 = vmatpush1.bf16.msra.mxu0 %v549
    %806 = vmatprep.subr.bf16.mxu0 %v558
    %807 = vmatpush1.bf16.msra.mxu0 %v557
    %808 = vmatprep.subr.bf16.mxu0 %v566
    %809 = vmatpush1.bf16.msra.mxu0 %v565
    %810 = vmatprep.subr.bf16.mxu0 %v574
    %811 = vmatpush1.bf16.msra.mxu0 %v573
    %812 = vmatprep.subr.bf16.mxu0 %v582
    %813 = vmatpush1.bf16.msra.mxu0 %v581
    %814 = vmatprep.subr.bf16.mxu0 %v590
    %815 = vmatpush1.bf16.msra.mxu0 %v589
    %816 = vmatprep.subr.bf16.mxu0 %v598
    %817 = vmatpush1.bf16.msra.mxu0 %v597
    %818 = vmatprep.subr.bf16.mxu0 %v606
    %819 = vmatpush1.bf16.msra.mxu0 %v605
    %820 = vmatprep.subr.bf16.mxu0 %v614
    %821 = vmatpush1.bf16.msra.mxu0 %v613
    %822 = vmatprep.subr.bf16.mxu0 %v622
    %823 = vmatpush1.bf16.msra.mxu0 %v621
    %824 = vmatprep.mubr.bf16.mxu0 %v370
    %825 = vmatmul.mubr.bf16.gmra.mrb[0].mxu0 %v369
    %v826 = vpop.f32.mrb[0].mxu0
    %v827 = vadd.f32 %v786, %v826
    %v828 = vpop.f32.mrb[0].mxu0
    %v829 = vadd.f32 %v788, %v828
    %v830 = vpop.f32.mrb[0].mxu0
    %v831 = vpop.f32.mrb[0].mxu0
    %832 = vdwg.mxu0
    %833 = vmatprep.subr.bf16.mxu0 %v376
    %834 = vmatpush1.bf16.msra.mxu0 %v375
    %835 = vmatprep.subr.bf16.mxu0 %v384
    %836 = vmatpush1.bf16.msra.mxu0 %v383
    %837 = vmatprep.subr.bf16.mxu0 %v392
    %838 = vmatpush1.bf16.msra.mxu0 %v391
    %839 = vmatprep.subr.bf16.mxu0 %v400
    %840 = vmatpush1.bf16.msra.mxu0 %v399
    %841 = vmatprep.subr.bf16.mxu0 %v408
    %842 = vmatpush1.bf16.msra.mxu0 %v407
    %843 = vmatprep.subr.bf16.mxu0 %v416
    %844 = vmatpush1.bf16.msra.mxu0 %v415
    %845 = vmatprep.subr.bf16.mxu0 %v424
    %846 = vmatpush1.bf16.msra.mxu0 %v423
    %847 = vmatprep.subr.bf16.mxu0 %v432
    %848 = vmatpush1.bf16.msra.mxu0 %v431
    %849 = vmatprep.subr.bf16.mxu0 %v440
    %850 = vmatpush1.bf16.msra.mxu0 %v439
    %851 = vmatprep.subr.bf16.mxu0 %v448
    %852 = vmatpush1.bf16.msra.mxu0 %v447
    %853 = vmatprep.subr.bf16.mxu0 %v456
    %854 = vmatpush1.bf16.msra.mxu0 %v455
    %855 = vmatprep.subr.bf16.mxu0 %v464
    %856 = vmatpush1.bf16.msra.mxu0 %v463
    %857 = vmatprep.subr.bf16.mxu0 %v472
    %858 = vmatpush1.bf16.msra.mxu0 %v471
    %859 = vmatprep.subr.bf16.mxu0 %v480
    %860 = vmatpush1.bf16.msra.mxu0 %v479
    %861 = vmatprep.subr.bf16.mxu0 %v488
    %862 = vmatpush1.bf16.msra.mxu0 %v487
    %863 = vmatprep.subr.bf16.mxu0 %v496
    %864 = vmatpush1.bf16.msra.mxu0 %v495
    %865 = vmatprep.mubr.bf16.mxu0 %v368
    %866 = vmatmul.mubr.bf16.gmra.mrb[0].mxu0 %v367
    %v867 = vpop.f32.mrb[0].mxu0
    %v868 = vadd.f32 %v648, %v867
    %v869 = vpop.f32.mrb[0].mxu0
    %v870 = vadd.f32 %v652, %v869
    %v871 = vpop.f32.mrb[0].mxu0
    %v872 = vpop.f32.mrb[0].mxu0
    %873 = vdwg.mxu0
    %874 = vmatprep.subr.bf16.mxu0 %v504
    %875 = vmatpush1.bf16.msra.mxu0 %v503
    %876 = vmatprep.subr.bf16.mxu0 %v512
    %877 = vmatpush1.bf16.msra.mxu0 %v511
    %878 = vmatprep.subr.bf16.mxu0 %v520
    %879 = vmatpush1.bf16.msra.mxu0 %v519
    %880 = vmatprep.subr.bf16.mxu0 %v528
    %881 = vmatpush1.bf16.msra.mxu0 %v527
    %882 = vmatprep.subr.bf16.mxu0 %v536
    %883 = vmatpush1.bf16.msra.mxu0 %v535
    %884 = vmatprep.subr.bf16.mxu0 %v544
    %885 = vmatpush1.bf16.msra.mxu0 %v543
    %886 = vmatprep.subr.bf16.mxu0 %v552
    %887 = vmatpush1.bf16.msra.mxu0 %v551
    %888 = vmatprep.subr.bf16.mxu0 %v560
    %889 = vmatpush1.bf16.msra.mxu0 %v559
    %890 = vmatprep.subr.bf16.mxu0 %v568
    %891 = vmatpush1.bf16.msra.mxu0 %v567
    %892 = vmatprep.subr.bf16.mxu0 %v576
    %893 = vmatpush1.bf16.msra.mxu0 %v575
    %894 = vmatprep.subr.bf16.mxu0 %v584
    %895 = vmatpush1.bf16.msra.mxu0 %v583
    %896 = vmatprep.subr.bf16.mxu0 %v592
    %897 = vmatpush1.bf16.msra.mxu0 %v591
    %898 = vmatprep.subr.bf16.mxu0 %v600
    %899 = vmatpush1.bf16.msra.mxu0 %v599
    %900 = vmatprep.subr.bf16.mxu0 %v608
    %901 = vmatpush1.bf16.msra.mxu0 %v607
    %902 = vmatprep.subr.bf16.mxu0 %v616
    %903 = vmatpush1.bf16.msra.mxu0 %v615
    %904 = vmatprep.subr.bf16.mxu0 %v624
    %905 = vmatpush1.bf16.msra.mxu0 %v623
    %906 = vmatprep.mubr.bf16.mxu0 %v370
    %907 = vmatmul.mubr.bf16.gmra.mrb[0].mxu0 %v369
    %v908 = vpop.f32.mrb[0].mxu0
    %v909 = vadd.f32 %v868, %v908
    %v910 = vpop.f32.mrb[0].mxu0
    %v911 = vadd.f32 %v870, %v910
    %v912 = vpop.f32.mrb[0].mxu0
    %v913 = vpop.f32.mrb[0].mxu0
    %914 = vdwg.mxu0
    %915 = vmatprep.subr.bf16.mxu0 %v378
    %916 = vmatpush1.bf16.msra.mxu0 %v377
    %917 = vmatprep.subr.bf16.mxu0 %v386
    %918 = vmatpush1.bf16.msra.mxu0 %v385
    %919 = vmatprep.subr.bf16.mxu0 %v394
    %920 = vmatpush1.bf16.msra.mxu0 %v393
    %921 = vmatprep.subr.bf16.mxu0 %v402
    %922 = vmatpush1.bf16.msra.mxu0 %v401
    %923 = vmatprep.subr.bf16.mxu0 %v410
    %924 = vmatpush1.bf16.msra.mxu0 %v409
    %925 = vmatprep.subr.bf16.mxu0 %v418
    %926 = vmatpush1.bf16.msra.mxu0 %v417
    %927 = vmatprep.subr.bf16.mxu0 %v426
    %928 = vmatpush1.bf16.msra.mxu0 %v425
    %929 = vmatprep.subr.bf16.mxu0 %v434
    %930 = vmatpush1.bf16.msra.mxu0 %v433
    %931 = vmatprep.subr.bf16.mxu0 %v442
    %932 = vmatpush1.bf16.msra.mxu0 %v441
    %933 = vmatprep.subr.bf16.mxu0 %v450
    %934 = vmatpush1.bf16.msra.mxu0 %v449
    %935 = vmatprep.subr.bf16.mxu0 %v458
    %936 = vmatpush1.bf16.msra.mxu0 %v457
    %937 = vmatprep.subr.bf16.mxu0 %v466
    %938 = vmatpush1.bf16.msra.mxu0 %v465
    %939 = vmatprep.subr.bf16.mxu0 %v474
    %940 = vmatpush1.bf16.msra.mxu0 %v473
    %941 = vmatprep.subr.bf16.mxu0 %v482
    %942 = vmatpush1.bf16.msra.mxu0 %v481
    %943 = vmatprep.subr.bf16.mxu0 %v490
    %944 = vmatpush1.bf16.msra.mxu0 %v489
    %945 = vmatprep.subr.bf16.mxu0 %v498
    %946 = vmatpush1.bf16.msra.mxu0 %v497
    %947 = vmatprep.mubr.bf16.mxu0 %v368
    %948 = vmatmul.mubr.bf16.gmra.mrb[0].mxu0 %v367
    %v949 = vpop.f32.mrb[0].mxu0
    %v950 = vadd.f32 %v656, %v949
    %v951 = vpop.f32.mrb[0].mxu0
    %v952 = vadd.f32 %v660, %v951
    %v953 = vpop.f32.mrb[0].mxu0
    %v954 = vpop.f32.mrb[0].mxu0
    %955 = vdwg.mxu0
    %956 = vmatprep.subr.bf16.mxu0 %v506
    %957 = vmatpush1.bf16.msra.mxu0 %v505
    %958 = vmatprep.subr.bf16.mxu0 %v514
    %959 = vmatpush1.bf16.msra.mxu0 %v513
    %960 = vmatprep.subr.bf16.mxu0 %v522
    %961 = vmatpush1.bf16.msra.mxu0 %v521
    %962 = vmatprep.subr.bf16.mxu0 %v530
    %963 = vmatpush1.bf16.msra.mxu0 %v529
    %964 = vmatprep.subr.bf16.mxu0 %v538
    %965 = vmatpush1.bf16.msra.mxu0 %v537
    %966 = vmatprep.subr.bf16.mxu0 %v546
    %967 = vmatpush1.bf16.msra.mxu0 %v545
    %968 = vmatprep.subr.bf16.mxu0 %v554
    %969 = vmatpush1.bf16.msra.mxu0 %v553
    %970 = vmatprep.subr.bf16.mxu0 %v562
    %971 = vmatpush1.bf16.msra.mxu0 %v561
    %972 = vmatprep.subr.bf16.mxu0 %v570
    %973 = vmatpush1.bf16.msra.mxu0 %v569
    %974 = vmatprep.subr.bf16.mxu0 %v578
    %975 = vmatpush1.bf16.msra.mxu0 %v577
    %976 = vmatprep.subr.bf16.mxu0 %v586
    %977 = vmatpush1.bf16.msra.mxu0 %v585
    %978 = vmatprep.subr.bf16.mxu0 %v594
    %979 = vmatpush1.bf16.msra.mxu0 %v593
    %980 = vmatprep.subr.bf16.mxu0 %v602
    %981 = vmatpush1.bf16.msra.mxu0 %v601
    %982 = vmatprep.subr.bf16.mxu0 %v610
    %983 = vmatpush1.bf16.msra.mxu0 %v609
    %984 = vmatprep.subr.bf16.mxu0 %v618
    %985 = vmatpush1.bf16.msra.mxu0 %v617
    %986 = vmatprep.subr.bf16.mxu0 %v626
    %987 = vmatpush1.bf16.msra.mxu0 %v625
    %988 = vmatprep.mubr.bf16.mxu0 %v370
    %989 = vmatmul.mubr.bf16.gmra.mrb[0].mxu0 %v369
    %v990 = vpop.f32.mrb[0].mxu0
    %v991 = vadd.f32 %v950, %v990
    %v992 = vpop.f32.mrb[0].mxu0
    %v993 = vadd.f32 %v952, %v992
    %v994 = vpop.f32.mrb[0].mxu0
    %v995 = vpop.f32.mrb[0].mxu0
    %996 = vdwg.mxu0
    %v997 = vmax.f32 %v745, 0.0
    %v998 = vmax.f32 %v747, 0.0
    %v999 = vmax.f32 %v827, 0.0
    %v1000 = vmax.f32 %v829, 0.0
    %v1001 = vmax.f32 %v909, 0.0
    %v1002 = vmax.f32 %v911, 0.0
    %v1003 = vmax.f32 %v991, 0.0
    %v1004 = vmax.f32 %v993, 0.0
    %s1005 = smul.u32 4, 128
    %s1006 = smul.u32 %s1005, 4
    %s1007 = sshll.u32 %s1006, 4
    %1008 = dma.done %s102, %s1007
    %v1009 = vpack.c.bf16 %v997, %v997
    %v1010 = vpack.c.bf16 %v998, %v998
    %v1011 = vpack.c.bf16 %v999, %v999
    %v1012 = vpack.c.bf16 %v1000, %v1000
    %v1013 = vpack.c.bf16 %v1001, %v1001
    %v1014 = vpack.c.bf16 %v1002, %v1002
    %v1015 = vpack.c.bf16 %v1003, %v1003
    %v1016 = vpack.c.bf16 %v1004, %v1004
    %v1017 = vld [vmem:[#allocation3] sm:$0xff]
    %v1018 = vld [vmem:[#allocation3 + $0x8] sm:$0xff]
    %v1019 = vld [vmem:[#allocation3 + $0x10] sm:$0xff]
    %v1020 = vld [vmem:[#allocation3 + $0x18] sm:$0xff]
    %v1021 = vld [vmem:[#allocation3 + $0x20] sm:$0xff]
    %v1022 = vld [vmem:[#allocation3 + $0x28] sm:$0xff]
    %v1023 = vld [vmem:[#allocation3 + $0x30] sm:$0xff]
    %v1024 = vld [vmem:[#allocation3 + $0x38] sm:$0xff]
    %v1025 = vld [vmem:[#allocation3 + $0x40] sm:$0xff]
    %v1026 = vld [vmem:[#allocation3 + $0x48] sm:$0xff]
    %v1027 = vld [vmem:[#allocation3 + $0x50] sm:$0xff]
    %v1028 = vld [vmem:[#allocation3 + $0x58] sm:$0xff]
    %v1029 = vld [vmem:[#allocation3 + $0x60] sm:$0xff]
    %v1030 = vld [vmem:[#allocation3 + $0x68] sm:$0xff]
    %v1031 = vld [vmem:[#allocation3 + $0x70] sm:$0xff]
    %v1032 = vld [vmem:[#allocation3 + $0x78] sm:$0xff]
    %v1033 = vld [vmem:[#allocation3 + $0x80] sm:$0xff]
    %v1034 = vld [vmem:[#allocation3 + $0x88] sm:$0xff]
    %v1035 = vld [vmem:[#allocation3 + $0x90] sm:$0xff]
    %v1036 = vld [vmem:[#allocation3 + $0x98] sm:$0xff]
    %v1037 = vld [vmem:[#allocation3 + $0xa0] sm:$0xff]
    %v1038 = vld [vmem:[#allocation3 + $0xa8] sm:$0xff]
    %v1039 = vld [vmem:[#allocation3 + $0xb0] sm:$0xff]
    %v1040 = vld [vmem:[#allocation3 + $0xb8] sm:$0xff]
    %v1041 = vld [vmem:[#allocation3 + $0xc0] sm:$0xff]
    %v1042 = vld [vmem:[#allocation3 + $0xc8] sm:$0xff]
    %v1043 = vld [vmem:[#allocation3 + $0xd0] sm:$0xff]
    %v1044 = vld [vmem:[#allocation3 + $0xd8] sm:$0xff]
    %v1045 = vld [vmem:[#allocation3 + $0xe0] sm:$0xff]
    %v1046 = vld [vmem:[#allocation3 + $0xe8] sm:$0xff]
    %v1047 = vld [vmem:[#allocation3 + $0xf0] sm:$0xff]
    %v1048 = vld [vmem:[#allocation3 + $0xf8] sm:$0xff]
    %v1049 = vld [vmem:[#allocation3 + $0x100] sm:$0xff]
    %v1050 = vld [vmem:[#allocation3 + $0x108] sm:$0xff]
    %v1051 = vld [vmem:[#allocation3 + $0x110] sm:$0xff]
    %v1052 = vld [vmem:[#allocation3 + $0x118] sm:$0xff]
    %v1053 = vld [vmem:[#allocation3 + $0x120] sm:$0xff]
    %v1054 = vld [vmem:[#allocation3 + $0x128] sm:$0xff]
    %v1055 = vld [vmem:[#allocation3 + $0x130] sm:$0xff]
    %v1056 = vld [vmem:[#allocation3 + $0x138] sm:$0xff]
    %v1057 = vld [vmem:[#allocation3 + $0x140] sm:$0xff]
    %v1058 = vld [vmem:[#allocation3 + $0x148] sm:$0xff]
    %v1059 = vld [vmem:[#allocation3 + $0x150] sm:$0xff]
    %v1060 = vld [vmem:[#allocation3 + $0x158] sm:$0xff]
    %v1061 = vld [vmem:[#allocation3 + $0x160] sm:$0xff]
    %v1062 = vld [vmem:[#allocation3 + $0x168] sm:$0xff]
    %v1063 = vld [vmem:[#allocation3 + $0x170] sm:$0xff]
    %v1064 = vld [vmem:[#allocation3 + $0x178] sm:$0xff]
    %v1065 = vld [vmem:[#allocation3 + $0x180] sm:$0xff]
    %v1066 = vld [vmem:[#allocation3 + $0x188] sm:$0xff]
    %v1067 = vld [vmem:[#allocation3 + $0x190] sm:$0xff]
    %v1068 = vld [vmem:[#allocation3 + $0x198] sm:$0xff]
    %v1069 = vld [vmem:[#allocation3 + $0x1a0] sm:$0xff]
    %v1070 = vld [vmem:[#allocation3 + $0x1a8] sm:$0xff]
    %v1071 = vld [vmem:[#allocation3 + $0x1b0] sm:$0xff]
    %v1072 = vld [vmem:[#allocation3 + $0x1b8] sm:$0xff]
    %v1073 = vld [vmem:[#allocation3 + $0x1c0] sm:$0xff]
    %v1074 = vld [vmem:[#allocation3 + $0x1c8] sm:$0xff]
    %v1075 = vld [vmem:[#allocation3 + $0x1d0] sm:$0xff]
    %v1076 = vld [vmem:[#allocation3 + $0x1d8] sm:$0xff]
    %v1077 = vld [vmem:[#allocation3 + $0x1e0] sm:$0xff]
    %v1078 = vld [vmem:[#allocation3 + $0x1e8] sm:$0xff]
    %v1079 = vld [vmem:[#allocation3 + $0x1f0] sm:$0xff]
    %v1080 = vld [vmem:[#allocation3 + $0x1f8] sm:$0xff]
    %v1081 = vld [vmem:[#allocation3 + $0x200] sm:$0xff]
    %v1082 = vld [vmem:[#allocation3 + $0x208] sm:$0xff]
    %v1083 = vld [vmem:[#allocation3 + $0x210] sm:$0xff]
    %v1084 = vld [vmem:[#allocation3 + $0x218] sm:$0xff]
    %v1085 = vld [vmem:[#allocation3 + $0x220] sm:$0xff]
    %v1086 = vld [vmem:[#allocation3 + $0x228] sm:$0xff]
    %v1087 = vld [vmem:[#allocation3 + $0x230] sm:$0xff]
    %v1088 = vld [vmem:[#allocation3 + $0x238] sm:$0xff]
    %v1089 = vld [vmem:[#allocation3 + $0x240] sm:$0xff]
    %v1090 = vld [vmem:[#allocation3 + $0x248] sm:$0xff]
    %v1091 = vld [vmem:[#allocation3 + $0x250] sm:$0xff]
    %v1092 = vld [vmem:[#allocation3 + $0x258] sm:$0xff]
    %v1093 = vld [vmem:[#allocation3 + $0x260] sm:$0xff]
    %v1094 = vld [vmem:[#allocation3 + $0x268] sm:$0xff]
    %v1095 = vld [vmem:[#allocation3 + $0x270] sm:$0xff]
    %v1096 = vld [vmem:[#allocation3 + $0x278] sm:$0xff]
    %v1097 = vld [vmem:[#allocation3 + $0x280] sm:$0xff]
    %v1098 = vld [vmem:[#allocation3 + $0x288] sm:$0xff]
    %v1099 = vld [vmem:[#allocation3 + $0x290] sm:$0xff]
    %v1100 = vld [vmem:[#allocation3 + $0x298] sm:$0xff]
    %v1101 = vld [vmem:[#allocation3 + $0x2a0] sm:$0xff]
    %v1102 = vld [vmem:[#allocation3 + $0x2a8] sm:$0xff]
    %v1103 = vld [vmem:[#allocation3 + $0x2b0] sm:$0xff]
    %v1104 = vld [vmem:[#allocation3 + $0x2b8] sm:$0xff]
    %v1105 = vld [vmem:[#allocation3 + $0x2c0] sm:$0xff]
    %v1106 = vld [vmem:[#allocation3 + $0x2c8] sm:$0xff]
    %v1107 = vld [vmem:[#allocation3 + $0x2d0] sm:$0xff]
    %v1108 = vld [vmem:[#allocation3 + $0x2d8] sm:$0xff]
    %v1109 = vld [vmem:[#allocation3 + $0x2e0] sm:$0xff]
    %v1110 = vld [vmem:[#allocation3 + $0x2e8] sm:$0xff]
    %v1111 = vld [vmem:[#allocation3 + $0x2f0] sm:$0xff]
    %v1112 = vld [vmem:[#allocation3 + $0x2f8] sm:$0xff]
    %v1113 = vld [vmem:[#allocation3 + $0x300] sm:$0xff]
    %v1114 = vld [vmem:[#allocation3 + $0x308] sm:$0xff]
    %v1115 = vld [vmem:[#allocation3 + $0x310] sm:$0xff]
    %v1116 = vld [vmem:[#allocation3 + $0x318] sm:$0xff]
    %v1117 = vld [vmem:[#allocation3 + $0x320] sm:$0xff]
    %v1118 = vld [vmem:[#allocation3 + $0x328] sm:$0xff]
    %v1119 = vld [vmem:[#allocation3 + $0x330] sm:$0xff]
    %v1120 = vld [vmem:[#allocation3 + $0x338] sm:$0xff]
    %v1121 = vld [vmem:[#allocation3 + $0x340] sm:$0xff]
    %v1122 = vld [vmem:[#allocation3 + $0x348] sm:$0xff]
    %v1123 = vld [vmem:[#allocation3 + $0x350] sm:$0xff]
    %v1124 = vld [vmem:[#allocation3 + $0x358] sm:$0xff]
    %v1125 = vld [vmem:[#allocation3 + $0x360] sm:$0xff]
    %v1126 = vld [vmem:[#allocation3 + $0x368] sm:$0xff]
    %v1127 = vld [vmem:[#allocation3 + $0x370] sm:$0xff]
    %v1128 = vld [vmem:[#allocation3 + $0x378] sm:$0xff]
    %v1129 = vld [vmem:[#allocation3 + $0x380] sm:$0xff]
    %v1130 = vld [vmem:[#allocation3 + $0x388] sm:$0xff]
    %v1131 = vld [vmem:[#allocation3 + $0x390] sm:$0xff]
    %v1132 = vld [vmem:[#allocation3 + $0x398] sm:$0xff]
    %v1133 = vld [vmem:[#allocation3 + $0x3a0] sm:$0xff]
    %v1134 = vld [vmem:[#allocation3 + $0x3a8] sm:$0xff]
    %v1135 = vld [vmem:[#allocation3 + $0x3b0] sm:$0xff]
    %v1136 = vld [vmem:[#allocation3 + $0x3b8] sm:$0xff]
    %v1137 = vld [vmem:[#allocation3 + $0x3c0] sm:$0xff]
    %v1138 = vld [vmem:[#allocation3 + $0x3c8] sm:$0xff]
    %v1139 = vld [vmem:[#allocation3 + $0x3d0] sm:$0xff]
    %v1140 = vld [vmem:[#allocation3 + $0x3d8] sm:$0xff]
    %v1141 = vld [vmem:[#allocation3 + $0x3e0] sm:$0xff]
    %v1142 = vld [vmem:[#allocation3 + $0x3e8] sm:$0xff]
    %v1143 = vld [vmem:[#allocation3 + $0x3f0] sm:$0xff]
    %v1144 = vld [vmem:[#allocation3 + $0x3f8] sm:$0xff]
    %v1145 = vld [vmem:[#allocation3 + $0x400] sm:$0xff]
    %v1146 = vld [vmem:[#allocation3 + $0x408] sm:$0xff]
    %v1147 = vld [vmem:[#allocation3 + $0x410] sm:$0xff]
    %v1148 = vld [vmem:[#allocation3 + $0x418] sm:$0xff]
    %v1149 = vld [vmem:[#allocation3 + $0x420] sm:$0xff]
    %v1150 = vld [vmem:[#allocation3 + $0x428] sm:$0xff]
    %v1151 = vld [vmem:[#allocation3 + $0x430] sm:$0xff]
    %v1152 = vld [vmem:[#allocation3 + $0x438] sm:$0xff]
    %v1153 = vld [vmem:[#allocation3 + $0x440] sm:$0xff]
    %v1154 = vld [vmem:[#allocation3 + $0x448] sm:$0xff]
    %v1155 = vld [vmem:[#allocation3 + $0x450] sm:$0xff]
    %v1156 = vld [vmem:[#allocation3 + $0x458] sm:$0xff]
    %v1157 = vld [vmem:[#allocation3 + $0x460] sm:$0xff]
    %v1158 = vld [vmem:[#allocation3 + $0x468] sm:$0xff]
    %v1159 = vld [vmem:[#allocation3 + $0x470] sm:$0xff]
    %v1160 = vld [vmem:[#allocation3 + $0x478] sm:$0xff]
    %v1161 = vld [vmem:[#allocation3 + $0x480] sm:$0xff]
    %v1162 = vld [vmem:[#allocation3 + $0x488] sm:$0xff]
    %v1163 = vld [vmem:[#allocation3 + $0x490] sm:$0xff]
    %v1164 = vld [vmem:[#allocation3 + $0x498] sm:$0xff]
    %v1165 = vld [vmem:[#allocation3 + $0x4a0] sm:$0xff]
    %v1166 = vld [vmem:[#allocation3 + $0x4a8] sm:$0xff]
    %v1167 = vld [vmem:[#allocation3 + $0x4b0] sm:$0xff]
    %v1168 = vld [vmem:[#allocation3 + $0x4b8] sm:$0xff]
    %v1169 = vld [vmem:[#allocation3 + $0x4c0] sm:$0xff]
    %v1170 = vld [vmem:[#allocation3 + $0x4c8] sm:$0xff]
    %v1171 = vld [vmem:[#allocation3 + $0x4d0] sm:$0xff]
    %v1172 = vld [vmem:[#allocation3 + $0x4d8] sm:$0xff]
    %v1173 = vld [vmem:[#allocation3 + $0x4e0] sm:$0xff]
    %v1174 = vld [vmem:[#allocation3 + $0x4e8] sm:$0xff]
    %v1175 = vld [vmem:[#allocation3 + $0x4f0] sm:$0xff]
    %v1176 = vld [vmem:[#allocation3 + $0x4f8] sm:$0xff]
    %v1177 = vld [vmem:[#allocation3 + $0x500] sm:$0xff]
    %v1178 = vld [vmem:[#allocation3 + $0x508] sm:$0xff]
    %v1179 = vld [vmem:[#allocation3 + $0x510] sm:$0xff]
    %v1180 = vld [vmem:[#allocation3 + $0x518] sm:$0xff]
    %v1181 = vld [vmem:[#allocation3 + $0x520] sm:$0xff]
    %v1182 = vld [vmem:[#allocation3 + $0x528] sm:$0xff]
    %v1183 = vld [vmem:[#allocation3 + $0x530] sm:$0xff]
    %v1184 = vld [vmem:[#allocation3 + $0x538] sm:$0xff]
    %v1185 = vld [vmem:[#allocation3 + $0x540] sm:$0xff]
    %v1186 = vld [vmem:[#allocation3 + $0x548] sm:$0xff]
    %v1187 = vld [vmem:[#allocation3 + $0x550] sm:$0xff]
    %v1188 = vld [vmem:[#allocation3 + $0x558] sm:$0xff]
    %v1189 = vld [vmem:[#allocation3 + $0x560] sm:$0xff]
    %v1190 = vld [vmem:[#allocation3 + $0x568] sm:$0xff]
    %v1191 = vld [vmem:[#allocation3 + $0x570] sm:$0xff]
    %v1192 = vld [vmem:[#allocation3 + $0x578] sm:$0xff]
    %v1193 = vld [vmem:[#allocation3 + $0x580] sm:$0xff]
    %v1194 = vld [vmem:[#allocation3 + $0x588] sm:$0xff]
    %v1195 = vld [vmem:[#allocation3 + $0x590] sm:$0xff]
    %v1196 = vld [vmem:[#allocation3 + $0x598] sm:$0xff]
    %v1197 = vld [vmem:[#allocation3 + $0x5a0] sm:$0xff]
    %v1198 = vld [vmem:[#allocation3 + $0x5a8] sm:$0xff]
    %v1199 = vld [vmem:[#allocation3 + $0x5b0] sm:$0xff]
    %v1200 = vld [vmem:[#allocation3 + $0x5b8] sm:$0xff]
    %v1201 = vld [vmem:[#allocation3 + $0x5c0] sm:$0xff]
    %v1202 = vld [vmem:[#allocation3 + $0x5c8] sm:$0xff]
    %v1203 = vld [vmem:[#allocation3 + $0x5d0] sm:$0xff]
    %v1204 = vld [vmem:[#allocation3 + $0x5d8] sm:$0xff]
    %v1205 = vld [vmem:[#allocation3 + $0x5e0] sm:$0xff]
    %v1206 = vld [vmem:[#allocation3 + $0x5e8] sm:$0xff]
    %v1207 = vld [vmem:[#allocation3 + $0x5f0] sm:$0xff]
    %v1208 = vld [vmem:[#allocation3 + $0x5f8] sm:$0xff]
    %v1209 = vld [vmem:[#allocation3 + $0x600] sm:$0xff]
    %v1210 = vld [vmem:[#allocation3 + $0x608] sm:$0xff]
    %v1211 = vld [vmem:[#allocation3 + $0x610] sm:$0xff]
    %v1212 = vld [vmem:[#allocation3 + $0x618] sm:$0xff]
    %v1213 = vld [vmem:[#allocation3 + $0x620] sm:$0xff]
    %v1214 = vld [vmem:[#allocation3 + $0x628] sm:$0xff]
    %v1215 = vld [vmem:[#allocation3 + $0x630] sm:$0xff]
    %v1216 = vld [vmem:[#allocation3 + $0x638] sm:$0xff]
    %v1217 = vld [vmem:[#allocation3 + $0x640] sm:$0xff]
    %v1218 = vld [vmem:[#allocation3 + $0x648] sm:$0xff]
    %v1219 = vld [vmem:[#allocation3 + $0x650] sm:$0xff]
    %v1220 = vld [vmem:[#allocation3 + $0x658] sm:$0xff]
    %v1221 = vld [vmem:[#allocation3 + $0x660] sm:$0xff]
    %v1222 = vld [vmem:[#allocation3 + $0x668] sm:$0xff]
    %v1223 = vld [vmem:[#allocation3 + $0x670] sm:$0xff]
    %v1224 = vld [vmem:[#allocation3 + $0x678] sm:$0xff]
    %v1225 = vld [vmem:[#allocation3 + $0x680] sm:$0xff]
    %v1226 = vld [vmem:[#allocation3 + $0x688] sm:$0xff]
    %v1227 = vld [vmem:[#allocation3 + $0x690] sm:$0xff]
    %v1228 = vld [vmem:[#allocation3 + $0x698] sm:$0xff]
    %v1229 = vld [vmem:[#allocation3 + $0x6a0] sm:$0xff]
    %v1230 = vld [vmem:[#allocation3 + $0x6a8] sm:$0xff]
    %v1231 = vld [vmem:[#allocation3 + $0x6b0] sm:$0xff]
    %v1232 = vld [vmem:[#allocation3 + $0x6b8] sm:$0xff]
    %v1233 = vld [vmem:[#allocation3 + $0x6c0] sm:$0xff]
    %v1234 = vld [vmem:[#allocation3 + $0x6c8] sm:$0xff]
    %v1235 = vld [vmem:[#allocation3 + $0x6d0] sm:$0xff]
    %v1236 = vld [vmem:[#allocation3 + $0x6d8] sm:$0xff]
    %v1237 = vld [vmem:[#allocation3 + $0x6e0] sm:$0xff]
    %v1238 = vld [vmem:[#allocation3 + $0x6e8] sm:$0xff]
    %v1239 = vld [vmem:[#allocation3 + $0x6f0] sm:$0xff]
    %v1240 = vld [vmem:[#allocation3 + $0x6f8] sm:$0xff]
    %v1241 = vld [vmem:[#allocation3 + $0x700] sm:$0xff]
    %v1242 = vld [vmem:[#allocation3 + $0x708] sm:$0xff]
    %v1243 = vld [vmem:[#allocation3 + $0x710] sm:$0xff]
    %v1244 = vld [vmem:[#allocation3 + $0x718] sm:$0xff]
    %v1245 = vld [vmem:[#allocation3 + $0x720] sm:$0xff]
    %v1246 = vld [vmem:[#allocation3 + $0x728] sm:$0xff]
    %v1247 = vld [vmem:[#allocation3 + $0x730] sm:$0xff]
    %v1248 = vld [vmem:[#allocation3 + $0x738] sm:$0xff]
    %v1249 = vld [vmem:[#allocation3 + $0x740] sm:$0xff]
    %v1250 = vld [vmem:[#allocation3 + $0x748] sm:$0xff]
    %v1251 = vld [vmem:[#allocation3 + $0x750] sm:$0xff]
    %v1252 = vld [vmem:[#allocation3 + $0x758] sm:$0xff]
    %v1253 = vld [vmem:[#allocation3 + $0x760] sm:$0xff]
    %v1254 = vld [vmem:[#allocation3 + $0x768] sm:$0xff]
    %v1255 = vld [vmem:[#allocation3 + $0x770] sm:$0xff]
    %v1256 = vld [vmem:[#allocation3 + $0x778] sm:$0xff]
    %v1257 = vld [vmem:[#allocation3 + $0x780] sm:$0xff]
    %v1258 = vld [vmem:[#allocation3 + $0x788] sm:$0xff]
    %v1259 = vld [vmem:[#allocation3 + $0x790] sm:$0xff]
    %v1260 = vld [vmem:[#allocation3 + $0x798] sm:$0xff]
    %v1261 = vld [vmem:[#allocation3 + $0x7a0] sm:$0xff]
    %v1262 = vld [vmem:[#allocation3 + $0x7a8] sm:$0xff]
    %v1263 = vld [vmem:[#allocation3 + $0x7b0] sm:$0xff]
    %v1264 = vld [vmem:[#allocation3 + $0x7b8] sm:$0xff]
    %v1265 = vld [vmem:[#allocation3 + $0x7c0] sm:$0xff]
    %v1266 = vld [vmem:[#allocation3 + $0x7c8] sm:$0xff]
    %v1267 = vld [vmem:[#allocation3 + $0x7d0] sm:$0xff]
    %v1268 = vld [vmem:[#allocation3 + $0x7d8] sm:$0xff]
    %v1269 = vld [vmem:[#allocation3 + $0x7e0] sm:$0xff]
    %v1270 = vld [vmem:[#allocation3 + $0x7e8] sm:$0xff]
    %v1271 = vld [vmem:[#allocation3 + $0x7f0] sm:$0xff]
    %v1272 = vld [vmem:[#allocation3 + $0x7f8] sm:$0xff]
    %v1273 = vld [vmem:[%s11] sm:$0xf]
    %v1275 = vlaneseq
    %v1276 = vshrl.u32 %v1275, 7
    %v1277 = vsub.s32 0, %v1276
    %v1278 = vrot.slane %v1273, %v1277
    %v1279 = vlaneseq
    %v1280 = vshrl.u32 %v1279, 7
    %v1281 = vsub.s32 1, %v1280
    %v1282 = vrot.slane %v1273, %v1281
    %v1283 = vlaneseq
    %v1284 = vshrl.u32 %v1283, 7
    %v1285 = vsub.s32 2, %v1284
    %v1286 = vrot.slane %v1273, %v1285
    %v1287 = vlaneseq
    %v1288 = vshrl.u32 %v1287, 7
    %v1289 = vsub.s32 3, %v1288
    %v1290 = vrot.slane %v1273, %v1289
    %1295 = vmatprep.subr.bf16.mxu0 %v1018
    %1296 = vmatpush1.bf16.msra.mxu0 %v1017
    %1297 = vmatprep.subr.bf16.mxu0 %v1022
    %1298 = vmatpush1.bf16.msra.mxu0 %v1021
    %1299 = vmatprep.subr.bf16.mxu0 %v1026
    %1300 = vmatpush1.bf16.msra.mxu0 %v1025
    %1301 = vmatprep.subr.bf16.mxu0 %v1030
    %1302 = vmatpush1.bf16.msra.mxu0 %v1029
    %1303 = vmatprep.subr.bf16.mxu0 %v1034
    %1304 = vmatpush1.bf16.msra.mxu0 %v1033
    %1305 = vmatprep.subr.bf16.mxu0 %v1038
    %1306 = vmatpush1.bf16.msra.mxu0 %v1037
    %1307 = vmatprep.subr.bf16.mxu0 %v1042
    %1308 = vmatpush1.bf16.msra.mxu0 %v1041
    %1309 = vmatprep.subr.bf16.mxu0 %v1046
    %1310 = vmatpush1.bf16.msra.mxu0 %v1045
    %1311 = vmatprep.subr.bf16.mxu0 %v1050
    %1312 = vmatpush1.bf16.msra.mxu0 %v1049
    %1313 = vmatprep.subr.bf16.mxu0 %v1054
    %1314 = vmatpush1.bf16.msra.mxu0 %v1053
    %1315 = vmatprep.subr.bf16.mxu0 %v1058
    %1316 = vmatpush1.bf16.msra.mxu0 %v1057
    %1317 = vmatprep.subr.bf16.mxu0 %v1062
    %1318 = vmatpush1.bf16.msra.mxu0 %v1061
    %1319 = vmatprep.subr.bf16.mxu0 %v1066
    %1320 = vmatpush1.bf16.msra.mxu0 %v1065
    %1321 = vmatprep.subr.bf16.mxu0 %v1070
    %1322 = vmatpush1.bf16.msra.mxu0 %v1069
    %1323 = vmatprep.subr.bf16.mxu0 %v1074
    %1324 = vmatpush1.bf16.msra.mxu0 %v1073
    %1325 = vmatprep.subr.bf16.mxu0 %v1078
    %1326 = vmatpush1.bf16.msra.mxu0 %v1077
    %1327 = vmatprep.mubr.bf16.mxu0 %v1010
    %1328 = vmatmul.mubr.bf16.gmra.mrb[0].mxu0 %v1009
    %v1329 = vpop.f32.mrb[0].mxu0
    %v1330 = vadd.f32 %v1278, %v1329
    %v1331 = vpop.f32.mrb[0].mxu0
    %v1332 = vadd.f32 %v1282, %v1331
    %v1333 = vpop.f32.mrb[0].mxu0
    %v1334 = vpop.f32.mrb[0].mxu0
    %1335 = vdwg.mxu0
    %1336 = vmatprep.subr.bf16.mxu0 %v1082
    %1337 = vmatpush1.bf16.msra.mxu0 %v1081
    %1338 = vmatprep.subr.bf16.mxu0 %v1086
    %1339 = vmatpush1.bf16.msra.mxu0 %v1085
    %1340 = vmatprep.subr.bf16.mxu0 %v1090
    %1341 = vmatpush1.bf16.msra.mxu0 %v1089
    %1342 = vmatprep.subr.bf16.mxu0 %v1094
    %1343 = vmatpush1.bf16.msra.mxu0 %v1093
    %1344 = vmatprep.subr.bf16.mxu0 %v1098
    %1345 = vmatpush1.bf16.msra.mxu0 %v1097
    %1346 = vmatprep.subr.bf16.mxu0 %v1102
    %1347 = vmatpush1.bf16.msra.mxu0 %v1101
    %1348 = vmatprep.subr.bf16.mxu0 %v1106
    %1349 = vmatpush1.bf16.msra.mxu0 %v1105
    %1350 = vmatprep.subr.bf16.mxu0 %v1110
    %1351 = vmatpush1.bf16.msra.mxu0 %v1109
    %1352 = vmatprep.subr.bf16.mxu0 %v1114
    %1353 = vmatpush1.bf16.msra.mxu0 %v1113
    %1354 = vmatprep.subr.bf16.mxu0 %v1118
    %1355 = vmatpush1.bf16.msra.mxu0 %v1117
    %1356 = vmatprep.subr.bf16.mxu0 %v1122
    %1357 = vmatpush1.bf16.msra.mxu0 %v1121
    %1358 = vmatprep.subr.bf16.mxu0 %v1126
    %1359 = vmatpush1.bf16.msra.mxu0 %v1125
    %1360 = vmatprep.subr.bf16.mxu0 %v1130
    %1361 = vmatpush1.bf16.msra.mxu0 %v1129
    %1362 = vmatprep.subr.bf16.mxu0 %v1134
    %1363 = vmatpush1.bf16.msra.mxu0 %v1133
    %1364 = vmatprep.subr.bf16.mxu0 %v1138
    %1365 = vmatpush1.bf16.msra.mxu0 %v1137
    %1366 = vmatprep.subr.bf16.mxu0 %v1142
    %1367 = vmatpush1.bf16.msra.mxu0 %v1141
    %1368 = vmatprep.mubr.bf16.mxu0 %v1012
    %1369 = vmatmul.mubr.bf16.gmra.mrb[0].mxu0 %v1011
    %v1370 = vpop.f32.mrb[0].mxu0
    %v1371 = vadd.f32 %v1330, %v1370
    %v1372 = vpop.f32.mrb[0].mxu0
    %v1373 = vadd.f32 %v1332, %v1372
    %v1374 = vpop.f32.mrb[0].mxu0
    %v1375 = vpop.f32.mrb[0].mxu0
    %1376 = vdwg.mxu0
    %1377 = vmatprep.subr.bf16.mxu0 %v1146
    %1378 = vmatpush1.bf16.msra.mxu0 %v1145
    %1379 = vmatprep.subr.bf16.mxu0 %v1150
    %1380 = vmatpush1.bf16.msra.mxu0 %v1149
    %1381 = vmatprep.subr.bf16.mxu0 %v1154
    %1382 = vmatpush1.bf16.msra.mxu0 %v1153
    %1383 = vmatprep.subr.bf16.mxu0 %v1158
    %1384 = vmatpush1.bf16.msra.mxu0 %v1157
    %1385 = vmatprep.subr.bf16.mxu0 %v1162
    %1386 = vmatpush1.bf16.msra.mxu0 %v1161
    %1387 = vmatprep.subr.bf16.mxu0 %v1166
    %1388 = vmatpush1.bf16.msra.mxu0 %v1165
    %1389 = vmatprep.subr.bf16.mxu0 %v1170
    %1390 = vmatpush1.bf16.msra.mxu0 %v1169
    %1391 = vmatprep.subr.bf16.mxu0 %v1174
    %1392 = vmatpush1.bf16.msra.mxu0 %v1173
    %1393 = vmatprep.subr.bf16.mxu0 %v1178
    %1394 = vmatpush1.bf16.msra.mxu0 %v1177
    %1395 = vmatprep.subr.bf16.mxu0 %v1182
    %1396 = vmatpush1.bf16.msra.mxu0 %v1181
    %1397 = vmatprep.subr.bf16.mxu0 %v1186
    %1398 = vmatpush1.bf16.msra.mxu0 %v1185
    %1399 = vmatprep.subr.bf16.mxu0 %v1190
    %1400 = vmatpush1.bf16.msra.mxu0 %v1189
    %1401 = vmatprep.subr.bf16.mxu0 %v1194
    %1402 = vmatpush1.bf16.msra.mxu0 %v1193
    %1403 = vmatprep.subr.bf16.mxu0 %v1198
    %1404 = vmatpush1.bf16.msra.mxu0 %v1197
    %1405 = vmatprep.subr.bf16.mxu0 %v1202
    %1406 = vmatpush1.bf16.msra.mxu0 %v1201
    %1407 = vmatprep.subr.bf16.mxu0 %v1206
    %1408 = vmatpush1.bf16.msra.mxu0 %v1205
    %1409 = vmatprep.mubr.bf16.mxu0 %v1014
    %1410 = vmatmul.mubr.bf16.gmra.mrb[0].mxu0 %v1013
    %v1411 = vpop.f32.mrb[0].mxu0
    %v1412 = vadd.f32 %v1371, %v1411
    %v1413 = vpop.f32.mrb[0].mxu0
    %v1414 = vadd.f32 %v1373, %v1413
    %v1415 = vpop.f32.mrb[0].mxu0
    %v1416 = vpop.f32.mrb[0].mxu0
    %1417 = vdwg.mxu0
    %1418 = vmatprep.subr.bf16.mxu0 %v1210
    %1419 = vmatpush1.bf16.msra.mxu0 %v1209
    %1420 = vmatprep.subr.bf16.mxu0 %v1214
    %1421 = vmatpush1.bf16.msra.mxu0 %v1213
    %1422 = vmatprep.subr.bf16.mxu0 %v1218
    %1423 = vmatpush1.bf16.msra.mxu0 %v1217
    %1424 = vmatprep.subr.bf16.mxu0 %v1222
    %1425 = vmatpush1.bf16.msra.mxu0 %v1221
    %1426 = vmatprep.subr.bf16.mxu0 %v1226
    %1427 = vmatpush1.bf16.msra.mxu0 %v1225
    %1428 = vmatprep.subr.bf16.mxu0 %v1230
    %1429 = vmatpush1.bf16.msra.mxu0 %v1229
    %1430 = vmatprep.subr.bf16.mxu0 %v1234
    %1431 = vmatpush1.bf16.msra.mxu0 %v1233
    %1432 = vmatprep.subr.bf16.mxu0 %v1238
    %1433 = vmatpush1.bf16.msra.mxu0 %v1237
    %1434 = vmatprep.subr.bf16.mxu0 %v1242
    %1435 = vmatpush1.bf16.msra.mxu0 %v1241
    %1436 = vmatprep.subr.bf16.mxu0 %v1246
    %1437 = vmatpush1.bf16.msra.mxu0 %v1245
    %1438 = vmatprep.subr.bf16.mxu0 %v1250
    %1439 = vmatpush1.bf16.msra.mxu0 %v1249
    %1440 = vmatprep.subr.bf16.mxu0 %v1254
    %1441 = vmatpush1.bf16.msra.mxu0 %v1253
    %1442 = vmatprep.subr.bf16.mxu0 %v1258
    %1443 = vmatpush1.bf16.msra.mxu0 %v1257
    %1444 = vmatprep.subr.bf16.mxu0 %v1262
    %1445 = vmatpush1.bf16.msra.mxu0 %v1261
    %1446 = vmatprep.subr.bf16.mxu0 %v1266
    %1447 = vmatpush1.bf16.msra.mxu0 %v1265
    %1448 = vmatprep.subr.bf16.mxu0 %v1270
    %1449 = vmatpush1.bf16.msra.mxu0 %v1269
    %1450 = vmatprep.mubr.bf16.mxu0 %v1016
    %1451 = vmatmul.mubr.bf16.gmra.mrb[0].mxu0 %v1015
    %v1452 = vpop.f32.mrb[0].mxu0
    %v1453 = vadd.f32 %v1412, %v1452
    %v1454 = vpop.f32.mrb[0].mxu0
    %v1455 = vadd.f32 %v1414, %v1454
    %v1456 = vpop.f32.mrb[0].mxu0
    %v1457 = vpop.f32.mrb[0].mxu0
    %1458 = vdwg.mxu0
    %1459 = vmatprep.subr.bf16.mxu0 %v1020
    %1460 = vmatpush1.bf16.msra.mxu0 %v1019
    %1461 = vmatprep.subr.bf16.mxu0 %v1024
    %1462 = vmatpush1.bf16.msra.mxu0 %v1023
    %1463 = vmatprep.subr.bf16.mxu0 %v1028
    %1464 = vmatpush1.bf16.msra.mxu0 %v1027
    %1465 = vmatprep.subr.bf16.mxu0 %v1032
    %1466 = vmatpush1.bf16.msra.mxu0 %v1031
    %1467 = vmatprep.subr.bf16.mxu0 %v1036
    %1468 = vmatpush1.bf16.msra.mxu0 %v1035
    %1469 = vmatprep.subr.bf16.mxu0 %v1040
    %1470 = vmatpush1.bf16.msra.mxu0 %v1039
    %1471 = vmatprep.subr.bf16.mxu0 %v1044
    %1472 = vmatpush1.bf16.msra.mxu0 %v1043
    %1473 = vmatprep.subr.bf16.mxu0 %v1048
    %1474 = vmatpush1.bf16.msra.mxu0 %v1047
    %1475 = vmatprep.subr.bf16.mxu0 %v1052
    %1476 = vmatpush1.bf16.msra.mxu0 %v1051
    %1477 = vmatprep.subr.bf16.mxu0 %v1056
    %1478 = vmatpush1.bf16.msra.mxu0 %v1055
    %1479 = vmatprep.subr.bf16.mxu0 %v1060
    %1480 = vmatpush1.bf16.msra.mxu0 %v1059
    %1481 = vmatprep.subr.bf16.mxu0 %v1064
    %1482 = vmatpush1.bf16.msra.mxu0 %v1063
    %1483 = vmatprep.subr.bf16.mxu0 %v1068
    %1484 = vmatpush1.bf16.msra.mxu0 %v1067
    %1485 = vmatprep.subr.bf16.mxu0 %v1072
    %1486 = vmatpush1.bf16.msra.mxu0 %v1071
    %1487 = vmatprep.subr.bf16.mxu0 %v1076
    %1488 = vmatpush1.bf16.msra.mxu0 %v1075
    %1489 = vmatprep.subr.bf16.mxu0 %v1080
    %1490 = vmatpush1.bf16.msra.mxu0 %v1079
    %1491 = vmatprep.mubr.bf16.mxu0 %v1010
    %1492 = vmatmul.mubr.bf16.gmra.mrb[0].mxu0 %v1009
    %v1493 = vpop.f32.mrb[0].mxu0
    %v1494 = vadd.f32 %v1286, %v1493
    %v1495 = vpop.f32.mrb[0].mxu0
    %v1496 = vadd.f32 %v1290, %v1495
    %v1497 = vpop.f32.mrb[0].mxu0
    %v1498 = vpop.f32.mrb[0].mxu0
    %1499 = vdwg.mxu0
    %1500 = vmatprep.subr.bf16.mxu0 %v1084
    %1501 = vmatpush1.bf16.msra.mxu0 %v1083
    %1502 = vmatprep.subr.bf16.mxu0 %v1088
    %1503 = vmatpush1.bf16.msra.mxu0 %v1087
    %1504 = vmatprep.subr.bf16.mxu0 %v1092
    %1505 = vmatpush1.bf16.msra.mxu0 %v1091
    %1506 = vmatprep.subr.bf16.mxu0 %v1096
    %1507 = vmatpush1.bf16.msra.mxu0 %v1095
    %1508 = vmatprep.subr.bf16.mxu0 %v1100
    %1509 = vmatpush1.bf16.msra.mxu0 %v1099
    %1510 = vmatprep.subr.bf16.mxu0 %v1104
    %1511 = vmatpush1.bf16.msra.mxu0 %v1103
    %1512 = vmatprep.subr.bf16.mxu0 %v1108
    %1513 = vmatpush1.bf16.msra.mxu0 %v1107
    %1514 = vmatprep.subr.bf16.mxu0 %v1112
    %1515 = vmatpush1.bf16.msra.mxu0 %v1111
    %1516 = vmatprep.subr.bf16.mxu0 %v1116
    %1517 = vmatpush1.bf16.msra.mxu0 %v1115
    %1518 = vmatprep.subr.bf16.mxu0 %v1120
    %1519 = vmatpush1.bf16.msra.mxu0 %v1119
    %1520 = vmatprep.subr.bf16.mxu0 %v1124
    %1521 = vmatpush1.bf16.msra.mxu0 %v1123
    %1522 = vmatprep.subr.bf16.mxu0 %v1128
    %1523 = vmatpush1.bf16.msra.mxu0 %v1127
    %1524 = vmatprep.subr.bf16.mxu0 %v1132
    %1525 = vmatpush1.bf16.msra.mxu0 %v1131
    %1526 = vmatprep.subr.bf16.mxu0 %v1136
    %1527 = vmatpush1.bf16.msra.mxu0 %v1135
    %1528 = vmatprep.subr.bf16.mxu0 %v1140
    %1529 = vmatpush1.bf16.msra.mxu0 %v1139
    %1530 = vmatprep.subr.bf16.mxu0 %v1144
    %1531 = vmatpush1.bf16.msra.mxu0 %v1143
    %1532 = vmatprep.mubr.bf16.mxu0 %v1012
    %1533 = vmatmul.mubr.bf16.gmra.mrb[0].mxu0 %v1011
    %v1534 = vpop.f32.mrb[0].mxu0
    %v1535 = vadd.f32 %v1494, %v1534
    %v1536 = vpop.f32.mrb[0].mxu0
    %v1537 = vadd.f32 %v1496, %v1536
    %v1538 = vpop.f32.mrb[0].mxu0
    %v1539 = vpop.f32.mrb[0].mxu0
    %1540 = vdwg.mxu0
    %1541 = vmatprep.subr.bf16.mxu0 %v1148
    %1542 = vmatpush1.bf16.msra.mxu0 %v1147
    %1543 = vmatprep.subr.bf16.mxu0 %v1152
    %1544 = vmatpush1.bf16.msra.mxu0 %v1151
    %1545 = vmatprep.subr.bf16.mxu0 %v1156
    %1546 = vmatpush1.bf16.msra.mxu0 %v1155
    %1547 = vmatprep.subr.bf16.mxu0 %v1160
    %1548 = vmatpush1.bf16.msra.mxu0 %v1159
    %1549 = vmatprep.subr.bf16.mxu0 %v1164
    %1550 = vmatpush1.bf16.msra.mxu0 %v1163
    %1551 = vmatprep.subr.bf16.mxu0 %v1168
    %1552 = vmatpush1.bf16.msra.mxu0 %v1167
    %1553 = vmatprep.subr.bf16.mxu0 %v1172
    %1554 = vmatpush1.bf16.msra.mxu0 %v1171
    %1555 = vmatprep.subr.bf16.mxu0 %v1176
    %1556 = vmatpush1.bf16.msra.mxu0 %v1175
    %1557 = vmatprep.subr.bf16.mxu0 %v1180
    %1558 = vmatpush1.bf16.msra.mxu0 %v1179
    %1559 = vmatprep.subr.bf16.mxu0 %v1184
    %1560 = vmatpush1.bf16.msra.mxu0 %v1183
    %1561 = vmatprep.subr.bf16.mxu0 %v1188
    %1562 = vmatpush1.bf16.msra.mxu0 %v1187
    %1563 = vmatprep.subr.bf16.mxu0 %v1192
    %1564 = vmatpush1.bf16.msra.mxu0 %v1191
    %1565 = vmatprep.subr.bf16.mxu0 %v1196
    %1566 = vmatpush1.bf16.msra.mxu0 %v1195
    %1567 = vmatprep.subr.bf16.mxu0 %v1200
    %1568 = vmatpush1.bf16.msra.mxu0 %v1199
    %1569 = vmatprep.subr.bf16.mxu0 %v1204
    %1570 = vmatpush1.bf16.msra.mxu0 %v1203
    %1571 = vmatprep.subr.bf16.mxu0 %v1208
    %1572 = vmatpush1.bf16.msra.mxu0 %v1207
    %1573 = vmatprep.mubr.bf16.mxu0 %v1014
    %1574 = vmatmul.mubr.bf16.gmra.mrb[0].mxu0 %v1013
    %v1575 = vpop.f32.mrb[0].mxu0
    %v1576 = vadd.f32 %v1535, %v1575
    %v1577 = vpop.f32.mrb[0].mxu0
    %v1578 = vadd.f32 %v1537, %v1577
    %v1579 = vpop.f32.mrb[0].mxu0
    %v1580 = vpop.f32.mrb[0].mxu0
    %1581 = vdwg.mxu0
    %1582 = vmatprep.subr.bf16.mxu0 %v1212
    %1583 = vmatpush1.bf16.msra.mxu0 %v1211
    %1584 = vmatprep.subr.bf16.mxu0 %v1216
    %1585 = vmatpush1.bf16.msra.mxu0 %v1215
    %1586 = vmatprep.subr.bf16.mxu0 %v1220
    %1587 = vmatpush1.bf16.msra.mxu0 %v1219
    %1588 = vmatprep.subr.bf16.mxu0 %v1224
    %1589 = vmatpush1.bf16.msra.mxu0 %v1223
    %1590 = vmatprep.subr.bf16.mxu0 %v1228
    %1591 = vmatpush1.bf16.msra.mxu0 %v1227
    %1592 = vmatprep.subr.bf16.mxu0 %v1232
    %1593 = vmatpush1.bf16.msra.mxu0 %v1231
    %1594 = vmatprep.subr.bf16.mxu0 %v1236
    %1595 = vmatpush1.bf16.msra.mxu0 %v1235
    %1596 = vmatprep.subr.bf16.mxu0 %v1240
    %1597 = vmatpush1.bf16.msra.mxu0 %v1239
    %1598 = vmatprep.subr.bf16.mxu0 %v1244
    %1599 = vmatpush1.bf16.msra.mxu0 %v1243
    %1600 = vmatprep.subr.bf16.mxu0 %v1248
    %1601 = vmatpush1.bf16.msra.mxu0 %v1247
    %1602 = vmatprep.subr.bf16.mxu0 %v1252
    %1603 = vmatpush1.bf16.msra.mxu0 %v1251
    %1604 = vmatprep.subr.bf16.mxu0 %v1256
    %1605 = vmatpush1.bf16.msra.mxu0 %v1255
    %1606 = vmatprep.subr.bf16.mxu0 %v1260
    %1607 = vmatpush1.bf16.msra.mxu0 %v1259
    %1608 = vmatprep.subr.bf16.mxu0 %v1264
    %1609 = vmatpush1.bf16.msra.mxu0 %v1263
    %1610 = vmatprep.subr.bf16.mxu0 %v1268
    %1611 = vmatpush1.bf16.msra.mxu0 %v1267
    %1612 = vmatprep.subr.bf16.mxu0 %v1272
    %1613 = vmatpush1.bf16.msra.mxu0 %v1271
    %1614 = vmatprep.mubr.bf16.mxu0 %v1016
    %1615 = vmatmul.mubr.bf16.gmra.mrb[0].mxu0 %v1015
    %v1616 = vpop.f32.mrb[0].mxu0
    %v1617 = vadd.f32 %v1576, %v1616
    %v1618 = vpop.f32.mrb[0].mxu0
    %v1619 = vadd.f32 %v1578, %v1618
    %v1620 = vpop.f32.mrb[0].mxu0
    %v1621 = vpop.f32.mrb[0].mxu0
    %1622 = vdwg.mxu0
    %v1623 = vmax.f32 %v1453, 0.0
    %v1624 = vmax.f32 %v1455, 0.0
    %v1625 = vmax.f32 %v1617, 0.0
    %v1626 = vmax.f32 %v1619, 0.0
    %s1627 = smul.u32 %s363, 2
    %s1628 = sshll.u32 %s1627, 4
    %1629 = dma.done %s137, %s1628
    %v1630 = vpack.c.bf16 %v1623, %v1623
    %v1631 = vpack.c.bf16 %v1624, %v1624
    %v1632 = vpack.c.bf16 %v1625, %v1625
    %v1633 = vpack.c.bf16 %v1626, %v1626
    %v1634 = vld [vmem:[#allocation4] sm:$0xff]
    %v1635 = vld [vmem:[#allocation4 + $0x8] sm:$0xff]
    %v1636 = vld [vmem:[#allocation4 + $0x10] sm:$0xff]
    %v1637 = vld [vmem:[#allocation4 + $0x18] sm:$0xff]
    %v1638 = vld [vmem:[#allocation4 + $0x20] sm:$0xff]
    %v1639 = vld [vmem:[#allocation4 + $0x28] sm:$0xff]
    %v1640 = vld [vmem:[#allocation4 + $0x30] sm:$0xff]
    %v1641 = vld [vmem:[#allocation4 + $0x38] sm:$0xff]
    %v1642 = vld [vmem:[#allocation4 + $0x40] sm:$0xff]
    %v1643 = vld [vmem:[#allocation4 + $0x48] sm:$0xff]
    %v1644 = vld [vmem:[#allocation4 + $0x50] sm:$0xff]
    %v1645 = vld [vmem:[#allocation4 + $0x58] sm:$0xff]
    %v1646 = vld [vmem:[#allocation4 + $0x60] sm:$0xff]
    %v1647 = vld [vmem:[#allocation4 + $0x68] sm:$0xff]
    %v1648 = vld [vmem:[#allocation4 + $0x70] sm:$0xff]
    %v1649 = vld [vmem:[#allocation4 + $0x78] sm:$0xff]
    %v1650 = vld [vmem:[#allocation4 + $0x80] sm:$0xff]
    %v1651 = vld [vmem:[#allocation4 + $0x88] sm:$0xff]
    %v1652 = vld [vmem:[#allocation4 + $0x90] sm:$0xff]
    %v1653 = vld [vmem:[#allocation4 + $0x98] sm:$0xff]
    %v1654 = vld [vmem:[#allocation4 + $0xa0] sm:$0xff]
    %v1655 = vld [vmem:[#allocation4 + $0xa8] sm:$0xff]
    %v1656 = vld [vmem:[#allocation4 + $0xb0] sm:$0xff]
    %v1657 = vld [vmem:[#allocation4 + $0xb8] sm:$0xff]
    %v1658 = vld [vmem:[#allocation4 + $0xc0] sm:$0xff]
    %v1659 = vld [vmem:[#allocation4 + $0xc8] sm:$0xff]
    %v1660 = vld [vmem:[#allocation4 + $0xd0] sm:$0xff]
    %v1661 = vld [vmem:[#allocation4 + $0xd8] sm:$0xff]
    %v1662 = vld [vmem:[#allocation4 + $0xe0] sm:$0xff]
    %v1663 = vld [vmem:[#allocation4 + $0xe8] sm:$0xff]
    %v1664 = vld [vmem:[#allocation4 + $0xf0] sm:$0xff]
    %v1665 = vld [vmem:[#allocation4 + $0xf8] sm:$0xff]
    %v1666 = vld [vmem:[#allocation4 + $0x100] sm:$0xff]
    %v1667 = vld [vmem:[#allocation4 + $0x108] sm:$0xff]
    %v1668 = vld [vmem:[#allocation4 + $0x110] sm:$0xff]
    %v1669 = vld [vmem:[#allocation4 + $0x118] sm:$0xff]
    %v1670 = vld [vmem:[#allocation4 + $0x120] sm:$0xff]
    %v1671 = vld [vmem:[#allocation4 + $0x128] sm:$0xff]
    %v1672 = vld [vmem:[#allocation4 + $0x130] sm:$0xff]
    %v1673 = vld [vmem:[#allocation4 + $0x138] sm:$0xff]
    %v1674 = vld [vmem:[#allocation4 + $0x140] sm:$0xff]
    %v1675 = vld [vmem:[#allocation4 + $0x148] sm:$0xff]
    %v1676 = vld [vmem:[#allocation4 + $0x150] sm:$0xff]
    %v1677 = vld [vmem:[#allocation4 + $0x158] sm:$0xff]
    %v1678 = vld [vmem:[#allocation4 + $0x160] sm:$0xff]
    %v1679 = vld [vmem:[#allocation4 + $0x168] sm:$0xff]
    %v1680 = vld [vmem:[#allocation4 + $0x170] sm:$0xff]
    %v1681 = vld [vmem:[#allocation4 + $0x178] sm:$0xff]
    %v1682 = vld [vmem:[#allocation4 + $0x180] sm:$0xff]
    %v1683 = vld [vmem:[#allocation4 + $0x188] sm:$0xff]
    %v1684 = vld [vmem:[#allocation4 + $0x190] sm:$0xff]
    %v1685 = vld [vmem:[#allocation4 + $0x198] sm:$0xff]
    %v1686 = vld [vmem:[#allocation4 + $0x1a0] sm:$0xff]
    %v1687 = vld [vmem:[#allocation4 + $0x1a8] sm:$0xff]
    %v1688 = vld [vmem:[#allocation4 + $0x1b0] sm:$0xff]
    %v1689 = vld [vmem:[#allocation4 + $0x1b8] sm:$0xff]
    %v1690 = vld [vmem:[#allocation4 + $0x1c0] sm:$0xff]
    %v1691 = vld [vmem:[#allocation4 + $0x1c8] sm:$0xff]
    %v1692 = vld [vmem:[#allocation4 + $0x1d0] sm:$0xff]
    %v1693 = vld [vmem:[#allocation4 + $0x1d8] sm:$0xff]
    %v1694 = vld [vmem:[#allocation4 + $0x1e0] sm:$0xff]
    %v1695 = vld [vmem:[#allocation4 + $0x1e8] sm:$0xff]
    %v1696 = vld [vmem:[#allocation4 + $0x1f0] sm:$0xff]
    %v1697 = vld [vmem:[#allocation4 + $0x1f8] sm:$0xff]
    %v1698 = vld [vmem:[%s12] sm:$0x3]
    %v1700 = vlaneseq
    %v1701 = vshrl.u32 %v1700, 7
    %v1702 = vsub.s32 0, %v1701
    %v1703 = vrot.slane %v1698, %v1702
    %v1704 = vlaneseq
    %v1705 = vshrl.u32 %v1704, 7
    %v1706 = vsub.s32 1, %v1705
    %v1707 = vrot.slane %v1698, %v1706
    %1710 = vmatprep.subr.bf16.mxu0 %v1635
    %1711 = vmatpush1.bf16.msra.mxu0 %v1634
    %1712 = vmatprep.subr.bf16.mxu0 %v1637
    %1713 = vmatpush1.bf16.msra.mxu0 %v1636
    %1714 = vmatprep.subr.bf16.mxu0 %v1639
    %1715 = vmatpush1.bf16.msra.mxu0 %v1638
    %1716 = vmatprep.subr.bf16.mxu0 %v1641
    %1717 = vmatpush1.bf16.msra.mxu0 %v1640
    %1718 = vmatprep.subr.bf16.mxu0 %v1643
    %1719 = vmatpush1.bf16.msra.mxu0 %v1642
    %1720 = vmatprep.subr.bf16.mxu0 %v1645
    %1721 = vmatpush1.bf16.msra.mxu0 %v1644
    %1722 = vmatprep.subr.bf16.mxu0 %v1647
    %1723 = vmatpush1.bf16.msra.mxu0 %v1646
    %1724 = vmatprep.subr.bf16.mxu0 %v1649
    %1725 = vmatpush1.bf16.msra.mxu0 %v1648
    %1726 = vmatprep.subr.bf16.mxu0 %v1651
    %1727 = vmatpush1.bf16.msra.mxu0 %v1650
    %1728 = vmatprep.subr.bf16.mxu0 %v1653
    %1729 = vmatpush1.bf16.msra.mxu0 %v1652
    %1730 = vmatprep.subr.bf16.mxu0 %v1655
    %1731 = vmatpush1.bf16.msra.mxu0 %v1654
    %1732 = vmatprep.subr.bf16.mxu0 %v1657
    %1733 = vmatpush1.bf16.msra.mxu0 %v1656
    %1734 = vmatprep.subr.bf16.mxu0 %v1659
    %1735 = vmatpush1.bf16.msra.mxu0 %v1658
    %1736 = vmatprep.subr.bf16.mxu0 %v1661
    %1737 = vmatpush1.bf16.msra.mxu0 %v1660
    %1738 = vmatprep.subr.bf16.mxu0 %v1663
    %1739 = vmatpush1.bf16.msra.mxu0 %v1662
    %1740 = vmatprep.subr.bf16.mxu0 %v1665
    %1741 = vmatpush1.bf16.msra.mxu0 %v1664
    %1742 = vmatprep.mubr.bf16.mxu0 %v1631
    %1743 = vmatmul.mubr.bf16.gmra.mrb[0].mxu0 %v1630
    %v1744 = vpop.f32.mrb[0].mxu0
    %v1745 = vadd.f32 %v1703, %v1744
    %v1746 = vpop.f32.mrb[0].mxu0
    %v1747 = vadd.f32 %v1707, %v1746
    %v1748 = vpop.f32.mrb[0].mxu0
    %v1749 = vpop.f32.mrb[0].mxu0
    %1750 = vdwg.mxu0
    %1751 = vmatprep.subr.bf16.mxu0 %v1667
    %1752 = vmatpush1.bf16.msra.mxu0 %v1666
    %1753 = vmatprep.subr.bf16.mxu0 %v1669
    %1754 = vmatpush1.bf16.msra.mxu0 %v1668
    %1755 = vmatprep.subr.bf16.mxu0 %v1671
    %1756 = vmatpush1.bf16.msra.mxu0 %v1670
    %1757 = vmatprep.subr.bf16.mxu0 %v1673
    %1758 = vmatpush1.bf16.msra.mxu0 %v1672
    %1759 = vmatprep.subr.bf16.mxu0 %v1675
    %1760 = vmatpush1.bf16.msra.mxu0 %v1674
    %1761 = vmatprep.subr.bf16.mxu0 %v1677
    %1762 = vmatpush1.bf16.msra.mxu0 %v1676
    %1763 = vmatprep.subr.bf16.mxu0 %v1679
    %1764 = vmatpush1.bf16.msra.mxu0 %v1678
    %1765 = vmatprep.subr.bf16.mxu0 %v1681
    %1766 = vmatpush1.bf16.msra.mxu0 %v1680
    %1767 = vmatprep.subr.bf16.mxu0 %v1683
    %1768 = vmatpush1.bf16.msra.mxu0 %v1682
    %1769 = vmatprep.subr.bf16.mxu0 %v1685
    %1770 = vmatpush1.bf16.msra.mxu0 %v1684
    %1771 = vmatprep.subr.bf16.mxu0 %v1687
    %1772 = vmatpush1.bf16.msra.mxu0 %v1686
    %1773 = vmatprep.subr.bf16.mxu0 %v1689
    %1774 = vmatpush1.bf16.msra.mxu0 %v1688
    %1775 = vmatprep.subr.bf16.mxu0 %v1691
    %1776 = vmatpush1.bf16.msra.mxu0 %v1690
    %1777 = vmatprep.subr.bf16.mxu0 %v1693
    %1778 = vmatpush1.bf16.msra.mxu0 %v1692
    %1779 = vmatprep.subr.bf16.mxu0 %v1695
    %1780 = vmatpush1.bf16.msra.mxu0 %v1694
    %1781 = vmatprep.subr.bf16.mxu0 %v1697
    %1782 = vmatpush1.bf16.msra.mxu0 %v1696
    %1783 = vmatprep.mubr.bf16.mxu0 %v1633
    %1784 = vmatmul.mubr.bf16.gmra.mrb[0].mxu0 %v1632
    %v1785 = vpop.f32.mrb[0].mxu0
    %v1786 = vadd.f32 %v1745, %v1785
    %v1787 = vpop.f32.mrb[0].mxu0
    %v1788 = vadd.f32 %v1747, %v1787
    %v1789 = vpop.f32.mrb[0].mxu0
    %v1790 = vpop.f32.mrb[0].mxu0
    %1791 = vdwg.mxu0
    %v1792 = vmax.f32 %v1786, 0.0
    %v1793 = vmax.f32 %v1788, 0.0
    %s1794 = smul.u32 4, 32
    %s1795 = smul.u32 %s1794, 1
    %s1796 = sshll.u32 %s1795, 4
    %1797 = dma.done %s172, %s1796
    %v1798 = vpack.c.bf16 %v1792, %v1792
    %v1799 = vpack.c.bf16 %v1793, %v1793
    %v1800 = vld [vmem:[#allocation5] sm:$0xff]
    %v1801 = vld [vmem:[#allocation5 + $0x8] sm:$0xff]
    %v1802 = vld [vmem:[#allocation5 + $0x10] sm:$0xff]
    %v1803 = vld [vmem:[#allocation5 + $0x18] sm:$0xff]
    %v1804 = vld [vmem:[#allocation5 + $0x20] sm:$0xff]
    %v1805 = vld [vmem:[#allocation5 + $0x28] sm:$0xff]
    %v1806 = vld [vmem:[#allocation5 + $0x30] sm:$0xff]
    %v1807 = vld [vmem:[#allocation5 + $0x38] sm:$0xff]
    %v1808 = vld [vmem:[#allocation5 + $0x40] sm:$0xff]
    %v1809 = vld [vmem:[#allocation5 + $0x48] sm:$0xff]
    %v1810 = vld [vmem:[#allocation5 + $0x50] sm:$0xff]
    %v1811 = vld [vmem:[#allocation5 + $0x58] sm:$0xff]
    %v1812 = vld [vmem:[#allocation5 + $0x60] sm:$0xff]
    %v1813 = vld [vmem:[#allocation5 + $0x68] sm:$0xff]
    %v1814 = vld [vmem:[#allocation5 + $0x70] sm:$0xff]
    %v1815 = vld [vmem:[#allocation5 + $0x78] sm:$0xff]
    %v1816 = vld [vmem:[%s13] sm:$0x1]
    %v1818 = vlaneseq
    %v1819 = vshrl.u32 %v1818, 7
    %v1820 = vsub.s32 0, %v1819
    %v1821 = vrot.slane %v1816, %v1820
    %1823 = vmatprep.subr.bf16.mxu0 0
    %1824 = vmatpush1.bf16.msra.mxu0 %v1800
    %1825 = vmatprep.subr.bf16.mxu0 0
    %1826 = vmatpush1.bf16.msra.mxu0 %v1801
    %1827 = vmatprep.subr.bf16.mxu0 0
    %1828 = vmatpush1.bf16.msra.mxu0 %v1802
    %1829 = vmatprep.subr.bf16.mxu0 0
    %1830 = vmatpush1.bf16.msra.mxu0 %v1803
    %1831 = vmatprep.subr.bf16.mxu0 0
    %1832 = vmatpush1.bf16.msra.mxu0 %v1804
    %1833 = vmatprep.subr.bf16.mxu0 0
    %1834 = vmatpush1.bf16.msra.mxu0 %v1805
    %1835 = vmatprep.subr.bf16.mxu0 0
    %1836 = vmatpush1.bf16.msra.mxu0 %v1806
    %1837 = vmatprep.subr.bf16.mxu0 0
    %1838 = vmatpush1.bf16.msra.mxu0 %v1807
    %1839 = vmatprep.subr.bf16.mxu0 0
    %1840 = vmatpush1.bf16.msra.mxu0 %v1808
    %1841 = vmatprep.subr.bf16.mxu0 0
    %1842 = vmatpush1.bf16.msra.mxu0 %v1809
    %1843 = vmatprep.subr.bf16.mxu0 0
    %1844 = vmatpush1.bf16.msra.mxu0 %v1810
    %1845 = vmatprep.subr.bf16.mxu0 0
    %1846 = vmatpush1.bf16.msra.mxu0 %v1811
    %1847 = vmatprep.subr.bf16.mxu0 0
    %1848 = vmatpush1.bf16.msra.mxu0 %v1812
    %1849 = vmatprep.subr.bf16.mxu0 0
    %1850 = vmatpush1.bf16.msra.mxu0 %v1813
    %1851 = vmatprep.subr.bf16.mxu0 0
    %1852 = vmatpush1.bf16.msra.mxu0 %v1814
    %1853 = vmatprep.subr.bf16.mxu0 0
    %1854 = vmatpush1.bf16.msra.mxu0 %v1815
    %1855 = vmatprep.mubr.bf16.mxu0 %v1799
    %1856 = vmatmul.mubr.bf16.gmra.mrb[0].mxu0 %v1798
    %v1857 = vpop.f32.mrb[0].mxu0
    %v1858 = vadd.f32 %v1821, %v1857
    %v1859 = vpop.f32.mrb[0].mxu0
    %v1860 = vpop.f32.mrb[0].mxu0
    %v1861 = vpop.f32.mrb[0].mxu0
    %1862 = vdwg.mxu0
    %v1863 = vmax.f32 %v1858, 0.0
    %1864 = vst [vmem:[#allocation15] sm:$0xff] %v1863
    %s1865 = smul.u32 4, 16
    %s1866 = smul.u32 %s1865, 2
    %s1867 = sshll.u32 %s1866, 4
    %1868 = dma.done %s184, %s1867
    %v1869 = vpack.c.bf16 %v1863, %v1863
    %v1870 = vld [vmem:[#allocation6] sm:$0xff]
    %v1871 = vld [vmem:[#allocation6 + $0x8] sm:$0xff]
    %v1872 = vld [vmem:[#allocation6 + $0x10] sm:$0xff]
    %v1873 = vld [vmem:[#allocation6 + $0x18] sm:$0xff]
    %v1874 = vld [vmem:[#allocation6 + $0x20] sm:$0xff]
    %v1875 = vld [vmem:[#allocation6 + $0x28] sm:$0xff]
    %v1876 = vld [vmem:[#allocation6 + $0x30] sm:$0xff]
    %v1877 = vld [vmem:[#allocation6 + $0x38] sm:$0xff]
    %v1878 = vld [vmem:[#allocation6 + $0x40] sm:$0xff]
    %v1879 = vld [vmem:[#allocation6 + $0x48] sm:$0xff]
    %v1880 = vld [vmem:[#allocation6 + $0x50] sm:$0xff]
    %v1881 = vld [vmem:[#allocation6 + $0x58] sm:$0xff]
    %v1882 = vld [vmem:[#allocation6 + $0x60] sm:$0xff]
    %v1883 = vld [vmem:[#allocation6 + $0x68] sm:$0xff]
    %v1884 = vld [vmem:[#allocation6 + $0x70] sm:$0xff]
    %v1885 = vld [vmem:[#allocation6 + $0x78] sm:$0xff]
    %v1886 = vld [vmem:[%s14] sm:$0x3]
    %v1888 = vlaneseq
    %v1889 = vshrl.u32 %v1888, 7
    %v1890 = vsub.s32 0, %v1889
    %v1891 = vrot.slane %v1886, %v1890
    %v1892 = vlaneseq
    %v1893 = vshrl.u32 %v1892, 7
    %v1894 = vsub.s32 1, %v1893
    %v1895 = vrot.slane %v1886, %v1894
    %1898 = vmatprep.subr.bf16.mxu0 %v1871
    %1899 = vmatpush1.bf16.msra.mxu0 %v1870
    %1900 = vmatprep.subr.bf16.mxu0 %v1873
    %1901 = vmatpush1.bf16.msra.mxu0 %v1872
    %1902 = vmatprep.subr.bf16.mxu0 %v1875
    %1903 = vmatpush1.bf16.msra.mxu0 %v1874
    %1904 = vmatprep.subr.bf16.mxu0 %v1877
    %1905 = vmatpush1.bf16.msra.mxu0 %v1876
    %1906 = vmatprep.subr.bf16.mxu0 %v1879
    %1907 = vmatpush1.bf16.msra.mxu0 %v1878
    %1908 = vmatprep.subr.bf16.mxu0 %v1881
    %1909 = vmatpush1.bf16.msra.mxu0 %v1880
    %1910 = vmatprep.subr.bf16.mxu0 %v1883
    %1911 = vmatpush1.bf16.msra.mxu0 %v1882
    %1912 = vmatprep.subr.bf16.mxu0 %v1885
    %1913 = vmatpush1.bf16.msra.mxu0 %v1884
    %1914 = vmatprep.subr.bf16.mxu0 0
    %1915 = vmatpush1.bf16.msra.mxu0 0
    %1916 = vmatprep.subr.bf16.mxu0 0
    %1917 = vmatpush1.bf16.msra.mxu0 0
    %1918 = vmatprep.subr.bf16.mxu0 0
    %1919 = vmatpush1.bf16.msra.mxu0 0
    %1920 = vmatprep.subr.bf16.mxu0 0
    %1921 = vmatpush1.bf16.msra.mxu0 0
    %1922 = vmatprep.subr.bf16.mxu0 0
    %1923 = vmatpush1.bf16.msra.mxu0 0
    %1924 = vmatprep.subr.bf16.mxu0 0
    %1925 = vmatpush1.bf16.msra.mxu0 0
    %1926 = vmatprep.subr.bf16.mxu0 0
    %1927 = vmatpush1.bf16.msra.mxu0 0
    %1928 = vmatprep.subr.bf16.mxu0 0
    %1929 = vmatpush1.bf16.msra.mxu0 0
    %1930 = vmatprep.mubr.bf16.mxu0 0
    %1931 = vmatmul.mubr.bf16.gmra.mrb[0].mxu0 %v1869
    %v1932 = vpop.f32.mrb[0].mxu0
    %v1933 = vadd.f32 %v1891, %v1932
    %v1934 = vpop.f32.mrb[0].mxu0
    %v1935 = vadd.f32 %v1895, %v1934
    %v1936 = vpop.f32.mrb[0].mxu0
    %v1937 = vpop.f32.mrb[0].mxu0
    %1938 = vdwg.mxu0
    %1939 = vst [vmem:[#allocation18] sm:$0xff] %v1933
    %1940 = vst [vmem:[#allocation19] sm:$0xff] %v1935
    %v1941 = vld [vmem:[%s19] sm:$0xff]
    %v1942 = vmul.f32 %v1935, 0.5
    %v1943 = vmul.f32 %v1942, 1.442695
    %v1944 = vpow.pop %v1943
    %v1945 = vmul.f32 %v1941, %v1944
    %v1946 = vadd.f32 %v1933, %v1945
    %s1947 = sshll.u32 %s1866, 4
    %1948 = dma.done %s219, %s1947
    %v1949 = vpack.c.bf16 %v1946, %v1946
    %v1950 = vld [vmem:[#allocation7] sm:$0xff]
    %v1951 = vld [vmem:[#allocation7 + $0x8] sm:$0xff]
    %v1952 = vld [vmem:[#allocation7 + $0x10] sm:$0xff]
    %v1953 = vld [vmem:[#allocation7 + $0x18] sm:$0xff]
    %v1954 = vld [vmem:[#allocation7 + $0x20] sm:$0xff]
    %v1955 = vld [vmem:[#allocation7 + $0x28] sm:$0xff]
    %v1956 = vld [vmem:[#allocation7 + $0x30] sm:$0xff]
    %v1957 = vld [vmem:[#allocation7 + $0x38] sm:$0xff]
    %v1958 = vld [vmem:[#allocation7 + $0x40] sm:$0xff]
    %v1959 = vld [vmem:[#allocation7 + $0x48] sm:$0xff]
    %v1960 = vld [vmem:[#allocation7 + $0x50] sm:$0xff]
    %v1961 = vld [vmem:[#allocation7 + $0x58] sm:$0xff]
    %v1962 = vld [vmem:[#allocation7 + $0x60] sm:$0xff]
    %v1963 = vld [vmem:[#allocation7 + $0x68] sm:$0xff]
    %v1964 = vld [vmem:[#allocation7 + $0x70] sm:$0xff]
    %v1965 = vld [vmem:[#allocation7 + $0x78] sm:$0xff]
    %v1966 = vld [vmem:[%s15] sm:$0x3]
    %v1968 = vlaneseq
    %v1969 = vshrl.u32 %v1968, 7
    %v1970 = vsub.s32 0, %v1969
    %v1971 = vrot.slane %v1966, %v1970
    %v1972 = vlaneseq
    %v1973 = vshrl.u32 %v1972, 7
    %v1974 = vsub.s32 1, %v1973
    %v1975 = vrot.slane %v1966, %v1974
    %1978 = vmatprep.subr.bf16.mxu0 %v1951
    %1979 = vmatpush1.bf16.msra.mxu0 %v1950
    %1980 = vmatprep.subr.bf16.mxu0 %v1953
    %1981 = vmatpush1.bf16.msra.mxu0 %v1952
    %1982 = vmatprep.subr.bf16.mxu0 %v1955
    %1983 = vmatpush1.bf16.msra.mxu0 %v1954
    %1984 = vmatprep.subr.bf16.mxu0 %v1957
    %1985 = vmatpush1.bf16.msra.mxu0 %v1956
    %1986 = vmatprep.subr.bf16.mxu0 %v1959
    %1987 = vmatpush1.bf16.msra.mxu0 %v1958
    %1988 = vmatprep.subr.bf16.mxu0 %v1961
    %1989 = vmatpush1.bf16.msra.mxu0 %v1960
    %1990 = vmatprep.subr.bf16.mxu0 %v1963
    %1991 = vmatpush1.bf16.msra.mxu0 %v1962
    %1992 = vmatprep.subr.bf16.mxu0 %v1965
    %1993 = vmatpush1.bf16.msra.mxu0 %v1964
    %1994 = vmatprep.subr.bf16.mxu0 0
    %1995 = vmatpush1.bf16.msra.mxu0 0
    %1996 = vmatprep.subr.bf16.mxu0 0
    %1997 = vmatpush1.bf16.msra.mxu0 0
    %1998 = vmatprep.subr.bf16.mxu0 0
    %1999 = vmatpush1.bf16.msra.mxu0 0
    %2000 = vmatprep.subr.bf16.mxu0 0
    %2001 = vmatpush1.bf16.msra.mxu0 0
    %2002 = vmatprep.subr.bf16.mxu0 0
    %2003 = vmatpush1.bf16.msra.mxu0 0
    %2004 = vmatprep.subr.bf16.mxu0 0
    %2005 = vmatpush1.bf16.msra.mxu0 0
    %2006 = vmatprep.subr.bf16.mxu0 0
    %2007 = vmatpush1.bf16.msra.mxu0 0
    %2008 = vmatprep.subr.bf16.mxu0 0
    %2009 = vmatpush1.bf16.msra.mxu0 0
    %2010 = vmatprep.mubr.bf16.mxu0 0
    %2011 = vmatmul.mubr.bf16.gmra.mrb[0].mxu0 %v1949
    %v2012 = vpop.f32.mrb[0].mxu0
    %v2013 = vadd.f32 %v1971, %v2012
    %v2014 = vpop.f32.mrb[0].mxu0
    %v2015 = vadd.f32 %v1975, %v2014
    %v2016 = vpop.f32.mrb[0].mxu0
    %v2017 = vpop.f32.mrb[0].mxu0
    %2018 = vdwg.mxu0
    %v2019 = vmax.f32 %v2013, 0.0
    %v2020 = vmax.f32 %v2015, 0.0
    %s2021 = smul.u32 %s1794, 4
    %s2022 = sshll.u32 %s2021, 4
    %2023 = dma.done %s254, %s2022
    %v2024 = vpack.c.bf16 %v2019, %v2019
    %v2025 = vpack.c.bf16 %v2020, %v2020
    %v2026 = vld [vmem:[#allocation8] sm:$0xff]
    %v2027 = vld [vmem:[#allocation8 + $0x8] sm:$0xff]
    %v2028 = vld [vmem:[#allocation8 + $0x10] sm:$0xff]
    %v2029 = vld [vmem:[#allocation8 + $0x18] sm:$0xff]
    %v2030 = vld [vmem:[#allocation8 + $0x20] sm:$0xff]
    %v2031 = vld [vmem:[#allocation8 + $0x28] sm:$0xff]
    %v2032 = vld [vmem:[#allocation8 + $0x30] sm:$0xff]
    %v2033 = vld [vmem:[#allocation8 + $0x38] sm:$0xff]
    %v2034 = vld [vmem:[#allocation8 + $0x40] sm:$0xff]
    %v2035 = vld [vmem:[#allocation8 + $0x48] sm:$0xff]
    %v2036 = vld [vmem:[#allocation8 + $0x50] sm:$0xff]
    %v2037 = vld [vmem:[#allocation8 + $0x58] sm:$0xff]
    %v2038 = vld [vmem:[#allocation8 + $0x60] sm:$0xff]
    %v2039 = vld [vmem:[#allocation8 + $0x68] sm:$0xff]
    %v2040 = vld [vmem:[#allocation8 + $0x70] sm:$0xff]
    %v2041 = vld [vmem:[#allocation8 + $0x78] sm:$0xff]
    %v2042 = vld [vmem:[#allocation8 + $0x80] sm:$0xff]
    %v2043 = vld [vmem:[#allocation8 + $0x88] sm:$0xff]
    %v2044 = vld [vmem:[#allocation8 + $0x90] sm:$0xff]
    %v2045 = vld [vmem:[#allocation8 + $0x98] sm:$0xff]
    %v2046 = vld [vmem:[#allocation8 + $0xa0] sm:$0xff]
    %v2047 = vld [vmem:[#allocation8 + $0xa8] sm:$0xff]
    %v2048 = vld [vmem:[#allocation8 + $0xb0] sm:$0xff]
    %v2049 = vld [vmem:[#allocation8 + $0xb8] sm:$0xff]
    %v2050 = vld [vmem:[#allocation8 + $0xc0] sm:$0xff]
    %v2051 = vld [vmem:[#allocation8 + $0xc8] sm:$0xff]
    %v2052 = vld [vmem:[#allocation8 + $0xd0] sm:$0xff]
    %v2053 = vld [vmem:[#allocation8 + $0xd8] sm:$0xff]
    %v2054 = vld [vmem:[#allocation8 + $0xe0] sm:$0xff]
    %v2055 = vld [vmem:[#allocation8 + $0xe8] sm:$0xff]
    %v2056 = vld [vmem:[#allocation8 + $0xf0] sm:$0xff]
    %v2057 = vld [vmem:[#allocation8 + $0xf8] sm:$0xff]
    %v2058 = vld [vmem:[#allocation8 + $0x100] sm:$0xff]
    %v2059 = vld [vmem:[#allocation8 + $0x108] sm:$0xff]
    %v2060 = vld [vmem:[#allocation8 + $0x110] sm:$0xff]
    %v2061 = vld [vmem:[#allocation8 + $0x118] sm:$0xff]
    %v2062 = vld [vmem:[#allocation8 + $0x120] sm:$0xff]
    %v2063 = vld [vmem:[#allocation8 + $0x128] sm:$0xff]
    %v2064 = vld [vmem:[#allocation8 + $0x130] sm:$0xff]
    %v2065 = vld [vmem:[#allocation8 + $0x138] sm:$0xff]
    %v2066 = vld [vmem:[#allocation8 + $0x140] sm:$0xff]
    %v2067 = vld [vmem:[#allocation8 + $0x148] sm:$0xff]
    %v2068 = vld [vmem:[#allocation8 + $0x150] sm:$0xff]
    %v2069 = vld [vmem:[#allocation8 + $0x158] sm:$0xff]
    %v2070 = vld [vmem:[#allocation8 + $0x160] sm:$0xff]
    %v2071 = vld [vmem:[#allocation8 + $0x168] sm:$0xff]
    %v2072 = vld [vmem:[#allocation8 + $0x170] sm:$0xff]
    %v2073 = vld [vmem:[#allocation8 + $0x178] sm:$0xff]
    %v2074 = vld [vmem:[#allocation8 + $0x180] sm:$0xff]
    %v2075 = vld [vmem:[#allocation8 + $0x188] sm:$0xff]
    %v2076 = vld [vmem:[#allocation8 + $0x190] sm:$0xff]
    %v2077 = vld [vmem:[#allocation8 + $0x198] sm:$0xff]
    %v2078 = vld [vmem:[#allocation8 + $0x1a0] sm:$0xff]
    %v2079 = vld [vmem:[#allocation8 + $0x1a8] sm:$0xff]
    %v2080 = vld [vmem:[#allocation8 + $0x1b0] sm:$0xff]
    %v2081 = vld [vmem:[#allocation8 + $0x1b8] sm:$0xff]
    %v2082 = vld [vmem:[#allocation8 + $0x1c0] sm:$0xff]
    %v2083 = vld [vmem:[#allocation8 + $0x1c8] sm:$0xff]
    %v2084 = vld [vmem:[#allocation8 + $0x1d0] sm:$0xff]
    %v2085 = vld [vmem:[#allocation8 + $0x1d8] sm:$0xff]
    %v2086 = vld [vmem:[#allocation8 + $0x1e0] sm:$0xff]
    %v2087 = vld [vmem:[#allocation8 + $0x1e8] sm:$0xff]
    %v2088 = vld [vmem:[#allocation8 + $0x1f0] sm:$0xff]
    %v2089 = vld [vmem:[#allocation8 + $0x1f8] sm:$0xff]
    %v2090 = vld [vmem:[%s16] sm:$0xf]
    %v2092 = vlaneseq
    %v2093 = vshrl.u32 %v2092, 7
    %v2094 = vsub.s32 0, %v2093
    %v2095 = vrot.slane %v2090, %v2094
    %v2096 = vlaneseq
    %v2097 = vshrl.u32 %v2096, 7
    %v2098 = vsub.s32 1, %v2097
    %v2099 = vrot.slane %v2090, %v2098
    %v2100 = vlaneseq
    %v2101 = vshrl.u32 %v2100, 7
    %v2102 = vsub.s32 2, %v2101
    %v2103 = vrot.slane %v2090, %v2102
    %v2104 = vlaneseq
    %v2105 = vshrl.u32 %v2104, 7
    %v2106 = vsub.s32 3, %v2105
    %v2107 = vrot.slane %v2090, %v2106
    %2112 = vmatprep.subr.bf16.mxu0 %v2027
    %2113 = vmatpush1.bf16.msra.mxu0 %v2026
    %2114 = vmatprep.subr.bf16.mxu0 %v2031
    %2115 = vmatpush1.bf16.msra.mxu0 %v2030
    %2116 = vmatprep.subr.bf16.mxu0 %v2035
    %2117 = vmatpush1.bf16.msra.mxu0 %v2034
    %2118 = vmatprep.subr.bf16.mxu0 %v2039
    %2119 = vmatpush1.bf16.msra.mxu0 %v2038
    %2120 = vmatprep.subr.bf16.mxu0 %v2043
    %2121 = vmatpush1.bf16.msra.mxu0 %v2042
    %2122 = vmatprep.subr.bf16.mxu0 %v2047
    %2123 = vmatpush1.bf16.msra.mxu0 %v2046
    %2124 = vmatprep.subr.bf16.mxu0 %v2051
    %2125 = vmatpush1.bf16.msra.mxu0 %v2050
    %2126 = vmatprep.subr.bf16.mxu0 %v2055
    %2127 = vmatpush1.bf16.msra.mxu0 %v2054
    %2128 = vmatprep.subr.bf16.mxu0 %v2059
    %2129 = vmatpush1.bf16.msra.mxu0 %v2058
    %2130 = vmatprep.subr.bf16.mxu0 %v2063
    %2131 = vmatpush1.bf16.msra.mxu0 %v2062
    %2132 = vmatprep.subr.bf16.mxu0 %v2067
    %2133 = vmatpush1.bf16.msra.mxu0 %v2066
    %2134 = vmatprep.subr.bf16.mxu0 %v2071
    %2135 = vmatpush1.bf16.msra.mxu0 %v2070
    %2136 = vmatprep.subr.bf16.mxu0 %v2075
    %2137 = vmatpush1.bf16.msra.mxu0 %v2074
    %2138 = vmatprep.subr.bf16.mxu0 %v2079
    %2139 = vmatpush1.bf16.msra.mxu0 %v2078
    %2140 = vmatprep.subr.bf16.mxu0 %v2083
    %2141 = vmatpush1.bf16.msra.mxu0 %v2082
    %2142 = vmatprep.subr.bf16.mxu0 %v2087
    %2143 = vmatpush1.bf16.msra.mxu0 %v2086
    %2144 = vmatprep.mubr.bf16.mxu0 %v2025
    %2145 = vmatmul.mubr.bf16.gmra.mrb[0].mxu0 %v2024
    %v2146 = vpop.f32.mrb[0].mxu0
    %v2147 = vadd.f32 %v2095, %v2146
    %v2148 = vpop.f32.mrb[0].mxu0
    %v2149 = vadd.f32 %v2099, %v2148
    %v2150 = vpop.f32.mrb[0].mxu0
    %v2151 = vpop.f32.mrb[0].mxu0
    %2152 = vdwg.mxu0
    %2153 = vmatprep.subr.bf16.mxu0 %v2029
    %2154 = vmatpush1.bf16.msra.mxu0 %v2028
    %2155 = vmatprep.subr.bf16.mxu0 %v2033
    %2156 = vmatpush1.bf16.msra.mxu0 %v2032
    %2157 = vmatprep.subr.bf16.mxu0 %v2037
    %2158 = vmatpush1.bf16.msra.mxu0 %v2036
    %2159 = vmatprep.subr.bf16.mxu0 %v2041
    %2160 = vmatpush1.bf16.msra.mxu0 %v2040
    %2161 = vmatprep.subr.bf16.mxu0 %v2045
    %2162 = vmatpush1.bf16.msra.mxu0 %v2044
    %2163 = vmatprep.subr.bf16.mxu0 %v2049
    %2164 = vmatpush1.bf16.msra.mxu0 %v2048
    %2165 = vmatprep.subr.bf16.mxu0 %v2053
    %2166 = vmatpush1.bf16.msra.mxu0 %v2052
    %2167 = vmatprep.subr.bf16.mxu0 %v2057
    %2168 = vmatpush1.bf16.msra.mxu0 %v2056
    %2169 = vmatprep.subr.bf16.mxu0 %v2061
    %2170 = vmatpush1.bf16.msra.mxu0 %v2060
    %2171 = vmatprep.subr.bf16.mxu0 %v2065
    %2172 = vmatpush1.bf16.msra.mxu0 %v2064
    %2173 = vmatprep.subr.bf16.mxu0 %v2069
    %2174 = vmatpush1.bf16.msra.mxu0 %v2068
    %2175 = vmatprep.subr.bf16.mxu0 %v2073
    %2176 = vmatpush1.bf16.msra.mxu0 %v2072
    %2177 = vmatprep.subr.bf16.mxu0 %v2077
    %2178 = vmatpush1.bf16.msra.mxu0 %v2076
    %2179 = vmatprep.subr.bf16.mxu0 %v2081
    %2180 = vmatpush1.bf16.msra.mxu0 %v2080
    %2181 = vmatprep.subr.bf16.mxu0 %v2085
    %2182 = vmatpush1.bf16.msra.mxu0 %v2084
    %2183 = vmatprep.subr.bf16.mxu0 %v2089
    %2184 = vmatpush1.bf16.msra.mxu0 %v2088
    %2185 = vmatprep.mubr.bf16.mxu0 %v2025
    %2186 = vmatmul.mubr.bf16.gmra.mrb[0].mxu0 %v2024
    %v2187 = vpop.f32.mrb[0].mxu0
    %v2188 = vadd.f32 %v2103, %v2187
    %v2189 = vpop.f32.mrb[0].mxu0
    %v2190 = vadd.f32 %v2107, %v2189
    %v2191 = vpop.f32.mrb[0].mxu0
    %v2192 = vpop.f32.mrb[0].mxu0
    %2193 = vdwg.mxu0
    %v2194 = vmax.f32 %v2147, 0.0
    %v2195 = vmax.f32 %v2149, 0.0
    %v2196 = vmax.f32 %v2188, 0.0
    %v2197 = vmax.f32 %v2190, 0.0
    %s2198 = sshll.u32 %s364, 4
    %2199 = dma.done %s289, %s2198
    %v2200 = vpack.c.bf16 %v2194, %v2194
    %v2201 = vpack.c.bf16 %v2195, %v2195
    %v2202 = vpack.c.bf16 %v2196, %v2196
    %v2203 = vpack.c.bf16 %v2197, %v2197
    %v2204 = vld [vmem:[#allocation9] sm:$0xff]
    %v2205 = vld [vmem:[#allocation9 + $0x8] sm:$0xff]
    %v2206 = vld [vmem:[#allocation9 + $0x10] sm:$0xff]
    %v2207 = vld [vmem:[#allocation9 + $0x18] sm:$0xff]
    %v2208 = vld [vmem:[#allocation9 + $0x20] sm:$0xff]
    %v2209 = vld [vmem:[#allocation9 + $0x28] sm:$0xff]
    %v2210 = vld [vmem:[#allocation9 + $0x30] sm:$0xff]
    %v2211 = vld [vmem:[#allocation9 + $0x38] sm:$0xff]
    %v2212 = vld [vmem:[#allocation9 + $0x40] sm:$0xff]
    %v2213 = vld [vmem:[#allocation9 + $0x48] sm:$0xff]
    %v2214 = vld [vmem:[#allocation9 + $0x50] sm:$0xff]
    %v2215 = vld [vmem:[#allocation9 + $0x58] sm:$0xff]
    %v2216 = vld [vmem:[#allocation9 + $0x60] sm:$0xff]
    %v2217 = vld [vmem:[#allocation9 + $0x68] sm:$0xff]
    %v2218 = vld [vmem:[#allocation9 + $0x70] sm:$0xff]
    %v2219 = vld [vmem:[#allocation9 + $0x78] sm:$0xff]
    %v2220 = vld [vmem:[#allocation9 + $0x80] sm:$0xff]
    %v2221 = vld [vmem:[#allocation9 + $0x88] sm:$0xff]
    %v2222 = vld [vmem:[#allocation9 + $0x90] sm:$0xff]
    %v2223 = vld [vmem:[#allocation9 + $0x98] sm:$0xff]
    %v2224 = vld [vmem:[#allocation9 + $0xa0] sm:$0xff]
    %v2225 = vld [vmem:[#allocation9 + $0xa8] sm:$0xff]
    %v2226 = vld [vmem:[#allocation9 + $0xb0] sm:$0xff]
    %v2227 = vld [vmem:[#allocation9 + $0xb8] sm:$0xff]
    %v2228 = vld [vmem:[#allocation9 + $0xc0] sm:$0xff]
    %v2229 = vld [vmem:[#allocation9 + $0xc8] sm:$0xff]
    %v2230 = vld [vmem:[#allocation9 + $0xd0] sm:$0xff]
    %v2231 = vld [vmem:[#allocation9 + $0xd8] sm:$0xff]
    %v2232 = vld [vmem:[#allocation9 + $0xe0] sm:$0xff]
    %v2233 = vld [vmem:[#allocation9 + $0xe8] sm:$0xff]
    %v2234 = vld [vmem:[#allocation9 + $0xf0] sm:$0xff]
    %v2235 = vld [vmem:[#allocation9 + $0xf8] sm:$0xff]
    %v2236 = vld [vmem:[#allocation9 + $0x100] sm:$0xff]
    %v2237 = vld [vmem:[#allocation9 + $0x108] sm:$0xff]
    %v2238 = vld [vmem:[#allocation9 + $0x110] sm:$0xff]
    %v2239 = vld [vmem:[#allocation9 + $0x118] sm:$0xff]
    %v2240 = vld [vmem:[#allocation9 + $0x120] sm:$0xff]
    %v2241 = vld [vmem:[#allocation9 + $0x128] sm:$0xff]
    %v2242 = vld [vmem:[#allocation9 + $0x130] sm:$0xff]
    %v2243 = vld [vmem:[#allocation9 + $0x138] sm:$0xff]
    %v2244 = vld [vmem:[#allocation9 + $0x140] sm:$0xff]
    %v2245 = vld [vmem:[#allocation9 + $0x148] sm:$0xff]
    %v2246 = vld [vmem:[#allocation9 + $0x150] sm:$0xff]
    %v2247 = vld [vmem:[#allocation9 + $0x158] sm:$0xff]
    %v2248 = vld [vmem:[#allocation9 + $0x160] sm:$0xff]
    %v2249 = vld [vmem:[#allocation9 + $0x168] sm:$0xff]
    %v2250 = vld [vmem:[#allocation9 + $0x170] sm:$0xff]
    %v2251 = vld [vmem:[#allocation9 + $0x178] sm:$0xff]
    %v2252 = vld [vmem:[#allocation9 + $0x180] sm:$0xff]
    %v2253 = vld [vmem:[#allocation9 + $0x188] sm:$0xff]
    %v2254 = vld [vmem:[#allocation9 + $0x190] sm:$0xff]
    %v2255 = vld [vmem:[#allocation9 + $0x198] sm:$0xff]
    %v2256 = vld [vmem:[#allocation9 + $0x1a0] sm:$0xff]
    %v2257 = vld [vmem:[#allocation9 + $0x1a8] sm:$0xff]
    %v2258 = vld [vmem:[#allocation9 + $0x1b0] sm:$0xff]
    %v2259 = vld [vmem:[#allocation9 + $0x1b8] sm:$0xff]
    %v2260 = vld [vmem:[#allocation9 + $0x1c0] sm:$0xff]
    %v2261 = vld [vmem:[#allocation9 + $0x1c8] sm:$0xff]
    %v2262 = vld [vmem:[#allocation9 + $0x1d0] sm:$0xff]
    %v2263 = vld [vmem:[#allocation9 + $0x1d8] sm:$0xff]
    %v2264 = vld [vmem:[#allocation9 + $0x1e0] sm:$0xff]
    %v2265 = vld [vmem:[#allocation9 + $0x1e8] sm:$0xff]
    %v2266 = vld [vmem:[#allocation9 + $0x1f0] sm:$0xff]
    %v2267 = vld [vmem:[#allocation9 + $0x1f8] sm:$0xff]
    %v2268 = vld [vmem:[#allocation9 + $0x200] sm:$0xff]
    %v2269 = vld [vmem:[#allocation9 + $0x208] sm:$0xff]
    %v2270 = vld [vmem:[#allocation9 + $0x210] sm:$0xff]
    %v2271 = vld [vmem:[#allocation9 + $0x218] sm:$0xff]
    %v2272 = vld [vmem:[#allocation9 + $0x220] sm:$0xff]
    %v2273 = vld [vmem:[#allocation9 + $0x228] sm:$0xff]
    %v2274 = vld [vmem:[#allocation9 + $0x230] sm:$0xff]
    %v2275 = vld [vmem:[#allocation9 + $0x238] sm:$0xff]
    %v2276 = vld [vmem:[#allocation9 + $0x240] sm:$0xff]
    %v2277 = vld [vmem:[#allocation9 + $0x248] sm:$0xff]
    %v2278 = vld [vmem:[#allocation9 + $0x250] sm:$0xff]
    %v2279 = vld [vmem:[#allocation9 + $0x258] sm:$0xff]
    %v2280 = vld [vmem:[#allocation9 + $0x260] sm:$0xff]
    %v2281 = vld [vmem:[#allocation9 + $0x268] sm:$0xff]
    %v2282 = vld [vmem:[#allocation9 + $0x270] sm:$0xff]
    %v2283 = vld [vmem:[#allocation9 + $0x278] sm:$0xff]
    %v2284 = vld [vmem:[#allocation9 + $0x280] sm:$0xff]
    %v2285 = vld [vmem:[#allocation9 + $0x288] sm:$0xff]
    %v2286 = vld [vmem:[#allocation9 + $0x290] sm:$0xff]
    %v2287 = vld [vmem:[#allocation9 + $0x298] sm:$0xff]
    %v2288 = vld [vmem:[#allocation9 + $0x2a0] sm:$0xff]
    %v2289 = vld [vmem:[#allocation9 + $0x2a8] sm:$0xff]
    %v2290 = vld [vmem:[#allocation9 + $0x2b0] sm:$0xff]
    %v2291 = vld [vmem:[#allocation9 + $0x2b8] sm:$0xff]
    %v2292 = vld [vmem:[#allocation9 + $0x2c0] sm:$0xff]
    %v2293 = vld [vmem:[#allocation9 + $0x2c8] sm:$0xff]
    %v2294 = vld [vmem:[#allocation9 + $0x2d0] sm:$0xff]
    %v2295 = vld [vmem:[#allocation9 + $0x2d8] sm:$0xff]
    %v2296 = vld [vmem:[#allocation9 + $0x2e0] sm:$0xff]
    %v2297 = vld [vmem:[#allocation9 + $0x2e8] sm:$0xff]
    %v2298 = vld [vmem:[#allocation9 + $0x2f0] sm:$0xff]
    %v2299 = vld [vmem:[#allocation9 + $0x2f8] sm:$0xff]
    %v2300 = vld [vmem:[#allocation9 + $0x300] sm:$0xff]
    %v2301 = vld [vmem:[#allocation9 + $0x308] sm:$0xff]
    %v2302 = vld [vmem:[#allocation9 + $0x310] sm:$0xff]
    %v2303 = vld [vmem:[#allocation9 + $0x318] sm:$0xff]
    %v2304 = vld [vmem:[#allocation9 + $0x320] sm:$0xff]
    %v2305 = vld [vmem:[#allocation9 + $0x328] sm:$0xff]
    %v2306 = vld [vmem:[#allocation9 + $0x330] sm:$0xff]
    %v2307 = vld [vmem:[#allocation9 + $0x338] sm:$0xff]
    %v2308 = vld [vmem:[#allocation9 + $0x340] sm:$0xff]
    %v2309 = vld [vmem:[#allocation9 + $0x348] sm:$0xff]
    %v2310 = vld [vmem:[#allocation9 + $0x350] sm:$0xff]
    %v2311 = vld [vmem:[#allocation9 + $0x358] sm:$0xff]
    %v2312 = vld [vmem:[#allocation9 + $0x360] sm:$0xff]
    %v2313 = vld [vmem:[#allocation9 + $0x368] sm:$0xff]
    %v2314 = vld [vmem:[#allocation9 + $0x370] sm:$0xff]
    %v2315 = vld [vmem:[#allocation9 + $0x378] sm:$0xff]
    %v2316 = vld [vmem:[#allocation9 + $0x380] sm:$0xff]
    %v2317 = vld [vmem:[#allocation9 + $0x388] sm:$0xff]
    %v2318 = vld [vmem:[#allocation9 + $0x390] sm:$0xff]
    %v2319 = vld [vmem:[#allocation9 + $0x398] sm:$0xff]
    %v2320 = vld [vmem:[#allocation9 + $0x3a0] sm:$0xff]
    %v2321 = vld [vmem:[#allocation9 + $0x3a8] sm:$0xff]
    %v2322 = vld [vmem:[#allocation9 + $0x3b0] sm:$0xff]
    %v2323 = vld [vmem:[#allocation9 + $0x3b8] sm:$0xff]
    %v2324 = vld [vmem:[#allocation9 + $0x3c0] sm:$0xff]
    %v2325 = vld [vmem:[#allocation9 + $0x3c8] sm:$0xff]
    %v2326 = vld [vmem:[#allocation9 + $0x3d0] sm:$0xff]
    %v2327 = vld [vmem:[#allocation9 + $0x3d8] sm:$0xff]
    %v2328 = vld [vmem:[#allocation9 + $0x3e0] sm:$0xff]
    %v2329 = vld [vmem:[#allocation9 + $0x3e8] sm:$0xff]
    %v2330 = vld [vmem:[#allocation9 + $0x3f0] sm:$0xff]
    %v2331 = vld [vmem:[#allocation9 + $0x3f8] sm:$0xff]
    %v2332 = vld [vmem:[#allocation9 + $0x400] sm:$0xff]
    %v2333 = vld [vmem:[#allocation9 + $0x408] sm:$0xff]
    %v2334 = vld [vmem:[#allocation9 + $0x410] sm:$0xff]
    %v2335 = vld [vmem:[#allocation9 + $0x418] sm:$0xff]
    %v2336 = vld [vmem:[#allocation9 + $0x420] sm:$0xff]
    %v2337 = vld [vmem:[#allocation9 + $0x428] sm:$0xff]
    %v2338 = vld [vmem:[#allocation9 + $0x430] sm:$0xff]
    %v2339 = vld [vmem:[#allocation9 + $0x438] sm:$0xff]
    %v2340 = vld [vmem:[#allocation9 + $0x440] sm:$0xff]
    %v2341 = vld [vmem:[#allocation9 + $0x448] sm:$0xff]
    %v2342 = vld [vmem:[#allocation9 + $0x450] sm:$0xff]
    %v2343 = vld [vmem:[#allocation9 + $0x458] sm:$0xff]
    %v2344 = vld [vmem:[#allocation9 + $0x460] sm:$0xff]
    %v2345 = vld [vmem:[#allocation9 + $0x468] sm:$0xff]
    %v2346 = vld [vmem:[#allocation9 + $0x470] sm:$0xff]
    %v2347 = vld [vmem:[#allocation9 + $0x478] sm:$0xff]
    %v2348 = vld [vmem:[#allocation9 + $0x480] sm:$0xff]
    %v2349 = vld [vmem:[#allocation9 + $0x488] sm:$0xff]
    %v2350 = vld [vmem:[#allocation9 + $0x490] sm:$0xff]
    %v2351 = vld [vmem:[#allocation9 + $0x498] sm:$0xff]
    %v2352 = vld [vmem:[#allocation9 + $0x4a0] sm:$0xff]
    %v2353 = vld [vmem:[#allocation9 + $0x4a8] sm:$0xff]
    %v2354 = vld [vmem:[#allocation9 + $0x4b0] sm:$0xff]
    %v2355 = vld [vmem:[#allocation9 + $0x4b8] sm:$0xff]
    %v2356 = vld [vmem:[#allocation9 + $0x4c0] sm:$0xff]
    %v2357 = vld [vmem:[#allocation9 + $0x4c8] sm:$0xff]
    %v2358 = vld [vmem:[#allocation9 + $0x4d0] sm:$0xff]
    %v2359 = vld [vmem:[#allocation9 + $0x4d8] sm:$0xff]
    %v2360 = vld [vmem:[#allocation9 + $0x4e0] sm:$0xff]
    %v2361 = vld [vmem:[#allocation9 + $0x4e8] sm:$0xff]
    %v2362 = vld [vmem:[#allocation9 + $0x4f0] sm:$0xff]
    %v2363 = vld [vmem:[#allocation9 + $0x4f8] sm:$0xff]
    %v2364 = vld [vmem:[#allocation9 + $0x500] sm:$0xff]
    %v2365 = vld [vmem:[#allocation9 + $0x508] sm:$0xff]
    %v2366 = vld [vmem:[#allocation9 + $0x510] sm:$0xff]
    %v2367 = vld [vmem:[#allocation9 + $0x518] sm:$0xff]
    %v2368 = vld [vmem:[#allocation9 + $0x520] sm:$0xff]
    %v2369 = vld [vmem:[#allocation9 + $0x528] sm:$0xff]
    %v2370 = vld [vmem:[#allocation9 + $0x530] sm:$0xff]
    %v2371 = vld [vmem:[#allocation9 + $0x538] sm:$0xff]
    %v2372 = vld [vmem:[#allocation9 + $0x540] sm:$0xff]
    %v2373 = vld [vmem:[#allocation9 + $0x548] sm:$0xff]
    %v2374 = vld [vmem:[#allocation9 + $0x550] sm:$0xff]
    %v2375 = vld [vmem:[#allocation9 + $0x558] sm:$0xff]
    %v2376 = vld [vmem:[#allocation9 + $0x560] sm:$0xff]
    %v2377 = vld [vmem:[#allocation9 + $0x568] sm:$0xff]
    %v2378 = vld [vmem:[#allocation9 + $0x570] sm:$0xff]
    %v2379 = vld [vmem:[#allocation9 + $0x578] sm:$0xff]
    %v2380 = vld [vmem:[#allocation9 + $0x580] sm:$0xff]
    %v2381 = vld [vmem:[#allocation9 + $0x588] sm:$0xff]
    %v2382 = vld [vmem:[#allocation9 + $0x590] sm:$0xff]
    %v2383 = vld [vmem:[#allocation9 + $0x598] sm:$0xff]
    %v2384 = vld [vmem:[#allocation9 + $0x5a0] sm:$0xff]
    %v2385 = vld [vmem:[#allocation9 + $0x5a8] sm:$0xff]
    %v2386 = vld [vmem:[#allocation9 + $0x5b0] sm:$0xff]
    %v2387 = vld [vmem:[#allocation9 + $0x5b8] sm:$0xff]
    %v2388 = vld [vmem:[#allocation9 + $0x5c0] sm:$0xff]
    %v2389 = vld [vmem:[#allocation9 + $0x5c8] sm:$0xff]
    %v2390 = vld [vmem:[#allocation9 + $0x5d0] sm:$0xff]
    %v2391 = vld [vmem:[#allocation9 + $0x5d8] sm:$0xff]
    %v2392 = vld [vmem:[#allocation9 + $0x5e0] sm:$0xff]
    %v2393 = vld [vmem:[#allocation9 + $0x5e8] sm:$0xff]
    %v2394 = vld [vmem:[#allocation9 + $0x5f0] sm:$0xff]
    %v2395 = vld [vmem:[#allocation9 + $0x5f8] sm:$0xff]
    %v2396 = vld [vmem:[#allocation9 + $0x600] sm:$0xff]
    %v2397 = vld [vmem:[#allocation9 + $0x608] sm:$0xff]
    %v2398 = vld [vmem:[#allocation9 + $0x610] sm:$0xff]
    %v2399 = vld [vmem:[#allocation9 + $0x618] sm:$0xff]
    %v2400 = vld [vmem:[#allocation9 + $0x620] sm:$0xff]
    %v2401 = vld [vmem:[#allocation9 + $0x628] sm:$0xff]
    %v2402 = vld [vmem:[#allocation9 + $0x630] sm:$0xff]
    %v2403 = vld [vmem:[#allocation9 + $0x638] sm:$0xff]
    %v2404 = vld [vmem:[#allocation9 + $0x640] sm:$0xff]
    %v2405 = vld [vmem:[#allocation9 + $0x648] sm:$0xff]
    %v2406 = vld [vmem:[#allocation9 + $0x650] sm:$0xff]
    %v2407 = vld [vmem:[#allocation9 + $0x658] sm:$0xff]
    %v2408 = vld [vmem:[#allocation9 + $0x660] sm:$0xff]
    %v2409 = vld [vmem:[#allocation9 + $0x668] sm:$0xff]
    %v2410 = vld [vmem:[#allocation9 + $0x670] sm:$0xff]
    %v2411 = vld [vmem:[#allocation9 + $0x678] sm:$0xff]
    %v2412 = vld [vmem:[#allocation9 + $0x680] sm:$0xff]
    %v2413 = vld [vmem:[#allocation9 + $0x688] sm:$0xff]
    %v2414 = vld [vmem:[#allocation9 + $0x690] sm:$0xff]
    %v2415 = vld [vmem:[#allocation9 + $0x698] sm:$0xff]
    %v2416 = vld [vmem:[#allocation9 + $0x6a0] sm:$0xff]
    %v2417 = vld [vmem:[#allocation9 + $0x6a8] sm:$0xff]
    %v2418 = vld [vmem:[#allocation9 + $0x6b0] sm:$0xff]
    %v2419 = vld [vmem:[#allocation9 + $0x6b8] sm:$0xff]
    %v2420 = vld [vmem:[#allocation9 + $0x6c0] sm:$0xff]
    %v2421 = vld [vmem:[#allocation9 + $0x6c8] sm:$0xff]
    %v2422 = vld [vmem:[#allocation9 + $0x6d0] sm:$0xff]
    %v2423 = vld [vmem:[#allocation9 + $0x6d8] sm:$0xff]
    %v2424 = vld [vmem:[#allocation9 + $0x6e0] sm:$0xff]
    %v2425 = vld [vmem:[#allocation9 + $0x6e8] sm:$0xff]
    %v2426 = vld [vmem:[#allocation9 + $0x6f0] sm:$0xff]
    %v2427 = vld [vmem:[#allocation9 + $0x6f8] sm:$0xff]
    %v2428 = vld [vmem:[#allocation9 + $0x700] sm:$0xff]
    %v2429 = vld [vmem:[#allocation9 + $0x708] sm:$0xff]
    %v2430 = vld [vmem:[#allocation9 + $0x710] sm:$0xff]
    %v2431 = vld [vmem:[#allocation9 + $0x718] sm:$0xff]
    %v2432 = vld [vmem:[#allocation9 + $0x720] sm:$0xff]
    %v2433 = vld [vmem:[#allocation9 + $0x728] sm:$0xff]
    %v2434 = vld [vmem:[#allocation9 + $0x730] sm:$0xff]
    %v2435 = vld [vmem:[#allocation9 + $0x738] sm:$0xff]
    %v2436 = vld [vmem:[#allocation9 + $0x740] sm:$0xff]
    %v2437 = vld [vmem:[#allocation9 + $0x748] sm:$0xff]
    %v2438 = vld [vmem:[#allocation9 + $0x750] sm:$0xff]
    %v2439 = vld [vmem:[#allocation9 + $0x758] sm:$0xff]
    %v2440 = vld [vmem:[#allocation9 + $0x760] sm:$0xff]
    %v2441 = vld [vmem:[#allocation9 + $0x768] sm:$0xff]
    %v2442 = vld [vmem:[#allocation9 + $0x770] sm:$0xff]
    %v2443 = vld [vmem:[#allocation9 + $0x778] sm:$0xff]
    %v2444 = vld [vmem:[#allocation9 + $0x780] sm:$0xff]
    %v2445 = vld [vmem:[#allocation9 + $0x788] sm:$0xff]
    %v2446 = vld [vmem:[#allocation9 + $0x790] sm:$0xff]
    %v2447 = vld [vmem:[#allocation9 + $0x798] sm:$0xff]
    %v2448 = vld [vmem:[#allocation9 + $0x7a0] sm:$0xff]
    %v2449 = vld [vmem:[#allocation9 + $0x7a8] sm:$0xff]
    %v2450 = vld [vmem:[#allocation9 + $0x7b0] sm:$0xff]
    %v2451 = vld [vmem:[#allocation9 + $0x7b8] sm:$0xff]
    %v2452 = vld [vmem:[#allocation9 + $0x7c0] sm:$0xff]
    %v2453 = vld [vmem:[#allocation9 + $0x7c8] sm:$0xff]
    %v2454 = vld [vmem:[#allocation9 + $0x7d0] sm:$0xff]
    %v2455 = vld [vmem:[#allocation9 + $0x7d8] sm:$0xff]
    %v2456 = vld [vmem:[#allocation9 + $0x7e0] sm:$0xff]
    %v2457 = vld [vmem:[#allocation9 + $0x7e8] sm:$0xff]
    %v2458 = vld [vmem:[#allocation9 + $0x7f0] sm:$0xff]
    %v2459 = vld [vmem:[#allocation9 + $0x7f8] sm:$0xff]
    %v2460 = vld [vmem:[%s17] sm:$0xff]
    %v2462 = vlaneseq
    %v2463 = vshrl.u32 %v2462, 7
    %v2464 = vsub.s32 0, %v2463
    %v2465 = vrot.slane %v2460, %v2464
    %v2466 = vlaneseq
    %v2467 = vshrl.u32 %v2466, 7
    %v2468 = vsub.s32 1, %v2467
    %v2469 = vrot.slane %v2460, %v2468
    %v2470 = vlaneseq
    %v2471 = vshrl.u32 %v2470, 7
    %v2472 = vsub.s32 2, %v2471
    %v2473 = vrot.slane %v2460, %v2472
    %v2474 = vlaneseq
    %v2475 = vshrl.u32 %v2474, 7
    %v2476 = vsub.s32 3, %v2475
    %v2477 = vrot.slane %v2460, %v2476
    %v2478 = vlaneseq
    %v2479 = vshrl.u32 %v2478, 7
    %v2480 = vsub.s32 4, %v2479
    %v2481 = vrot.slane %v2460, %v2480
    %v2482 = vlaneseq
    %v2483 = vshrl.u32 %v2482, 7
    %v2484 = vsub.s32 5, %v2483
    %v2485 = vrot.slane %v2460, %v2484
    %v2486 = vlaneseq
    %v2487 = vshrl.u32 %v2486, 7
    %v2488 = vsub.s32 6, %v2487
    %v2489 = vrot.slane %v2460, %v2488
    %v2490 = vlaneseq
    %v2491 = vshrl.u32 %v2490, 7
    %v2492 = vsub.s32 7, %v2491
    %v2493 = vrot.slane %v2460, %v2492
    %2502 = vmatprep.subr.bf16.mxu0 %v2205
    %2503 = vmatpush1.bf16.msra.mxu0 %v2204
    %2504 = vmatprep.subr.bf16.mxu0 %v2213
    %2505 = vmatpush1.bf16.msra.mxu0 %v2212
    %2506 = vmatprep.subr.bf16.mxu0 %v2221
    %2507 = vmatpush1.bf16.msra.mxu0 %v2220
    %2508 = vmatprep.subr.bf16.mxu0 %v2229
    %2509 = vmatpush1.bf16.msra.mxu0 %v2228
    %2510 = vmatprep.subr.bf16.mxu0 %v2237
    %2511 = vmatpush1.bf16.msra.mxu0 %v2236
    %2512 = vmatprep.subr.bf16.mxu0 %v2245
    %2513 = vmatpush1.bf16.msra.mxu0 %v2244
    %2514 = vmatprep.subr.bf16.mxu0 %v2253
    %2515 = vmatpush1.bf16.msra.mxu0 %v2252
    %2516 = vmatprep.subr.bf16.mxu0 %v2261
    %2517 = vmatpush1.bf16.msra.mxu0 %v2260
    %2518 = vmatprep.subr.bf16.mxu0 %v2269
    %2519 = vmatpush1.bf16.msra.mxu0 %v2268
    %2520 = vmatprep.subr.bf16.mxu0 %v2277
    %2521 = vmatpush1.bf16.msra.mxu0 %v2276
    %2522 = vmatprep.subr.bf16.mxu0 %v2285
    %2523 = vmatpush1.bf16.msra.mxu0 %v2284
    %2524 = vmatprep.subr.bf16.mxu0 %v2293
    %2525 = vmatpush1.bf16.msra.mxu0 %v2292
    %2526 = vmatprep.subr.bf16.mxu0 %v2301
    %2527 = vmatpush1.bf16.msra.mxu0 %v2300
    %2528 = vmatprep.subr.bf16.mxu0 %v2309
    %2529 = vmatpush1.bf16.msra.mxu0 %v2308
    %2530 = vmatprep.subr.bf16.mxu0 %v2317
    %2531 = vmatpush1.bf16.msra.mxu0 %v2316
    %2532 = vmatprep.subr.bf16.mxu0 %v2325
    %2533 = vmatpush1.bf16.msra.mxu0 %v2324
    %2534 = vmatprep.mubr.bf16.mxu0 %v2201
    %2535 = vmatmul.mubr.bf16.gmra.mrb[0].mxu0 %v2200
    %v2536 = vpop.f32.mrb[0].mxu0
    %v2537 = vadd.f32 %v2465, %v2536
    %v2538 = vpop.f32.mrb[0].mxu0
    %v2539 = vadd.f32 %v2469, %v2538
    %v2540 = vpop.f32.mrb[0].mxu0
    %v2541 = vpop.f32.mrb[0].mxu0
    %2542 = vdwg.mxu0
    %2543 = vmatprep.subr.bf16.mxu0 %v2333
    %2544 = vmatpush1.bf16.msra.mxu0 %v2332
    %2545 = vmatprep.subr.bf16.mxu0 %v2341
    %2546 = vmatpush1.bf16.msra.mxu0 %v2340
    %2547 = vmatprep.subr.bf16.mxu0 %v2349
    %2548 = vmatpush1.bf16.msra.mxu0 %v2348
    %2549 = vmatprep.subr.bf16.mxu0 %v2357
    %2550 = vmatpush1.bf16.msra.mxu0 %v2356
    %2551 = vmatprep.subr.bf16.mxu0 %v2365
    %2552 = vmatpush1.bf16.msra.mxu0 %v2364
    %2553 = vmatprep.subr.bf16.mxu0 %v2373
    %2554 = vmatpush1.bf16.msra.mxu0 %v2372
    %2555 = vmatprep.subr.bf16.mxu0 %v2381
    %2556 = vmatpush1.bf16.msra.mxu0 %v2380
    %2557 = vmatprep.subr.bf16.mxu0 %v2389
    %2558 = vmatpush1.bf16.msra.mxu0 %v2388
    %2559 = vmatprep.subr.bf16.mxu0 %v2397
    %2560 = vmatpush1.bf16.msra.mxu0 %v2396
    %2561 = vmatprep.subr.bf16.mxu0 %v2405
    %2562 = vmatpush1.bf16.msra.mxu0 %v2404
    %2563 = vmatprep.subr.bf16.mxu0 %v2413
    %2564 = vmatpush1.bf16.msra.mxu0 %v2412
    %2565 = vmatprep.subr.bf16.mxu0 %v2421
    %2566 = vmatpush1.bf16.msra.mxu0 %v2420
    %2567 = vmatprep.subr.bf16.mxu0 %v2429
    %2568 = vmatpush1.bf16.msra.mxu0 %v2428
    %2569 = vmatprep.subr.bf16.mxu0 %v2437
    %2570 = vmatpush1.bf16.msra.mxu0 %v2436
    %2571 = vmatprep.subr.bf16.mxu0 %v2445
    %2572 = vmatpush1.bf16.msra.mxu0 %v2444
    %2573 = vmatprep.subr.bf16.mxu0 %v2453
    %2574 = vmatpush1.bf16.msra.mxu0 %v2452
    %2575 = vmatprep.mubr.bf16.mxu0 %v2203
    %2576 = vmatmul.mubr.bf16.gmra.mrb[0].mxu0 %v2202
    %v2577 = vpop.f32.mrb[0].mxu0
    %v2578 = vadd.f32 %v2537, %v2577
    %v2579 = vpop.f32.mrb[0].mxu0
    %v2580 = vadd.f32 %v2539, %v2579
    %v2581 = vpop.f32.mrb[0].mxu0
    %v2582 = vpop.f32.mrb[0].mxu0
    %2583 = vdwg.mxu0
    %2584 = vmatprep.subr.bf16.mxu0 %v2207
    %2585 = vmatpush1.bf16.msra.mxu0 %v2206
    %2586 = vmatprep.subr.bf16.mxu0 %v2215
    %2587 = vmatpush1.bf16.msra.mxu0 %v2214
    %2588 = vmatprep.subr.bf16.mxu0 %v2223
    %2589 = vmatpush1.bf16.msra.mxu0 %v2222
    %2590 = vmatprep.subr.bf16.mxu0 %v2231
    %2591 = vmatpush1.bf16.msra.mxu0 %v2230
    %2592 = vmatprep.subr.bf16.mxu0 %v2239
    %2593 = vmatpush1.bf16.msra.mxu0 %v2238
    %2594 = vmatprep.subr.bf16.mxu0 %v2247
    %2595 = vmatpush1.bf16.msra.mxu0 %v2246
    %2596 = vmatprep.subr.bf16.mxu0 %v2255
    %2597 = vmatpush1.bf16.msra.mxu0 %v2254
    %2598 = vmatprep.subr.bf16.mxu0 %v2263
    %2599 = vmatpush1.bf16.msra.mxu0 %v2262
    %2600 = vmatprep.subr.bf16.mxu0 %v2271
    %2601 = vmatpush1.bf16.msra.mxu0 %v2270
    %2602 = vmatprep.subr.bf16.mxu0 %v2279
    %2603 = vmatpush1.bf16.msra.mxu0 %v2278
    %2604 = vmatprep.subr.bf16.mxu0 %v2287
    %2605 = vmatpush1.bf16.msra.mxu0 %v2286
    %2606 = vmatprep.subr.bf16.mxu0 %v2295
    %2607 = vmatpush1.bf16.msra.mxu0 %v2294
    %2608 = vmatprep.subr.bf16.mxu0 %v2303
    %2609 = vmatpush1.bf16.msra.mxu0 %v2302
    %2610 = vmatprep.subr.bf16.mxu0 %v2311
    %2611 = vmatpush1.bf16.msra.mxu0 %v2310
    %2612 = vmatprep.subr.bf16.mxu0 %v2319
    %2613 = vmatpush1.bf16.msra.mxu0 %v2318
    %2614 = vmatprep.subr.bf16.mxu0 %v2327
    %2615 = vmatpush1.bf16.msra.mxu0 %v2326
    %2616 = vmatprep.mubr.bf16.mxu0 %v2201
    %2617 = vmatmul.mubr.bf16.gmra.mrb[0].mxu0 %v2200
    %v2618 = vpop.f32.mrb[0].mxu0
    %v2619 = vadd.f32 %v2473, %v2618
    %v2620 = vpop.f32.mrb[0].mxu0
    %v2621 = vadd.f32 %v2477, %v2620
    %v2622 = vpop.f32.mrb[0].mxu0
    %v2623 = vpop.f32.mrb[0].mxu0
    %2624 = vdwg.mxu0
    %2625 = vmatprep.subr.bf16.mxu0 %v2335
    %2626 = vmatpush1.bf16.msra.mxu0 %v2334
    %2627 = vmatprep.subr.bf16.mxu0 %v2343
    %2628 = vmatpush1.bf16.msra.mxu0 %v2342
    %2629 = vmatprep.subr.bf16.mxu0 %v2351
    %2630 = vmatpush1.bf16.msra.mxu0 %v2350
    %2631 = vmatprep.subr.bf16.mxu0 %v2359
    %2632 = vmatpush1.bf16.msra.mxu0 %v2358
    %2633 = vmatprep.subr.bf16.mxu0 %v2367
    %2634 = vmatpush1.bf16.msra.mxu0 %v2366
    %2635 = vmatprep.subr.bf16.mxu0 %v2375
    %2636 = vmatpush1.bf16.msra.mxu0 %v2374
    %2637 = vmatprep.subr.bf16.mxu0 %v2383
    %2638 = vmatpush1.bf16.msra.mxu0 %v2382
    %2639 = vmatprep.subr.bf16.mxu0 %v2391
    %2640 = vmatpush1.bf16.msra.mxu0 %v2390
    %2641 = vmatprep.subr.bf16.mxu0 %v2399
    %2642 = vmatpush1.bf16.msra.mxu0 %v2398
    %2643 = vmatprep.subr.bf16.mxu0 %v2407
    %2644 = vmatpush1.bf16.msra.mxu0 %v2406
    %2645 = vmatprep.subr.bf16.mxu0 %v2415
    %2646 = vmatpush1.bf16.msra.mxu0 %v2414
    %2647 = vmatprep.subr.bf16.mxu0 %v2423
    %2648 = vmatpush1.bf16.msra.mxu0 %v2422
    %2649 = vmatprep.subr.bf16.mxu0 %v2431
    %2650 = vmatpush1.bf16.msra.mxu0 %v2430
    %2651 = vmatprep.subr.bf16.mxu0 %v2439
    %2652 = vmatpush1.bf16.msra.mxu0 %v2438
    %2653 = vmatprep.subr.bf16.mxu0 %v2447
    %2654 = vmatpush1.bf16.msra.mxu0 %v2446
    %2655 = vmatprep.subr.bf16.mxu0 %v2455
    %2656 = vmatpush1.bf16.msra.mxu0 %v2454
    %2657 = vmatprep.mubr.bf16.mxu0 %v2203
    %2658 = vmatmul.mubr.bf16.gmra.mrb[0].mxu0 %v2202
    %v2659 = vpop.f32.mrb[0].mxu0
    %v2660 = vadd.f32 %v2619, %v2659
    %v2661 = vpop.f32.mrb[0].mxu0
    %v2662 = vadd.f32 %v2621, %v2661
    %v2663 = vpop.f32.mrb[0].mxu0
    %v2664 = vpop.f32.mrb[0].mxu0
    %2665 = vdwg.mxu0
    %2666 = vmatprep.subr.bf16.mxu0 %v2209
    %2667 = vmatpush1.bf16.msra.mxu0 %v2208
    %2668 = vmatprep.subr.bf16.mxu0 %v2217
    %2669 = vmatpush1.bf16.msra.mxu0 %v2216
    %2670 = vmatprep.subr.bf16.mxu0 %v2225
    %2671 = vmatpush1.bf16.msra.mxu0 %v2224
    %2672 = vmatprep.subr.bf16.mxu0 %v2233
    %2673 = vmatpush1.bf16.msra.mxu0 %v2232
    %2674 = vmatprep.subr.bf16.mxu0 %v2241
    %2675 = vmatpush1.bf16.msra.mxu0 %v2240
    %2676 = vmatprep.subr.bf16.mxu0 %v2249
    %2677 = vmatpush1.bf16.msra.mxu0 %v2248
    %2678 = vmatprep.subr.bf16.mxu0 %v2257
    %2679 = vmatpush1.bf16.msra.mxu0 %v2256
    %2680 = vmatprep.subr.bf16.mxu0 %v2265
    %2681 = vmatpush1.bf16.msra.mxu0 %v2264
    %2682 = vmatprep.subr.bf16.mxu0 %v2273
    %2683 = vmatpush1.bf16.msra.mxu0 %v2272
    %2684 = vmatprep.subr.bf16.mxu0 %v2281
    %2685 = vmatpush1.bf16.msra.mxu0 %v2280
    %2686 = vmatprep.subr.bf16.mxu0 %v2289
    %2687 = vmatpush1.bf16.msra.mxu0 %v2288
    %2688 = vmatprep.subr.bf16.mxu0 %v2297
    %2689 = vmatpush1.bf16.msra.mxu0 %v2296
    %2690 = vmatprep.subr.bf16.mxu0 %v2305
    %2691 = vmatpush1.bf16.msra.mxu0 %v2304
    %2692 = vmatprep.subr.bf16.mxu0 %v2313
    %2693 = vmatpush1.bf16.msra.mxu0 %v2312
    %2694 = vmatprep.subr.bf16.mxu0 %v2321
    %2695 = vmatpush1.bf16.msra.mxu0 %v2320
    %2696 = vmatprep.subr.bf16.mxu0 %v2329
    %2697 = vmatpush1.bf16.msra.mxu0 %v2328
    %2698 = vmatprep.mubr.bf16.mxu0 %v2201
    %2699 = vmatmul.mubr.bf16.gmra.mrb[0].mxu0 %v2200
    %v2700 = vpop.f32.mrb[0].mxu0
    %v2701 = vadd.f32 %v2481, %v2700
    %v2702 = vpop.f32.mrb[0].mxu0
    %v2703 = vadd.f32 %v2485, %v2702
    %v2704 = vpop.f32.mrb[0].mxu0
    %v2705 = vpop.f32.mrb[0].mxu0
    %2706 = vdwg.mxu0
    %2707 = vmatprep.subr.bf16.mxu0 %v2337
    %2708 = vmatpush1.bf16.msra.mxu0 %v2336
    %2709 = vmatprep.subr.bf16.mxu0 %v2345
    %2710 = vmatpush1.bf16.msra.mxu0 %v2344
    %2711 = vmatprep.subr.bf16.mxu0 %v2353
    %2712 = vmatpush1.bf16.msra.mxu0 %v2352
    %2713 = vmatprep.subr.bf16.mxu0 %v2361
    %2714 = vmatpush1.bf16.msra.mxu0 %v2360
    %2715 = vmatprep.subr.bf16.mxu0 %v2369
    %2716 = vmatpush1.bf16.msra.mxu0 %v2368
    %2717 = vmatprep.subr.bf16.mxu0 %v2377
    %2718 = vmatpush1.bf16.msra.mxu0 %v2376
    %2719 = vmatprep.subr.bf16.mxu0 %v2385
    %2720 = vmatpush1.bf16.msra.mxu0 %v2384
    %2721 = vmatprep.subr.bf16.mxu0 %v2393
    %2722 = vmatpush1.bf16.msra.mxu0 %v2392
    %2723 = vmatprep.subr.bf16.mxu0 %v2401
    %2724 = vmatpush1.bf16.msra.mxu0 %v2400
    %2725 = vmatprep.subr.bf16.mxu0 %v2409
    %2726 = vmatpush1.bf16.msra.mxu0 %v2408
    %2727 = vmatprep.subr.bf16.mxu0 %v2417
    %2728 = vmatpush1.bf16.msra.mxu0 %v2416
    %2729 = vmatprep.subr.bf16.mxu0 %v2425
    %2730 = vmatpush1.bf16.msra.mxu0 %v2424
    %2731 = vmatprep.subr.bf16.mxu0 %v2433
    %2732 = vmatpush1.bf16.msra.mxu0 %v2432
    %2733 = vmatprep.subr.bf16.mxu0 %v2441
    %2734 = vmatpush1.bf16.msra.mxu0 %v2440
    %2735 = vmatprep.subr.bf16.mxu0 %v2449
    %2736 = vmatpush1.bf16.msra.mxu0 %v2448
    %2737 = vmatprep.subr.bf16.mxu0 %v2457
    %2738 = vmatpush1.bf16.msra.mxu0 %v2456
    %2739 = vmatprep.mubr.bf16.mxu0 %v2203
    %2740 = vmatmul.mubr.bf16.gmra.mrb[0].mxu0 %v2202
    %v2741 = vpop.f32.mrb[0].mxu0
    %v2742 = vadd.f32 %v2701, %v2741
    %v2743 = vpop.f32.mrb[0].mxu0
    %v2744 = vadd.f32 %v2703, %v2743
    %v2745 = vpop.f32.mrb[0].mxu0
    %v2746 = vpop.f32.mrb[0].mxu0
    %2747 = vdwg.mxu0
    %2748 = vmatprep.subr.bf16.mxu0 %v2211
    %2749 = vmatpush1.bf16.msra.mxu0 %v2210
    %2750 = vmatprep.subr.bf16.mxu0 %v2219
    %2751 = vmatpush1.bf16.msra.mxu0 %v2218
    %2752 = vmatprep.subr.bf16.mxu0 %v2227
    %2753 = vmatpush1.bf16.msra.mxu0 %v2226
    %2754 = vmatprep.subr.bf16.mxu0 %v2235
    %2755 = vmatpush1.bf16.msra.mxu0 %v2234
    %2756 = vmatprep.subr.bf16.mxu0 %v2243
    %2757 = vmatpush1.bf16.msra.mxu0 %v2242
    %2758 = vmatprep.subr.bf16.mxu0 %v2251
    %2759 = vmatpush1.bf16.msra.mxu0 %v2250
    %2760 = vmatprep.subr.bf16.mxu0 %v2259
    %2761 = vmatpush1.bf16.msra.mxu0 %v2258
    %2762 = vmatprep.subr.bf16.mxu0 %v2267
    %2763 = vmatpush1.bf16.msra.mxu0 %v2266
    %2764 = vmatprep.subr.bf16.mxu0 %v2275
    %2765 = vmatpush1.bf16.msra.mxu0 %v2274
    %2766 = vmatprep.subr.bf16.mxu0 %v2283
    %2767 = vmatpush1.bf16.msra.mxu0 %v2282
    %2768 = vmatprep.subr.bf16.mxu0 %v2291
    %2769 = vmatpush1.bf16.msra.mxu0 %v2290
    %2770 = vmatprep.subr.bf16.mxu0 %v2299
    %2771 = vmatpush1.bf16.msra.mxu0 %v2298
    %2772 = vmatprep.subr.bf16.mxu0 %v2307
    %2773 = vmatpush1.bf16.msra.mxu0 %v2306
    %2774 = vmatprep.subr.bf16.mxu0 %v2315
    %2775 = vmatpush1.bf16.msra.mxu0 %v2314
    %2776 = vmatprep.subr.bf16.mxu0 %v2323
    %2777 = vmatpush1.bf16.msra.mxu0 %v2322
    %2778 = vmatprep.subr.bf16.mxu0 %v2331
    %2779 = vmatpush1.bf16.msra.mxu0 %v2330
    %2780 = vmatprep.mubr.bf16.mxu0 %v2201
    %2781 = vmatmul.mubr.bf16.gmra.mrb[0].mxu0 %v2200
    %v2782 = vpop.f32.mrb[0].mxu0
    %v2783 = vadd.f32 %v2489, %v2782
    %v2784 = vpop.f32.mrb[0].mxu0
    %v2785 = vadd.f32 %v2493, %v2784
    %v2786 = vpop.f32.mrb[0].mxu0
    %v2787 = vpop.f32.mrb[0].mxu0
    %2788 = vdwg.mxu0
    %2789 = vmatprep.subr.bf16.mxu0 %v2339
    %2790 = vmatpush1.bf16.msra.mxu0 %v2338
    %2791 = vmatprep.subr.bf16.mxu0 %v2347
    %2792 = vmatpush1.bf16.msra.mxu0 %v2346
    %2793 = vmatprep.subr.bf16.mxu0 %v2355
    %2794 = vmatpush1.bf16.msra.mxu0 %v2354
    %2795 = vmatprep.subr.bf16.mxu0 %v2363
    %2796 = vmatpush1.bf16.msra.mxu0 %v2362
    %2797 = vmatprep.subr.bf16.mxu0 %v2371
    %2798 = vmatpush1.bf16.msra.mxu0 %v2370
    %2799 = vmatprep.subr.bf16.mxu0 %v2379
    %2800 = vmatpush1.bf16.msra.mxu0 %v2378
    %2801 = vmatprep.subr.bf16.mxu0 %v2387
    %2802 = vmatpush1.bf16.msra.mxu0 %v2386
    %2803 = vmatprep.subr.bf16.mxu0 %v2395
    %2804 = vmatpush1.bf16.msra.mxu0 %v2394
    %2805 = vmatprep.subr.bf16.mxu0 %v2403
    %2806 = vmatpush1.bf16.msra.mxu0 %v2402
    %2807 = vmatprep.subr.bf16.mxu0 %v2411
    %2808 = vmatpush1.bf16.msra.mxu0 %v2410
    %2809 = vmatprep.subr.bf16.mxu0 %v2419
    %2810 = vmatpush1.bf16.msra.mxu0 %v2418
    %2811 = vmatprep.subr.bf16.mxu0 %v2427
    %2812 = vmatpush1.bf16.msra.mxu0 %v2426
    %2813 = vmatprep.subr.bf16.mxu0 %v2435
    %2814 = vmatpush1.bf16.msra.mxu0 %v2434
    %2815 = vmatprep.subr.bf16.mxu0 %v2443
    %2816 = vmatpush1.bf16.msra.mxu0 %v2442
    %2817 = vmatprep.subr.bf16.mxu0 %v2451
    %2818 = vmatpush1.bf16.msra.mxu0 %v2450
    %2819 = vmatprep.subr.bf16.mxu0 %v2459
    %2820 = vmatpush1.bf16.msra.mxu0 %v2458
    %2821 = vmatprep.mubr.bf16.mxu0 %v2203
    %2822 = vmatmul.mubr.bf16.gmra.mrb[0].mxu0 %v2202
    %v2823 = vpop.f32.mrb[0].mxu0
    %v2824 = vadd.f32 %v2783, %v2823
    %v2825 = vpop.f32.mrb[0].mxu0
    %v2826 = vadd.f32 %v2785, %v2825
    %v2827 = vpop.f32.mrb[0].mxu0
    %v2828 = vpop.f32.mrb[0].mxu0
    %2829 = vdwg.mxu0
    %v2830 = vmax.f32 %v2578, 0.0
    %v2831 = vmax.f32 %v2580, 0.0
    %v2832 = vmax.f32 %v2660, 0.0
    %v2833 = vmax.f32 %v2662, 0.0
    %v2834 = vmax.f32 %v2742, 0.0
    %v2835 = vmax.f32 %v2744, 0.0
    %v2836 = vmax.f32 %v2824, 0.0
    %v2837 = vmax.f32 %v2826, 0.0
    %s2838 = sshll.u32 %s1006, 4
    %2839 = dma.done %s324, %s2838
    %v2840 = vpack.c.bf16 %v2830, %v2830
    %v2841 = vpack.c.bf16 %v2831, %v2831
    %v2842 = vpack.c.bf16 %v2832, %v2832
    %v2843 = vpack.c.bf16 %v2833, %v2833
    %v2844 = vpack.c.bf16 %v2834, %v2834
    %v2845 = vpack.c.bf16 %v2835, %v2835
    %v2846 = vpack.c.bf16 %v2836, %v2836
    %v2847 = vpack.c.bf16 %v2837, %v2837
    %v2848 = vld [vmem:[#allocation10] sm:$0xff]
    %v2849 = vld [vmem:[#allocation10 + $0x8] sm:$0xff]
    %v2850 = vld [vmem:[#allocation10 + $0x10] sm:$0xff]
    %v2851 = vld [vmem:[#allocation10 + $0x18] sm:$0xff]
    %v2852 = vld [vmem:[#allocation10 + $0x20] sm:$0xff]
    %v2853 = vld [vmem:[#allocation10 + $0x28] sm:$0xff]
    %v2854 = vld [vmem:[#allocation10 + $0x30] sm:$0xff]
    %v2855 = vld [vmem:[#allocation10 + $0x38] sm:$0xff]
    %v2856 = vld [vmem:[#allocation10 + $0x40] sm:$0xff]
    %v2857 = vld [vmem:[#allocation10 + $0x48] sm:$0xff]
    %v2858 = vld [vmem:[#allocation10 + $0x50] sm:$0xff]
    %v2859 = vld [vmem:[#allocation10 + $0x58] sm:$0xff]
    %v2860 = vld [vmem:[#allocation10 + $0x60] sm:$0xff]
    %v2861 = vld [vmem:[#allocation10 + $0x68] sm:$0xff]
    %v2862 = vld [vmem:[#allocation10 + $0x70] sm:$0xff]
    %v2863 = vld [vmem:[#allocation10 + $0x78] sm:$0xff]
    %v2864 = vld [vmem:[#allocation10 + $0x80] sm:$0xff]
    %v2865 = vld [vmem:[#allocation10 + $0x88] sm:$0xff]
    %v2866 = vld [vmem:[#allocation10 + $0x90] sm:$0xff]
    %v2867 = vld [vmem:[#allocation10 + $0x98] sm:$0xff]
    %v2868 = vld [vmem:[#allocation10 + $0xa0] sm:$0xff]
    %v2869 = vld [vmem:[#allocation10 + $0xa8] sm:$0xff]
    %v2870 = vld [vmem:[#allocation10 + $0xb0] sm:$0xff]
    %v2871 = vld [vmem:[#allocation10 + $0xb8] sm:$0xff]
    %v2872 = vld [vmem:[#allocation10 + $0xc0] sm:$0xff]
    %v2873 = vld [vmem:[#allocation10 + $0xc8] sm:$0xff]
    %v2874 = vld [vmem:[#allocation10 + $0xd0] sm:$0xff]
    %v2875 = vld [vmem:[#allocation10 + $0xd8] sm:$0xff]
    %v2876 = vld [vmem:[#allocation10 + $0xe0] sm:$0xff]
    %v2877 = vld [vmem:[#allocation10 + $0xe8] sm:$0xff]
    %v2878 = vld [vmem:[#allocation10 + $0xf0] sm:$0xff]
    %v2879 = vld [vmem:[#allocation10 + $0xf8] sm:$0xff]
    %v2880 = vld [vmem:[#allocation10 + $0x100] sm:$0xff]
    %v2881 = vld [vmem:[#allocation10 + $0x108] sm:$0xff]
    %v2882 = vld [vmem:[#allocation10 + $0x110] sm:$0xff]
    %v2883 = vld [vmem:[#allocation10 + $0x118] sm:$0xff]
    %v2884 = vld [vmem:[#allocation10 + $0x120] sm:$0xff]
    %v2885 = vld [vmem:[#allocation10 + $0x128] sm:$0xff]
    %v2886 = vld [vmem:[#allocation10 + $0x130] sm:$0xff]
    %v2887 = vld [vmem:[#allocation10 + $0x138] sm:$0xff]
    %v2888 = vld [vmem:[#allocation10 + $0x140] sm:$0xff]
    %v2889 = vld [vmem:[#allocation10 + $0x148] sm:$0xff]
    %v2890 = vld [vmem:[#allocation10 + $0x150] sm:$0xff]
    %v2891 = vld [vmem:[#allocation10 + $0x158] sm:$0xff]
    %v2892 = vld [vmem:[#allocation10 + $0x160] sm:$0xff]
    %v2893 = vld [vmem:[#allocation10 + $0x168] sm:$0xff]
    %v2894 = vld [vmem:[#allocation10 + $0x170] sm:$0xff]
    %v2895 = vld [vmem:[#allocation10 + $0x178] sm:$0xff]
    %v2896 = vld [vmem:[#allocation10 + $0x180] sm:$0xff]
    %v2897 = vld [vmem:[#allocation10 + $0x188] sm:$0xff]
    %v2898 = vld [vmem:[#allocation10 + $0x190] sm:$0xff]
    %v2899 = vld [vmem:[#allocation10 + $0x198] sm:$0xff]
    %v2900 = vld [vmem:[#allocation10 + $0x1a0] sm:$0xff]
    %v2901 = vld [vmem:[#allocation10 + $0x1a8] sm:$0xff]
    %v2902 = vld [vmem:[#allocation10 + $0x1b0] sm:$0xff]
    %v2903 = vld [vmem:[#allocation10 + $0x1b8] sm:$0xff]
    %v2904 = vld [vmem:[#allocation10 + $0x1c0] sm:$0xff]
    %v2905 = vld [vmem:[#allocation10 + $0x1c8] sm:$0xff]
    %v2906 = vld [vmem:[#allocation10 + $0x1d0] sm:$0xff]
    %v2907 = vld [vmem:[#allocation10 + $0x1d8] sm:$0xff]
    %v2908 = vld [vmem:[#allocation10 + $0x1e0] sm:$0xff]
    %v2909 = vld [vmem:[#allocation10 + $0x1e8] sm:$0xff]
    %v2910 = vld [vmem:[#allocation10 + $0x1f0] sm:$0xff]
    %v2911 = vld [vmem:[#allocation10 + $0x1f8] sm:$0xff]
    %v2912 = vld [vmem:[#allocation10 + $0x200] sm:$0xff]
    %v2913 = vld [vmem:[#allocation10 + $0x208] sm:$0xff]
    %v2914 = vld [vmem:[#allocation10 + $0x210] sm:$0xff]
    %v2915 = vld [vmem:[#allocation10 + $0x218] sm:$0xff]
    %v2916 = vld [vmem:[#allocation10 + $0x220] sm:$0xff]
    %v2917 = vld [vmem:[#allocation10 + $0x228] sm:$0xff]
    %v2918 = vld [vmem:[#allocation10 + $0x230] sm:$0xff]
    %v2919 = vld [vmem:[#allocation10 + $0x238] sm:$0xff]
    %v2920 = vld [vmem:[#allocation10 + $0x240] sm:$0xff]
    %v2921 = vld [vmem:[#allocation10 + $0x248] sm:$0xff]
    %v2922 = vld [vmem:[#allocation10 + $0x250] sm:$0xff]
    %v2923 = vld [vmem:[#allocation10 + $0x258] sm:$0xff]
    %v2924 = vld [vmem:[#allocation10 + $0x260] sm:$0xff]
    %v2925 = vld [vmem:[#allocation10 + $0x268] sm:$0xff]
    %v2926 = vld [vmem:[#allocation10 + $0x270] sm:$0xff]
    %v2927 = vld [vmem:[#allocation10 + $0x278] sm:$0xff]
    %v2928 = vld [vmem:[#allocation10 + $0x280] sm:$0xff]
    %v2929 = vld [vmem:[#allocation10 + $0x288] sm:$0xff]
    %v2930 = vld [vmem:[#allocation10 + $0x290] sm:$0xff]
    %v2931 = vld [vmem:[#allocation10 + $0x298] sm:$0xff]
    %v2932 = vld [vmem:[#allocation10 + $0x2a0] sm:$0xff]
    %v2933 = vld [vmem:[#allocation10 + $0x2a8] sm:$0xff]
    %v2934 = vld [vmem:[#allocation10 + $0x2b0] sm:$0xff]
    %v2935 = vld [vmem:[#allocation10 + $0x2b8] sm:$0xff]
    %v2936 = vld [vmem:[#allocation10 + $0x2c0] sm:$0xff]
    %v2937 = vld [vmem:[#allocation10 + $0x2c8] sm:$0xff]
    %v2938 = vld [vmem:[#allocation10 + $0x2d0] sm:$0xff]
    %v2939 = vld [vmem:[#allocation10 + $0x2d8] sm:$0xff]
    %v2940 = vld [vmem:[#allocation10 + $0x2e0] sm:$0xff]
    %v2941 = vld [vmem:[#allocation10 + $0x2e8] sm:$0xff]
    %v2942 = vld [vmem:[#allocation10 + $0x2f0] sm:$0xff]
    %v2943 = vld [vmem:[#allocation10 + $0x2f8] sm:$0xff]
    %v2944 = vld [vmem:[#allocation10 + $0x300] sm:$0xff]
    %v2945 = vld [vmem:[#allocation10 + $0x308] sm:$0xff]
    %v2946 = vld [vmem:[#allocation10 + $0x310] sm:$0xff]
    %v2947 = vld [vmem:[#allocation10 + $0x318] sm:$0xff]
    %v2948 = vld [vmem:[#allocation10 + $0x320] sm:$0xff]
    %v2949 = vld [vmem:[#allocation10 + $0x328] sm:$0xff]
    %v2950 = vld [vmem:[#allocation10 + $0x330] sm:$0xff]
    %v2951 = vld [vmem:[#allocation10 + $0x338] sm:$0xff]
    %v2952 = vld [vmem:[#allocation10 + $0x340] sm:$0xff]
    %v2953 = vld [vmem:[#allocation10 + $0x348] sm:$0xff]
    %v2954 = vld [vmem:[#allocation10 + $0x350] sm:$0xff]
    %v2955 = vld [vmem:[#allocation10 + $0x358] sm:$0xff]
    %v2956 = vld [vmem:[#allocation10 + $0x360] sm:$0xff]
    %v2957 = vld [vmem:[#allocation10 + $0x368] sm:$0xff]
    %v2958 = vld [vmem:[#allocation10 + $0x370] sm:$0xff]
    %v2959 = vld [vmem:[#allocation10 + $0x378] sm:$0xff]
    %v2960 = vld [vmem:[#allocation10 + $0x380] sm:$0xff]
    %v2961 = vld [vmem:[#allocation10 + $0x388] sm:$0xff]
    %v2962 = vld [vmem:[#allocation10 + $0x390] sm:$0xff]
    %v2963 = vld [vmem:[#allocation10 + $0x398] sm:$0xff]
    %v2964 = vld [vmem:[#allocation10 + $0x3a0] sm:$0xff]
    %v2965 = vld [vmem:[#allocation10 + $0x3a8] sm:$0xff]
    %v2966 = vld [vmem:[#allocation10 + $0x3b0] sm:$0xff]
    %v2967 = vld [vmem:[#allocation10 + $0x3b8] sm:$0xff]
    %v2968 = vld [vmem:[#allocation10 + $0x3c0] sm:$0xff]
    %v2969 = vld [vmem:[#allocation10 + $0x3c8] sm:$0xff]
    %v2970 = vld [vmem:[#allocation10 + $0x3d0] sm:$0xff]
    %v2971 = vld [vmem:[#allocation10 + $0x3d8] sm:$0xff]
    %v2972 = vld [vmem:[#allocation10 + $0x3e0] sm:$0xff]
    %v2973 = vld [vmem:[#allocation10 + $0x3e8] sm:$0xff]
    %v2974 = vld [vmem:[#allocation10 + $0x3f0] sm:$0xff]
    %v2975 = vld [vmem:[#allocation10 + $0x3f8] sm:$0xff]
    %v2976 = vld [vmem:[#allocation10 + $0x400] sm:$0xff]
    %v2977 = vld [vmem:[#allocation10 + $0x408] sm:$0xff]
    %v2978 = vld [vmem:[#allocation10 + $0x410] sm:$0xff]
    %v2979 = vld [vmem:[#allocation10 + $0x418] sm:$0xff]
    %v2980 = vld [vmem:[#allocation10 + $0x420] sm:$0xff]
    %v2981 = vld [vmem:[#allocation10 + $0x428] sm:$0xff]
    %v2982 = vld [vmem:[#allocation10 + $0x430] sm:$0xff]
    %v2983 = vld [vmem:[#allocation10 + $0x438] sm:$0xff]
    %v2984 = vld [vmem:[#allocation10 + $0x440] sm:$0xff]
    %v2985 = vld [vmem:[#allocation10 + $0x448] sm:$0xff]
    %v2986 = vld [vmem:[#allocation10 + $0x450] sm:$0xff]
    %v2987 = vld [vmem:[#allocation10 + $0x458] sm:$0xff]
    %v2988 = vld [vmem:[#allocation10 + $0x460] sm:$0xff]
    %v2989 = vld [vmem:[#allocation10 + $0x468] sm:$0xff]
    %v2990 = vld [vmem:[#allocation10 + $0x470] sm:$0xff]
    %v2991 = vld [vmem:[#allocation10 + $0x478] sm:$0xff]
    %v2992 = vld [vmem:[#allocation10 + $0x480] sm:$0xff]
    %v2993 = vld [vmem:[#allocation10 + $0x488] sm:$0xff]
    %v2994 = vld [vmem:[#allocation10 + $0x490] sm:$0xff]
    %v2995 = vld [vmem:[#allocation10 + $0x498] sm:$0xff]
    %v2996 = vld [vmem:[#allocation10 + $0x4a0] sm:$0xff]
    %v2997 = vld [vmem:[#allocation10 + $0x4a8] sm:$0xff]
    %v2998 = vld [vmem:[#allocation10 + $0x4b0] sm:$0xff]
    %v2999 = vld [vmem:[#allocation10 + $0x4b8] sm:$0xff]
    %v3000 = vld [vmem:[#allocation10 + $0x4c0] sm:$0xff]
    %v3001 = vld [vmem:[#allocation10 + $0x4c8] sm:$0xff]
    %v3002 = vld [vmem:[#allocation10 + $0x4d0] sm:$0xff]
    %v3003 = vld [vmem:[#allocation10 + $0x4d8] sm:$0xff]
    %v3004 = vld [vmem:[#allocation10 + $0x4e0] sm:$0xff]
    %v3005 = vld [vmem:[#allocation10 + $0x4e8] sm:$0xff]
    %v3006 = vld [vmem:[#allocation10 + $0x4f0] sm:$0xff]
    %v3007 = vld [vmem:[#allocation10 + $0x4f8] sm:$0xff]
    %v3008 = vld [vmem:[#allocation10 + $0x500] sm:$0xff]
    %v3009 = vld [vmem:[#allocation10 + $0x508] sm:$0xff]
    %v3010 = vld [vmem:[#allocation10 + $0x510] sm:$0xff]
    %v3011 = vld [vmem:[#allocation10 + $0x518] sm:$0xff]
    %v3012 = vld [vmem:[#allocation10 + $0x520] sm:$0xff]
    %v3013 = vld [vmem:[#allocation10 + $0x528] sm:$0xff]
    %v3014 = vld [vmem:[#allocation10 + $0x530] sm:$0xff]
    %v3015 = vld [vmem:[#allocation10 + $0x538] sm:$0xff]
    %v3016 = vld [vmem:[#allocation10 + $0x540] sm:$0xff]
    %v3017 = vld [vmem:[#allocation10 + $0x548] sm:$0xff]
    %v3018 = vld [vmem:[#allocation10 + $0x550] sm:$0xff]
    %v3019 = vld [vmem:[#allocation10 + $0x558] sm:$0xff]
    %v3020 = vld [vmem:[#allocation10 + $0x560] sm:$0xff]
    %v3021 = vld [vmem:[#allocation10 + $0x568] sm:$0xff]
    %v3022 = vld [vmem:[#allocation10 + $0x570] sm:$0xff]
    %v3023 = vld [vmem:[#allocation10 + $0x578] sm:$0xff]
    %v3024 = vld [vmem:[#allocation10 + $0x580] sm:$0xff]
    %v3025 = vld [vmem:[#allocation10 + $0x588] sm:$0xff]
    %v3026 = vld [vmem:[#allocation10 + $0x590] sm:$0xff]
    %v3027 = vld [vmem:[#allocation10 + $0x598] sm:$0xff]
    %v3028 = vld [vmem:[#allocation10 + $0x5a0] sm:$0xff]
    %v3029 = vld [vmem:[#allocation10 + $0x5a8] sm:$0xff]
    %v3030 = vld [vmem:[#allocation10 + $0x5b0] sm:$0xff]
    %v3031 = vld [vmem:[#allocation10 + $0x5b8] sm:$0xff]
    %v3032 = vld [vmem:[#allocation10 + $0x5c0] sm:$0xff]
    %v3033 = vld [vmem:[#allocation10 + $0x5c8] sm:$0xff]
    %v3034 = vld [vmem:[#allocation10 + $0x5d0] sm:$0xff]
    %v3035 = vld [vmem:[#allocation10 + $0x5d8] sm:$0xff]
    %v3036 = vld [vmem:[#allocation10 + $0x5e0] sm:$0xff]
    %v3037 = vld [vmem:[#allocation10 + $0x5e8] sm:$0xff]
    %v3038 = vld [vmem:[#allocation10 + $0x5f0] sm:$0xff]
    %v3039 = vld [vmem:[#allocation10 + $0x5f8] sm:$0xff]
    %v3040 = vld [vmem:[#allocation10 + $0x600] sm:$0xff]
    %v3041 = vld [vmem:[#allocation10 + $0x608] sm:$0xff]
    %v3042 = vld [vmem:[#allocation10 + $0x610] sm:$0xff]
    %v3043 = vld [vmem:[#allocation10 + $0x618] sm:$0xff]
    %v3044 = vld [vmem:[#allocation10 + $0x620] sm:$0xff]
    %v3045 = vld [vmem:[#allocation10 + $0x628] sm:$0xff]
    %v3046 = vld [vmem:[#allocation10 + $0x630] sm:$0xff]
    %v3047 = vld [vmem:[#allocation10 + $0x638] sm:$0xff]
    %v3048 = vld [vmem:[#allocation10 + $0x640] sm:$0xff]
    %v3049 = vld [vmem:[#allocation10 + $0x648] sm:$0xff]
    %v3050 = vld [vmem:[#allocation10 + $0x650] sm:$0xff]
    %v3051 = vld [vmem:[#allocation10 + $0x658] sm:$0xff]
    %v3052 = vld [vmem:[#allocation10 + $0x660] sm:$0xff]
    %v3053 = vld [vmem:[#allocation10 + $0x668] sm:$0xff]
    %v3054 = vld [vmem:[#allocation10 + $0x670] sm:$0xff]
    %v3055 = vld [vmem:[#allocation10 + $0x678] sm:$0xff]
    %v3056 = vld [vmem:[#allocation10 + $0x680] sm:$0xff]
    %v3057 = vld [vmem:[#allocation10 + $0x688] sm:$0xff]
    %v3058 = vld [vmem:[#allocation10 + $0x690] sm:$0xff]
    %v3059 = vld [vmem:[#allocation10 + $0x698] sm:$0xff]
    %v3060 = vld [vmem:[#allocation10 + $0x6a0] sm:$0xff]
    %v3061 = vld [vmem:[#allocation10 + $0x6a8] sm:$0xff]
    %v3062 = vld [vmem:[#allocation10 + $0x6b0] sm:$0xff]
    %v3063 = vld [vmem:[#allocation10 + $0x6b8] sm:$0xff]
    %v3064 = vld [vmem:[#allocation10 + $0x6c0] sm:$0xff]
    %v3065 = vld [vmem:[#allocation10 + $0x6c8] sm:$0xff]
    %v3066 = vld [vmem:[#allocation10 + $0x6d0] sm:$0xff]
    %v3067 = vld [vmem:[#allocation10 + $0x6d8] sm:$0xff]
    %v3068 = vld [vmem:[#allocation10 + $0x6e0] sm:$0xff]
    %v3069 = vld [vmem:[#allocation10 + $0x6e8] sm:$0xff]
    %v3070 = vld [vmem:[#allocation10 + $0x6f0] sm:$0xff]
    %v3071 = vld [vmem:[#allocation10 + $0x6f8] sm:$0xff]
    %v3072 = vld [vmem:[#allocation10 + $0x700] sm:$0xff]
    %v3073 = vld [vmem:[#allocation10 + $0x708] sm:$0xff]
    %v3074 = vld [vmem:[#allocation10 + $0x710] sm:$0xff]
    %v3075 = vld [vmem:[#allocation10 + $0x718] sm:$0xff]
    %v3076 = vld [vmem:[#allocation10 + $0x720] sm:$0xff]
    %v3077 = vld [vmem:[#allocation10 + $0x728] sm:$0xff]
    %v3078 = vld [vmem:[#allocation10 + $0x730] sm:$0xff]
    %v3079 = vld [vmem:[#allocation10 + $0x738] sm:$0xff]
    %v3080 = vld [vmem:[#allocation10 + $0x740] sm:$0xff]
    %v3081 = vld [vmem:[#allocation10 + $0x748] sm:$0xff]
    %v3082 = vld [vmem:[#allocation10 + $0x750] sm:$0xff]
    %v3083 = vld [vmem:[#allocation10 + $0x758] sm:$0xff]
    %v3084 = vld [vmem:[#allocation10 + $0x760] sm:$0xff]
    %v3085 = vld [vmem:[#allocation10 + $0x768] sm:$0xff]
    %v3086 = vld [vmem:[#allocation10 + $0x770] sm:$0xff]
    %v3087 = vld [vmem:[#allocation10 + $0x778] sm:$0xff]
    %v3088 = vld [vmem:[#allocation10 + $0x780] sm:$0xff]
    %v3089 = vld [vmem:[#allocation10 + $0x788] sm:$0xff]
    %v3090 = vld [vmem:[#allocation10 + $0x790] sm:$0xff]
    %v3091 = vld [vmem:[#allocation10 + $0x798] sm:$0xff]
    %v3092 = vld [vmem:[#allocation10 + $0x7a0] sm:$0xff]
    %v3093 = vld [vmem:[#allocation10 + $0x7a8] sm:$0xff]
    %v3094 = vld [vmem:[#allocation10 + $0x7b0] sm:$0xff]
    %v3095 = vld [vmem:[#allocation10 + $0x7b8] sm:$0xff]
    %v3096 = vld [vmem:[#allocation10 + $0x7c0] sm:$0xff]
    %v3097 = vld [vmem:[#allocation10 + $0x7c8] sm:$0xff]
    %v3098 = vld [vmem:[#allocation10 + $0x7d0] sm:$0xff]
    %v3099 = vld [vmem:[#allocation10 + $0x7d8] sm:$0xff]
    %v3100 = vld [vmem:[#allocation10 + $0x7e0] sm:$0xff]
    %v3101 = vld [vmem:[#allocation10 + $0x7e8] sm:$0xff]
    %v3102 = vld [vmem:[#allocation10 + $0x7f0] sm:$0xff]
    %v3103 = vld [vmem:[#allocation10 + $0x7f8] sm:$0xff]
    %v3104 = vld [vmem:[%s18] sm:$0xf]
    %v3106 = vlaneseq
    %v3107 = vshrl.u32 %v3106, 7
    %v3108 = vsub.s32 0, %v3107
    %v3109 = vrot.slane %v3104, %v3108
    %v3110 = vlaneseq
    %v3111 = vshrl.u32 %v3110, 7
    %v3112 = vsub.s32 1, %v3111
    %v3113 = vrot.slane %v3104, %v3112
    %v3114 = vlaneseq
    %v3115 = vshrl.u32 %v3114, 7
    %v3116 = vsub.s32 2, %v3115
    %v3117 = vrot.slane %v3104, %v3116
    %v3118 = vlaneseq
    %v3119 = vshrl.u32 %v3118, 7
    %v3120 = vsub.s32 3, %v3119
    %v3121 = vrot.slane %v3104, %v3120
    %3126 = vmatprep.subr.bf16.mxu0 %v2849
    %3127 = vmatpush1.bf16.msra.mxu0 %v2848
    %3128 = vmatprep.subr.bf16.mxu0 %v2853
    %3129 = vmatpush1.bf16.msra.mxu0 %v2852
    %3130 = vmatprep.subr.bf16.mxu0 %v2857
    %3131 = vmatpush1.bf16.msra.mxu0 %v2856
    %3132 = vmatprep.subr.bf16.mxu0 %v2861
    %3133 = vmatpush1.bf16.msra.mxu0 %v2860
    %3134 = vmatprep.subr.bf16.mxu0 %v2865
    %3135 = vmatpush1.bf16.msra.mxu0 %v2864
    %3136 = vmatprep.subr.bf16.mxu0 %v2869
    %3137 = vmatpush1.bf16.msra.mxu0 %v2868
    %3138 = vmatprep.subr.bf16.mxu0 %v2873
    %3139 = vmatpush1.bf16.msra.mxu0 %v2872
    %3140 = vmatprep.subr.bf16.mxu0 %v2877
    %3141 = vmatpush1.bf16.msra.mxu0 %v2876
    %3142 = vmatprep.subr.bf16.mxu0 %v2881
    %3143 = vmatpush1.bf16.msra.mxu0 %v2880
    %3144 = vmatprep.subr.bf16.mxu0 %v2885
    %3145 = vmatpush1.bf16.msra.mxu0 %v2884
    %3146 = vmatprep.subr.bf16.mxu0 %v2889
    %3147 = vmatpush1.bf16.msra.mxu0 %v2888
    %3148 = vmatprep.subr.bf16.mxu0 %v2893
    %3149 = vmatpush1.bf16.msra.mxu0 %v2892
    %3150 = vmatprep.subr.bf16.mxu0 %v2897
    %3151 = vmatpush1.bf16.msra.mxu0 %v2896
    %3152 = vmatprep.subr.bf16.mxu0 %v2901
    %3153 = vmatpush1.bf16.msra.mxu0 %v2900
    %3154 = vmatprep.subr.bf16.mxu0 %v2905
    %3155 = vmatpush1.bf16.msra.mxu0 %v2904
    %3156 = vmatprep.subr.bf16.mxu0 %v2909
    %3157 = vmatpush1.bf16.msra.mxu0 %v2908
    %3158 = vmatprep.mubr.bf16.mxu0 %v2841
    %3159 = vmatmul.mubr.bf16.gmra.mrb[0].mxu0 %v2840
    %v3160 = vpop.f32.mrb[0].mxu0
    %v3161 = vadd.f32 %v3109, %v3160
    %v3162 = vpop.f32.mrb[0].mxu0
    %v3163 = vadd.f32 %v3113, %v3162
    %v3164 = vpop.f32.mrb[0].mxu0
    %v3165 = vpop.f32.mrb[0].mxu0
    %3166 = vdwg.mxu0
    %3167 = vmatprep.subr.bf16.mxu0 %v2913
    %3168 = vmatpush1.bf16.msra.mxu0 %v2912
    %3169 = vmatprep.subr.bf16.mxu0 %v2917
    %3170 = vmatpush1.bf16.msra.mxu0 %v2916
    %3171 = vmatprep.subr.bf16.mxu0 %v2921
    %3172 = vmatpush1.bf16.msra.mxu0 %v2920
    %3173 = vmatprep.subr.bf16.mxu0 %v2925
    %3174 = vmatpush1.bf16.msra.mxu0 %v2924
    %3175 = vmatprep.subr.bf16.mxu0 %v2929
    %3176 = vmatpush1.bf16.msra.mxu0 %v2928
    %3177 = vmatprep.subr.bf16.mxu0 %v2933
    %3178 = vmatpush1.bf16.msra.mxu0 %v2932
    %3179 = vmatprep.subr.bf16.mxu0 %v2937
    %3180 = vmatpush1.bf16.msra.mxu0 %v2936
    %3181 = vmatprep.subr.bf16.mxu0 %v2941
    %3182 = vmatpush1.bf16.msra.mxu0 %v2940
    %3183 = vmatprep.subr.bf16.mxu0 %v2945
    %3184 = vmatpush1.bf16.msra.mxu0 %v2944
    %3185 = vmatprep.subr.bf16.mxu0 %v2949
    %3186 = vmatpush1.bf16.msra.mxu0 %v2948
    %3187 = vmatprep.subr.bf16.mxu0 %v2953
    %3188 = vmatpush1.bf16.msra.mxu0 %v2952
    %3189 = vmatprep.subr.bf16.mxu0 %v2957
    %3190 = vmatpush1.bf16.msra.mxu0 %v2956
    %3191 = vmatprep.subr.bf16.mxu0 %v2961
    %3192 = vmatpush1.bf16.msra.mxu0 %v2960
    %3193 = vmatprep.subr.bf16.mxu0 %v2965
    %3194 = vmatpush1.bf16.msra.mxu0 %v2964
    %3195 = vmatprep.subr.bf16.mxu0 %v2969
    %3196 = vmatpush1.bf16.msra.mxu0 %v2968
    %3197 = vmatprep.subr.bf16.mxu0 %v2973
    %3198 = vmatpush1.bf16.msra.mxu0 %v2972
    %3199 = vmatprep.mubr.bf16.mxu0 %v2843
    %3200 = vmatmul.mubr.bf16.gmra.mrb[0].mxu0 %v2842
    %v3201 = vpop.f32.mrb[0].mxu0
    %v3202 = vadd.f32 %v3161, %v3201
    %v3203 = vpop.f32.mrb[0].mxu0
    %v3204 = vadd.f32 %v3163, %v3203
    %v3205 = vpop.f32.mrb[0].mxu0
    %v3206 = vpop.f32.mrb[0].mxu0
    %3207 = vdwg.mxu0
    %3208 = vmatprep.subr.bf16.mxu0 %v2977
    %3209 = vmatpush1.bf16.msra.mxu0 %v2976
    %3210 = vmatprep.subr.bf16.mxu0 %v2981
    %3211 = vmatpush1.bf16.msra.mxu0 %v2980
    %3212 = vmatprep.subr.bf16.mxu0 %v2985
    %3213 = vmatpush1.bf16.msra.mxu0 %v2984
    %3214 = vmatprep.subr.bf16.mxu0 %v2989
    %3215 = vmatpush1.bf16.msra.mxu0 %v2988
    %3216 = vmatprep.subr.bf16.mxu0 %v2993
    %3217 = vmatpush1.bf16.msra.mxu0 %v2992
    %3218 = vmatprep.subr.bf16.mxu0 %v2997
    %3219 = vmatpush1.bf16.msra.mxu0 %v2996
    %3220 = vmatprep.subr.bf16.mxu0 %v3001
    %3221 = vmatpush1.bf16.msra.mxu0 %v3000
    %3222 = vmatprep.subr.bf16.mxu0 %v3005
    %3223 = vmatpush1.bf16.msra.mxu0 %v3004
    %3224 = vmatprep.subr.bf16.mxu0 %v3009
    %3225 = vmatpush1.bf16.msra.mxu0 %v3008
    %3226 = vmatprep.subr.bf16.mxu0 %v3013
    %3227 = vmatpush1.bf16.msra.mxu0 %v3012
    %3228 = vmatprep.subr.bf16.mxu0 %v3017
    %3229 = vmatpush1.bf16.msra.mxu0 %v3016
    %3230 = vmatprep.subr.bf16.mxu0 %v3021
    %3231 = vmatpush1.bf16.msra.mxu0 %v3020
    %3232 = vmatprep.subr.bf16.mxu0 %v3025
    %3233 = vmatpush1.bf16.msra.mxu0 %v3024
    %3234 = vmatprep.subr.bf16.mxu0 %v3029
    %3235 = vmatpush1.bf16.msra.mxu0 %v3028
    %3236 = vmatprep.subr.bf16.mxu0 %v3033
    %3237 = vmatpush1.bf16.msra.mxu0 %v3032
    %3238 = vmatprep.subr.bf16.mxu0 %v3037
    %3239 = vmatpush1.bf16.msra.mxu0 %v3036
    %3240 = vmatprep.mubr.bf16.mxu0 %v2845
    %3241 = vmatmul.mubr.bf16.gmra.mrb[0].mxu0 %v2844
    %v3242 = vpop.f32.mrb[0].mxu0
    %v3243 = vadd.f32 %v3202, %v3242
    %v3244 = vpop.f32.mrb[0].mxu0
    %v3245 = vadd.f32 %v3204, %v3244
    %v3246 = vpop.f32.mrb[0].mxu0
    %v3247 = vpop.f32.mrb[0].mxu0
    %3248 = vdwg.mxu0
    %3249 = vmatprep.subr.bf16.mxu0 %v3041
    %3250 = vmatpush1.bf16.msra.mxu0 %v3040
    %3251 = vmatprep.subr.bf16.mxu0 %v3045
    %3252 = vmatpush1.bf16.msra.mxu0 %v3044
    %3253 = vmatprep.subr.bf16.mxu0 %v3049
    %3254 = vmatpush1.bf16.msra.mxu0 %v3048
    %3255 = vmatprep.subr.bf16.mxu0 %v3053
    %3256 = vmatpush1.bf16.msra.mxu0 %v3052
    %3257 = vmatprep.subr.bf16.mxu0 %v3057
    %3258 = vmatpush1.bf16.msra.mxu0 %v3056
    %3259 = vmatprep.subr.bf16.mxu0 %v3061
    %3260 = vmatpush1.bf16.msra.mxu0 %v3060
    %3261 = vmatprep.subr.bf16.mxu0 %v3065
    %3262 = vmatpush1.bf16.msra.mxu0 %v3064
    %3263 = vmatprep.subr.bf16.mxu0 %v3069
    %3264 = vmatpush1.bf16.msra.mxu0 %v3068
    %3265 = vmatprep.subr.bf16.mxu0 %v3073
    %3266 = vmatpush1.bf16.msra.mxu0 %v3072
    %3267 = vmatprep.subr.bf16.mxu0 %v3077
    %3268 = vmatpush1.bf16.msra.mxu0 %v3076
    %3269 = vmatprep.subr.bf16.mxu0 %v3081
    %3270 = vmatpush1.bf16.msra.mxu0 %v3080
    %3271 = vmatprep.subr.bf16.mxu0 %v3085
    %3272 = vmatpush1.bf16.msra.mxu0 %v3084
    %3273 = vmatprep.subr.bf16.mxu0 %v3089
    %3274 = vmatpush1.bf16.msra.mxu0 %v3088
    %3275 = vmatprep.subr.bf16.mxu0 %v3093
    %3276 = vmatpush1.bf16.msra.mxu0 %v3092
    %3277 = vmatprep.subr.bf16.mxu0 %v3097
    %3278 = vmatpush1.bf16.msra.mxu0 %v3096
    %3279 = vmatprep.subr.bf16.mxu0 %v3101
    %3280 = vmatpush1.bf16.msra.mxu0 %v3100
    %3281 = vmatprep.mubr.bf16.mxu0 %v2847
    %3282 = vmatmul.mubr.bf16.gmra.mrb[0].mxu0 %v2846
    %v3283 = vpop.f32.mrb[0].mxu0
    %v3284 = vadd.f32 %v3243, %v3283
    %v3285 = vpop.f32.mrb[0].mxu0
    %v3286 = vadd.f32 %v3245, %v3285
    %v3287 = vpop.f32.mrb[0].mxu0
    %v3288 = vpop.f32.mrb[0].mxu0
    %3289 = vdwg.mxu0
    %3290 = vmatprep.subr.bf16.mxu0 %v2851
    %3291 = vmatpush1.bf16.msra.mxu0 %v2850
    %3292 = vmatprep.subr.bf16.mxu0 %v2855
    %3293 = vmatpush1.bf16.msra.mxu0 %v2854
    %3294 = vmatprep.subr.bf16.mxu0 %v2859
    %3295 = vmatpush1.bf16.msra.mxu0 %v2858
    %3296 = vmatprep.subr.bf16.mxu0 %v2863
    %3297 = vmatpush1.bf16.msra.mxu0 %v2862
    %3298 = vmatprep.subr.bf16.mxu0 %v2867
    %3299 = vmatpush1.bf16.msra.mxu0 %v2866
    %3300 = vmatprep.subr.bf16.mxu0 %v2871
    %3301 = vmatpush1.bf16.msra.mxu0 %v2870
    %3302 = vmatprep.subr.bf16.mxu0 %v2875
    %3303 = vmatpush1.bf16.msra.mxu0 %v2874
    %3304 = vmatprep.subr.bf16.mxu0 %v2879
    %3305 = vmatpush1.bf16.msra.mxu0 %v2878
    %3306 = vmatprep.subr.bf16.mxu0 %v2883
    %3307 = vmatpush1.bf16.msra.mxu0 %v2882
    %3308 = vmatprep.subr.bf16.mxu0 %v2887
    %3309 = vmatpush1.bf16.msra.mxu0 %v2886
    %3310 = vmatprep.subr.bf16.mxu0 %v2891
    %3311 = vmatpush1.bf16.msra.mxu0 %v2890
    %3312 = vmatprep.subr.bf16.mxu0 %v2895
    %3313 = vmatpush1.bf16.msra.mxu0 %v2894
    %3314 = vmatprep.subr.bf16.mxu0 %v2899
    %3315 = vmatpush1.bf16.msra.mxu0 %v2898
    %3316 = vmatprep.subr.bf16.mxu0 %v2903
    %3317 = vmatpush1.bf16.msra.mxu0 %v2902
    %3318 = vmatprep.subr.bf16.mxu0 %v2907
    %3319 = vmatpush1.bf16.msra.mxu0 %v2906
    %3320 = vmatprep.subr.bf16.mxu0 %v2911
    %3321 = vmatpush1.bf16.msra.mxu0 %v2910
    %3322 = vmatprep.mubr.bf16.mxu0 %v2841
    %3323 = vmatmul.mubr.bf16.gmra.mrb[0].mxu0 %v2840
    %v3324 = vpop.f32.mrb[0].mxu0
    %v3325 = vadd.f32 %v3117, %v3324
    %v3326 = vpop.f32.mrb[0].mxu0
    %v3327 = vadd.f32 %v3121, %v3326
    %v3328 = vpop.f32.mrb[0].mxu0
    %v3329 = vpop.f32.mrb[0].mxu0
    %3330 = vdwg.mxu0
    %3331 = vmatprep.subr.bf16.mxu0 %v2915
    %3332 = vmatpush1.bf16.msra.mxu0 %v2914
    %3333 = vmatprep.subr.bf16.mxu0 %v2919
    %3334 = vmatpush1.bf16.msra.mxu0 %v2918
    %3335 = vmatprep.subr.bf16.mxu0 %v2923
    %3336 = vmatpush1.bf16.msra.mxu0 %v2922
    %3337 = vmatprep.subr.bf16.mxu0 %v2927
    %3338 = vmatpush1.bf16.msra.mxu0 %v2926
    %3339 = vmatprep.subr.bf16.mxu0 %v2931
    %3340 = vmatpush1.bf16.msra.mxu0 %v2930
    %3341 = vmatprep.subr.bf16.mxu0 %v2935
    %3342 = vmatpush1.bf16.msra.mxu0 %v2934
    %3343 = vmatprep.subr.bf16.mxu0 %v2939
    %3344 = vmatpush1.bf16.msra.mxu0 %v2938
    %3345 = vmatprep.subr.bf16.mxu0 %v2943
    %3346 = vmatpush1.bf16.msra.mxu0 %v2942
    %3347 = vmatprep.subr.bf16.mxu0 %v2947
    %3348 = vmatpush1.bf16.msra.mxu0 %v2946
    %3349 = vmatprep.subr.bf16.mxu0 %v2951
    %3350 = vmatpush1.bf16.msra.mxu0 %v2950
    %3351 = vmatprep.subr.bf16.mxu0 %v2955
    %3352 = vmatpush1.bf16.msra.mxu0 %v2954
    %3353 = vmatprep.subr.bf16.mxu0 %v2959
    %3354 = vmatpush1.bf16.msra.mxu0 %v2958
    %3355 = vmatprep.subr.bf16.mxu0 %v2963
    %3356 = vmatpush1.bf16.msra.mxu0 %v2962
    %3357 = vmatprep.subr.bf16.mxu0 %v2967
    %3358 = vmatpush1.bf16.msra.mxu0 %v2966
    %3359 = vmatprep.subr.bf16.mxu0 %v2971
    %3360 = vmatpush1.bf16.msra.mxu0 %v2970
    %3361 = vmatprep.subr.bf16.mxu0 %v2975
    %3362 = vmatpush1.bf16.msra.mxu0 %v2974
    %3363 = vmatprep.mubr.bf16.mxu0 %v2843
    %3364 = vmatmul.mubr.bf16.gmra.mrb[0].mxu0 %v2842
    %v3365 = vpop.f32.mrb[0].mxu0
    %v3366 = vadd.f32 %v3325, %v3365
    %v3367 = vpop.f32.mrb[0].mxu0
    %v3368 = vadd.f32 %v3327, %v3367
    %v3369 = vpop.f32.mrb[0].mxu0
    %v3370 = vpop.f32.mrb[0].mxu0
    %3371 = vdwg.mxu0
    %3372 = vmatprep.subr.bf16.mxu0 %v2979
    %3373 = vmatpush1.bf16.msra.mxu0 %v2978
    %3374 = vmatprep.subr.bf16.mxu0 %v2983
    %3375 = vmatpush1.bf16.msra.mxu0 %v2982
    %3376 = vmatprep.subr.bf16.mxu0 %v2987
    %3377 = vmatpush1.bf16.msra.mxu0 %v2986
    %3378 = vmatprep.subr.bf16.mxu0 %v2991
    %3379 = vmatpush1.bf16.msra.mxu0 %v2990
    %3380 = vmatprep.subr.bf16.mxu0 %v2995
    %3381 = vmatpush1.bf16.msra.mxu0 %v2994
    %3382 = vmatprep.subr.bf16.mxu0 %v2999
    %3383 = vmatpush1.bf16.msra.mxu0 %v2998
    %3384 = vmatprep.subr.bf16.mxu0 %v3003
    %3385 = vmatpush1.bf16.msra.mxu0 %v3002
    %3386 = vmatprep.subr.bf16.mxu0 %v3007
    %3387 = vmatpush1.bf16.msra.mxu0 %v3006
    %3388 = vmatprep.subr.bf16.mxu0 %v3011
    %3389 = vmatpush1.bf16.msra.mxu0 %v3010
    %3390 = vmatprep.subr.bf16.mxu0 %v3015
    %3391 = vmatpush1.bf16.msra.mxu0 %v3014
    %3392 = vmatprep.subr.bf16.mxu0 %v3019
    %3393 = vmatpush1.bf16.msra.mxu0 %v3018
    %3394 = vmatprep.subr.bf16.mxu0 %v3023
    %3395 = vmatpush1.bf16.msra.mxu0 %v3022
    %3396 = vmatprep.subr.bf16.mxu0 %v3027
    %3397 = vmatpush1.bf16.msra.mxu0 %v3026
    %3398 = vmatprep.subr.bf16.mxu0 %v3031
    %3399 = vmatpush1.bf16.msra.mxu0 %v3030
    %3400 = vmatprep.subr.bf16.mxu0 %v3035
    %3401 = vmatpush1.bf16.msra.mxu0 %v3034
    %3402 = vmatprep.subr.bf16.mxu0 %v3039
    %3403 = vmatpush1.bf16.msra.mxu0 %v3038
    %3404 = vmatprep.mubr.bf16.mxu0 %v2845
    %3405 = vmatmul.mubr.bf16.gmra.mrb[0].mxu0 %v2844
    %v3406 = vpop.f32.mrb[0].mxu0
    %v3407 = vadd.f32 %v3366, %v3406
    %v3408 = vpop.f32.mrb[0].mxu0
    %v3409 = vadd.f32 %v3368, %v3408
    %v3410 = vpop.f32.mrb[0].mxu0
    %v3411 = vpop.f32.mrb[0].mxu0
    %3412 = vdwg.mxu0
    %3413 = vmatprep.subr.bf16.mxu0 %v3043
    %3414 = vmatpush1.bf16.msra.mxu0 %v3042
    %3415 = vmatprep.subr.bf16.mxu0 %v3047
    %3416 = vmatpush1.bf16.msra.mxu0 %v3046
    %3417 = vmatprep.subr.bf16.mxu0 %v3051
    %3418 = vmatpush1.bf16.msra.mxu0 %v3050
    %3419 = vmatprep.subr.bf16.mxu0 %v3055
    %3420 = vmatpush1.bf16.msra.mxu0 %v3054
    %3421 = vmatprep.subr.bf16.mxu0 %v3059
    %3422 = vmatpush1.bf16.msra.mxu0 %v3058
    %3423 = vmatprep.subr.bf16.mxu0 %v3063
    %3424 = vmatpush1.bf16.msra.mxu0 %v3062
    %3425 = vmatprep.subr.bf16.mxu0 %v3067
    %3426 = vmatpush1.bf16.msra.mxu0 %v3066
    %3427 = vmatprep.subr.bf16.mxu0 %v3071
    %3428 = vmatpush1.bf16.msra.mxu0 %v3070
    %3429 = vmatprep.subr.bf16.mxu0 %v3075
    %3430 = vmatpush1.bf16.msra.mxu0 %v3074
    %3431 = vmatprep.subr.bf16.mxu0 %v3079
    %3432 = vmatpush1.bf16.msra.mxu0 %v3078
    %3433 = vmatprep.subr.bf16.mxu0 %v3083
    %3434 = vmatpush1.bf16.msra.mxu0 %v3082
    %3435 = vmatprep.subr.bf16.mxu0 %v3087
    %3436 = vmatpush1.bf16.msra.mxu0 %v3086
    %3437 = vmatprep.subr.bf16.mxu0 %v3091
    %3438 = vmatpush1.bf16.msra.mxu0 %v3090
    %3439 = vmatprep.subr.bf16.mxu0 %v3095
    %3440 = vmatpush1.bf16.msra.mxu0 %v3094
    %3441 = vmatprep.subr.bf16.mxu0 %v3099
    %3442 = vmatpush1.bf16.msra.mxu0 %v3098
    %3443 = vmatprep.subr.bf16.mxu0 %v3103
    %3444 = vmatpush1.bf16.msra.mxu0 %v3102
    %3445 = vmatprep.mubr.bf16.mxu0 %v2847
    %3446 = vmatmul.mubr.bf16.gmra.mrb[0].mxu0 %v2846
    %v3447 = vpop.f32.mrb[0].mxu0
    %v3448 = vadd.f32 %v3407, %v3447
    %v3449 = vpop.f32.mrb[0].mxu0
    %v3450 = vadd.f32 %v3409, %v3449
    %v3451 = vpop.f32.mrb[0].mxu0
    %v3452 = vpop.f32.mrb[0].mxu0
    %3453 = vdwg.mxu0
    %3454 = vst [vmem:[#allocation16] sm:$0xff] %v3284
    %3455 = vst [vmem:[#allocation16 + $0x8] sm:$0xff] %v3286
    %3456 = vst [vmem:[#allocation16 + $0x10] sm:$0xff] %v3448
    %3457 = vst [vmem:[#allocation16 + $0x18] sm:$0xff] %v3450
    // Predicated region
    $region54: #{tpu_custom_call.1} parent=1 // pred_check
      _
    $region55: #{tpu_custom_call.1} parent=1 // pred_check_branch
      %3459 = sbr.rel (0) target = $region57
    $region56: #{tpu_custom_call.1} parent=1 // pred_region
      %s3461 = ssub.s32 128, 128
      %3462 = vsyncadd [#allocation14], %s3461
      %s3464 = sshll.u32 [#allocation15], 4
      %s3465 = int_to_ptr.vmem [resolvable:$true] %s3464
      %3467 = dma.vmem_to_hbm [thread:$0]  %s3465, 128, %s20, [#allocation14]
    $region57: #{tpu_custom_call.1} parent=1 // pred_fallthru
      _
    // Predicated region
    $region58: #{tpu_custom_call.1} parent=1 // pred_check
      _
    $region59: #{tpu_custom_call.1} parent=1 // pred_check_branch
      %3469 = sbr.rel (0) target = $region61
    $region60: #{tpu_custom_call.1} parent=1 // pred_region
      %s3471 = ssub.s32 512, 512
      %3472 = vsyncadd [#allocation17], %s3471
      %s3474 = sshll.u32 [#allocation16], 4
      %s3475 = int_to_ptr.vmem [resolvable:$true] %s3474
      %3477 = dma.vmem_to_hbm [thread:$0]  %s3475, 512, %s21, [#allocation17]
    $region61: #{tpu_custom_call.1} parent=1 // pred_fallthru
      _
    // Predicated region
    $region62: #{tpu_custom_call.1} parent=1 // pred_check
      _
    $region63: #{tpu_custom_call.1} parent=1 // pred_check_branch
      %3479 = sbr.rel (0) target = $region65
    $region64: #{tpu_custom_call.1} parent=1 // pred_region
      %s3481 = ssub.s32 128, 128
      %3482 = vsyncadd [#allocation17], %s3481
      %s3484 = sshll.u32 [#allocation18], 4
      %s3485 = int_to_ptr.vmem [resolvable:$true] %s3484
      %3487 = dma.vmem_to_hbm [thread:$0]  %s3485, 128, %s22, [#allocation17]
    $region65: #{tpu_custom_call.1} parent=1 // pred_fallthru
      _
    // Predicated region
    $region66: #{tpu_custom_call.1} parent=1 // pred_check
      _
    $region67: #{tpu_custom_call.1} parent=1 // pred_check_branch
      %3489 = sbr.rel (0) target = $region69
    $region68: #{tpu_custom_call.1} parent=1 // pred_region
      %s3491 = ssub.s32 128, 128
      %3492 = vsyncadd [#allocation20], %s3491
      %s3494 = sshll.u32 [#allocation19], 4
      %s3495 = int_to_ptr.vmem [resolvable:$true] %s3494
      %3497 = dma.vmem_to_hbm [thread:$0]  %s3495, 128, %s23, [#allocation20]
    $region69: #{tpu_custom_call.1} parent=1 // pred_fallthru
      _
    // Predicated region
    $region70: #{tpu_custom_call.1} parent=1 // pred_check
      _
    $region71: #{tpu_custom_call.1} parent=1 // pred_check_branch
      %3499 = sbr.rel (0) target = $region73
    $region72: #{tpu_custom_call.1} parent=1 // pred_region
      %3500 = dma.done [#allocation14], 128
    $region73: #{tpu_custom_call.1} parent=1 // pred_fallthru
      _
    // Predicated region
    $region74: #{tpu_custom_call.1} parent=1 // pred_check
      _
    $region75: #{tpu_custom_call.1} parent=1 // pred_check_branch
      %3502 = sbr.rel (0) target = $region77
    $region76: #{tpu_custom_call.1} parent=1 // pred_region
      %3503 = dma.done [#allocation17], 512
    $region77: #{tpu_custom_call.1} parent=1 // pred_fallthru
      _
    // Predicated region
    $region78: #{tpu_custom_call.1} parent=1 // pred_check
      _
    $region79: #{tpu_custom_call.1} parent=1 // pred_check_branch
      %3505 = sbr.rel (0) target = $region81
    $region80: #{tpu_custom_call.1} parent=1 // pred_region
      %3506 = dma.done [#allocation17], 128
    $region81: #{tpu_custom_call.1} parent=1 // pred_fallthru
      _
    // Predicated region
    $region82: #{tpu_custom_call.1} parent=1 // pred_check
      _
    $region83: #{tpu_custom_call.1} parent=1 // pred_check_branch
      %3508 = sbr.rel (0) target = $region85
    $region84: #{tpu_custom_call.1} parent=1 // pred_region
      %3509 = dma.done [#allocation20], 128
    $region85: #{tpu_custom_call.1} parent=1 // pred_fallthru
      _
    %3510 = vsyncpa [#allocation13], 1
    %3511 = vsyncpa [#allocation14], 1
    %3512 = vsyncpa [#allocation17], 1
    %3513 = vsyncpa [#allocation20], 1
  %3514 = vsyncmov [#allocation11]
  %s3515 = vpop.sfrf %3514
  %p3516 = scmp.eq.s32.totalorder %s3515, 0
  %p3517 = pneg %p3516
  %3519 = shalt.err (%p3517)
  %s3520 = scalar_lea.sflag [#allocation11], 1
  %3521 = vsyncmov %s3520
  %s3522 = vpop.sfrf %3521
  %p3523 = scmp.eq.s32.totalorder %s3522, 0
  %p3524 = pneg %p3523
  %3526 = shalt.err (%p3524)
  %s3527 = scalar_lea.sflag [#allocation11], 2
  %3528 = vsyncmov %s3527
  %s3529 = vpop.sfrf %3528
  %p3530 = scmp.eq.s32.totalorder %s3529, 0
  %p3531 = pneg %p3530
  %3533 = shalt.err (%p3531)
  %s3534 = scalar_lea.sflag [#allocation11], 3
  %3535 = vsyncmov %s3534
  %s3536 = vpop.sfrf %3535
  %p3537 = scmp.eq.s32.totalorder %s3536, 0
  %p3538 = pneg %p3537
  %3540 = shalt.err (%p3538)
  %s3541 = scalar_lea.sflag [#allocation11], 4
  %3542 = vsyncmov %s3541
  %s3543 = vpop.sfrf %3542
  %p3544 = scmp.eq.s32.totalorder %s3543, 0
  %p3545 = pneg %p3544
  %3547 = shalt.err (%p3545)
  %s3548 = scalar_lea.sflag [#allocation11], 5
  %3549 = vsyncmov %s3548
  %s3550 = vpop.sfrf %3549
  %p3551 = scmp.eq.s32.totalorder %s3550, 0
  %p3552 = pneg %p3551
  %3554 = shalt.err (%p3552)
  %s3555 = scalar_lea.sflag [#allocation11], 6
  %3556 = vsyncmov %s3555
  %s3557 = vpop.sfrf %3556
  %p3558 = scmp.eq.s32.totalorder %s3557, 0
  %p3559 = pneg %p3558
  %3561 = shalt.err (%p3559)
  %s3562 = scalar_lea.sflag [#allocation11], 7
  %3563 = vsyncmov %s3562
  %s3564 = vpop.sfrf %3563
  %p3565 = scmp.eq.s32.totalorder %s3564, 0
  %p3566 = pneg %p3565
  %3568 = shalt.err (%p3566)
  %s3569 = scalar_lea.sflag [#allocation11], 8
  %3570 = vsyncmov %s3569
  %s3571 = vpop.sfrf %3570
  %p3572 = scmp.eq.s32.totalorder %s3571, 0
  %p3573 = pneg %p3572
  %3575 = shalt.err (%p3573)

</llo_original>
